<compile_context>
chip_gen: v7x
topology: tpu7x:2x2x1
jax: 0.10.0
libtpu: 0.0.40
codegen_flags: <defaults>
</compile_context>

<pallas_src>
import functools

import jax
import jax.numpy as jnp
from jax import lax
from jax.experimental import pallas as pl
from jax.experimental.pallas import tpu as pltpu


def _round_up(x, m):
    return (x + m - 1) // m * m


def _vmem_limit_bytes():
    # Generation-aware VMEM cap: half of physical (v5e/v6e: 64 MiB, v7x: 32 MiB).
    try:
        cap = pltpu.get_tpu_info().vmem_capacity_bytes
        return int(min(cap // 2, 96 * 1024 * 1024))
    except Exception:
        return 32 * 1024 * 1024  # safe on every generation


_VMEM_LIMIT = _vmem_limit_bytes()


def _pick_batch_block(B, cap=8):
    """Largest batch block <= cap that divides B and leaves >= 2 grid steps (v7x megacore)."""
    for nb in range(min(cap, B), 0, -1):
        if B % nb == 0 and B // nb >= 2:
            return nb
    return B


def _pick_row_block(M, cap=1024):
    """Largest multiple-of-8 row tile dividing M (>=2 steps when possible); else full M.

    Never requires padding: the returned tile always divides M exactly.
    """
    limit = min(cap, max(8, M // 2))
    t = limit - limit % 8
    while t >= 8:
        if M % t == 0:
            return t
        t -= 8
    return M


# ----------------------------------------------------------------------------
# Pallas kernel 1: stride-1 KxK conv + bias + ReLU with in-kernel patch building
# ----------------------------------------------------------------------------
def _conv_s1_kernel(x_ref, w_ref, b_ref, o_ref, *, k):
    """x_ref: (NB, IH, IW, Cin) bf16, w_ref: (K*K, Cout, Cin) bf16, b_ref: (1, Cout) f32,
    o_ref: (NB, OH, OW, Cout) bf16 with OH = IH-K+1, OW = IW-K+1.

    Patches are built from contiguous in-VMEM windows (one per kernel offset) and
    accumulated in f32; each HBM byte of the activation is read exactly once.
    """
    nb, _, _, cin = x_ref.shape
    _, oh, ow, cout = o_ref.shape
    m = nb * oh

    bias = b_ref[...]                                   # (1, Cout) f32
    acc = jnp.zeros((m, ow, cout), jnp.float32)
    for i in range(k):                                  # static unroll: K*K MXU calls
        for j in range(k):
            # contiguous window; leading-dim collapse only (layout preserving)
            patch = x_ref[:, i:i + oh, j:j + ow, :].reshape(m, ow, cin)
            w_p = jnp.broadcast_to(w_ref[i * k + j], (m, cout, cin))
            acc = acc + jnp.einsum("bwc,bfc->bwf", patch, w_p,
                                   preferred_element_type=jnp.float32)
    res = jnp.maximum(acc + bias, 0.0).astype(o_ref.dtype)
    o_ref[...] = res.reshape(nb, oh, ow, cout)


def conv_stride1(x, w, b, *, k, nb_cap=8):
    """x: (B, IH, IW, Cin) bf16; w: (K*K, Cout, Cin) bf16; b: (1, Cout) f32.
    Returns relu(conv_valid_stride1(x, w) + b): (B, IH-K+1, IW-K+1, Cout) bf16."""
    B, IH, IW, Cin = x.shape
    KK, Cout, Cin_w = w.shape
    assert KK == k * k and Cin_w == Cin
    OH, OW = IH - k + 1, IW - k + 1
    NB = _pick_batch_block(B, nb_cap)

    return pl.pallas_call(
        functools.partial(_conv_s1_kernel, k=k),
        out_shape=jax.ShapeDtypeStruct((B, OH, OW, Cout), jnp.bfloat16),
        grid=(B // NB,),
        in_specs=[
            pl.BlockSpec((NB, IH, IW, Cin), lambda n: (n, 0, 0, 0)),
            pl.BlockSpec((KK, Cout, Cin), lambda n: (0, 0, 0)),   # weight VMEM-resident
            pl.BlockSpec((1, Cout), lambda n: (0, 0)),
        ],
        out_specs=pl.BlockSpec((NB, OH, OW, Cout), lambda n: (n, 0, 0, 0)),
        compiler_params=pltpu.CompilerParams(
            dimension_semantics=("parallel",),
            vmem_limit_bytes=_VMEM_LIMIT,
        ),
    )(x, w, b)


# ----------------------------------------------------------------------------
# Pallas kernel 2: fused MLP head  out = relu(x @ w1 + b1) @ w2 + b2
# ----------------------------------------------------------------------------
def _mlp_head_kernel(x_ref, w1_ref, b1_ref, w2_ref, b2_ref, o_ref):
    h = jnp.dot(x_ref[...], w1_ref[...], preferred_element_type=jnp.float32)
    h = jnp.maximum(h + b1_ref[...], 0.0)
    out = jnp.dot(h.astype(w2_ref.dtype), w2_ref[...],
                  preferred_element_type=jnp.float32)
    o_ref[...] = (out + b2_ref[...]).astype(o_ref.dtype)


def mlp_head(x, w1, b1, w2, b2):
    """x: (M, K) bf16; w1: (K, 512) bf16; b1: (1, 512) f32;
    w2: (512, Npad) bf16; b2: (1, Npad) f32 -> (M, Npad) f32.  No padding / slicing of M."""
    M, K = x.shape
    H = w1.shape[1]
    Np = w2.shape[1]
    tm = _pick_row_block(M, cap=1024)

    return pl.pallas_call(
        _mlp_head_kernel,
        out_shape=jax.ShapeDtypeStruct((M, Np), jnp.float32),
        grid=(M // tm,),
        in_specs=[
            pl.BlockSpec((tm, K), lambda i: (i, 0)),
            pl.BlockSpec((K, H), lambda i: (0, 0)),
            pl.BlockSpec((1, H), lambda i: (0, 0)),
            pl.BlockSpec((H, Np), lambda i: (0, 0)),
            pl.BlockSpec((1, Np), lambda i: (0, 0)),
        ],
        out_specs=pl.BlockSpec((tm, Np), lambda i: (i, 0)),
        compiler_params=pltpu.CompilerParams(
            dimension_semantics=("parallel",),
            vmem_limit_bytes=_VMEM_LIMIT,
        ),
    )(x, w1, b1, w2, b2)


# ----------------------------------------------------------------------------
# Parameters (PyTorch layout) + one-time inference-layout preparation
# ----------------------------------------------------------------------------
def init_params(key, input_shape, output_dim):
    C, H, W = input_shape
    h1, w1 = (H - 8) // 4 + 1, (W - 8) // 4 + 1
    h2, w2 = (h1 - 4) // 2 + 1, (w1 - 4) // 2 + 1
    h3, w3 = h2 - 2, w2 - 2
    n_flatten = 64 * h3 * w3

    ks = jax.random.split(key, 10)
    s = 0.05
    return {
        "c1_w": jax.random.normal(ks[0], (32, C, 8, 8), jnp.float32) * s,
        "c1_b": jax.random.normal(ks[1], (32,), jnp.float32) * s,
        "c2_w": jax.random.normal(ks[2], (64, 32, 4, 4), jnp.float32) * s,
        "c2_b": jax.random.normal(ks[3], (64,), jnp.float32) * s,
        "c3_w": jax.random.normal(ks[4], (64, 64, 3, 3), jnp.float32) * s,
        "c3_b": jax.random.normal(ks[5], (64,), jnp.float32) * s,
        "l1_w": jax.random.normal(ks[6], (512, n_flatten), jnp.float32) * s,  # (out, in)
        "l1_b": jax.random.normal(ks[7], (512,), jnp.float32) * s,
        "l2_w": jax.random.normal(ks[8], (output_dim, 512), jnp.float32) * s,
        "l2_b": jax.random.normal(ks[9], (output_dim,), jnp.float32) * s,
    }


def prepare_params(raw, input_shape, output_dim):
    """Convert PyTorch-layout params to the kernel's inference layout ONCE."""
    C, H, W = input_shape
    h1, w1 = (H - 8) // 4 + 1, (W - 8) // 4 + 1
    h2, w2 = (h1 - 4) // 2 + 1, (w1 - 4) // 2 + 1
    h3, w3 = h2 - 2, w2 - 2

    def conv_s2d_w(w, s):
        # (Cout, Cin, K*s, K*s) conv with stride s -> stride-1 2x2 conv weights
        # (4, Cout, s*s*Cin) matching the space-to-depth channel order (dh, dw, ci).
        co, ci, kh, kw = w.shape
        assert kh == 2 * s and kw == 2 * s
        w = w.reshape(co, ci, 2, s, 2, s)               # (co, ci, a, dh, b, dw)
        w = w.transpose(2, 4, 0, 3, 5, 1)               # (a, b, co, dh, dw, ci)
        return w.reshape(4, co, s * s * ci).astype(jnp.bfloat16)

    def conv_s1_w(w):
        # (Cout, Cin, K, K) stride-1 conv -> (K*K, Cout, Cin)
        co, ci, kh, kw = w.shape
        return w.transpose(2, 3, 0, 1).reshape(kh * kw, co, ci).astype(jnp.bfloat16)

    # fc1: PyTorch flattens NCHW (c, h, w); we flatten NHWC (h, w, c) -> permute
    # the weight's input axis so the math is identical to the PyTorch module.
    l1 = raw["l1_w"].reshape(512, 64, h3, w3).transpose(2, 3, 1, 0)
    l1 = l1.reshape(h3 * w3 * 64, 512).astype(jnp.bfloat16)

    # fc2: lane-dense N — pad output_dim up to a multiple of 128 with zeros.
    n_pad = _round_up(output_dim, 128)
    l2 = jnp.pad(raw["l2_w"].T.astype(jnp.bfloat16), ((0, 0), (0, n_pad - output_dim)))
    l2_b = jnp.pad(raw["l2_b"], (0, n_pad - output_dim)).reshape(1, n_pad).astype(jnp.float32)

    return {
        "c1_w": conv_s2d_w(raw["c1_w"], 4), "c1_b": raw["c1_b"].reshape(1, -1).astype(jnp.float32),
        "c2_w": conv_s2d_w(raw["c2_w"], 2), "c2_b": raw["c2_b"].reshape(1, -1).astype(jnp.float32),
        "c3_w": conv_s1_w(raw["c3_w"]),     "c3_b": raw["c3_b"].reshape(1, -1).astype(jnp.float32),
        "l1_w": l1, "l1_b": raw["l1_b"].reshape(1, 512).astype(jnp.float32),
        "l2_w": l2, "l2_b": l2_b,
    }


# ----------------------------------------------------------------------------
# Forward
# ----------------------------------------------------------------------------
def nature_cnn_forward(params, x, *, output_dim):
    """x: (B, C, H, W) float32 (PyTorch NCHW) -> (B, output_dim) float32."""
    B, C, H, W = x.shape

    # conv1: cast to bf16 first, then fuse NCHW->NHWC with space-to-depth(4)
    # into one XLA transpose pass: (B, C, H, W) -> (B, H/4, W/4, 16*C).
    OH1, OW1 = (H - 8) // 4 + 1, (W - 8) // 4 + 1
    IH1, IW1 = OH1 + 1, OW1 + 1
    h = x[:, :, :4 * IH1, :4 * IW1].astype(jnp.bfloat16)
    h = h.reshape(B, C, IH1, 4, IW1, 4).transpose(0, 2, 4, 3, 5, 1)
    h = h.reshape(B, IH1, IW1, 16 * C)
    h = conv_stride1(h, params["c1_w"], params["c1_b"], k=2)      # (B, OH1, OW1, 32)

    # conv2: space-to-depth(2) on the conv1 output (single transpose pass),
    # then a 2x2 stride-1 conv on 128 channels.
    OH2, OW2 = (OH1 - 4) // 2 + 1, (OW1 - 4) // 2 + 1
    IH2, IW2 = OH2 + 1, OW2 + 1
    C1 = h.shape[-1]
    h = h[:, :2 * IH2, :2 * IW2, :]
    h = h.reshape(B, IH2, 2, IW2, 2, C1).transpose(0, 1, 3, 2, 4, 5)
    h = h.reshape(B, IH2, IW2, 4 * C1)
    h = conv_stride1(h, params["c2_w"], params["c2_b"], k=2)      # (B, OH2, OW2, 64)

    # conv3: already stride 1.
    h = conv_stride1(h, params["c3_w"], params["c3_b"], k=3)      # (B, OH3, OW3, 64)

    # NHWC flatten is free; l1_w was permuted to match PyTorch's NCHW flatten.
    h = h.reshape(B, -1)
    out = mlp_head(h, params["l1_w"], params["l1_b"], params["l2_w"], params["l2_b"])
    return out[:, :output_dim]


# ----------------------------------------------------------------------------
# Pure-JAX f32 reference (PyTorch semantics) for a loose numerical check
# ----------------------------------------------------------------------------
def reference_forward(raw, x):
    dn = ("NCHW", "OIHW", "NCHW")
    y = lax.conv_general_dilated(x, raw["c1_w"], (4, 4), "VALID", dimension_numbers=dn)
    y = jnp.maximum(y + raw["c1_b"][None, :, None, None], 0.0)
    y = lax.conv_general_dilated(y, raw["c2_w"], (2, 2), "VALID", dimension_numbers=dn)
    y = jnp.maximum(y + raw["c2_b"][None, :, None, None], 0.0)
    y = lax.conv_general_dilated(y, raw["c3_w"], (1, 1), "VALID", dimension_numbers=dn)
    y = jnp.maximum(y + raw["c3_b"][None, :, None, None], 0.0)
    y = y.reshape(y.shape[0], -1)                       # PyTorch NCHW flatten
    y = jnp.maximum(y @ raw["l1_w"].T + raw["l1_b"], 0.0)
    return y @ raw["l2_w"].T + raw["l2_b"]


if __name__ == "__main__":
    # Smallest spatial size for which the valid 8/4 + 4/2 + 3/1 conv stack works.
    B, C, H, W = 2, 4, 36, 36
    output_dim = 16

    key = jax.random.PRNGKey(0)
    pkey, xkey = jax.random.split(key)
    raw = init_params(pkey, (C, H, W), output_dim)
    params = prepare_params(raw, (C, H, W), output_dim)
    x = jax.random.normal(xkey, (B, C, H, W), jnp.float32)

    fwd = jax.jit(functools.partial(nature_cnn_forward, output_dim=output_dim))
    out = jax.block_until_ready(fwd(params, x))

    assert out.shape == (B, output_dim), out.shape
    assert out.dtype == jnp.float32
    assert bool(jnp.all(jnp.isfinite(out)))

    # bf16 internal math -> loose tolerance vs f32 PyTorch-semantics reference.
    ref = jax.block_until_ready(reference_forward(raw, x))
    err = float(jnp.max(jnp.abs(out - ref)))
    scale = float(jnp.max(jnp.abs(ref)))
    assert err <= 3e-2 + 3e-2 * scale, f"mismatch: max abs err {err} (ref scale {scale})"

    print("KERNEL_OK")
</pallas_src>

<mosaic_0001>
module attributes {stable_mosaic.version = 11 : i64} {
  func.func @_conv_s1_kernel(%arg0: i32, %arg1: memref<1x9x9x64xbf16, #tpu.memory_space<vmem>>, %arg2: memref<4x32x64xbf16, #tpu.memory_space<vmem>>, %arg3: memref<1x32xf32, #tpu.memory_space<vmem>>, %arg4: memref<1x8x8x32xbf16, #tpu.memory_space<vmem>>) attributes {dimension_semantics = [#tpu.dimension_semantics<parallel>], iteration_bounds = array<i64: 2>, scalar_prefetch = 0 : i64, scratch_operands = 0 : i64, tpu.core_type = #tpu.core_type<tc>, window_params = [{transform_indices = @transform_0, window_bounds = array<i64: 1, 9, 9, 64>}, {pipeline_mode = #tpu.pipeline_mode<synchronous>, transform_indices = @transform_1, window_bounds = array<i64: 4, 32, 64>}, {pipeline_mode = #tpu.pipeline_mode<synchronous>, transform_indices = @transform_2, window_bounds = array<i64: 1, 32>}, {transform_indices = @transform_3, window_bounds = array<i64: 1, 8, 8, 32>}]} {
    %c0 = arith.constant 0 : index
    %c0_0 = arith.constant 0 : index
    %0 = vector.load %arg3[%c0, %c0_0] : memref<1x32xf32, #tpu.memory_space<vmem>>, vector<1x32xf32>
    %cst = arith.constant 0.000000e+00 : f32
    %1 = vector.broadcast %cst : f32 to vector<8x8x32xf32>
    %c0_1 = arith.constant 0 : index
    %c0_2 = arith.constant 0 : index
    %c0_3 = arith.constant 0 : index
    %c0_4 = arith.constant 0 : index
    %2 = vector.load %arg1[%c0_1, %c0_2, %c0_3, %c0_4] : memref<1x9x9x64xbf16, #tpu.memory_space<vmem>>, vector<1x8x8x64xbf16>
    %3 = vector.shape_cast %2 : vector<1x8x8x64xbf16> to vector<8x8x64xbf16>
    %c0_5 = arith.constant 0 : index
    %c0_6 = arith.constant 0 : index
    %c0_7 = arith.constant 0 : index
    %4 = vector.load %arg2[%c0_5, %c0_6, %c0_7] : memref<4x32x64xbf16, #tpu.memory_space<vmem>>, vector<1x32x64xbf16>
    %5 = vector.shape_cast %4 : vector<1x32x64xbf16> to vector<32x64xbf16>
    %6 = vector.shape_cast %5 : vector<32x64xbf16> to vector<1x32x64xbf16>
    %7 = vector.broadcast %6 : vector<1x32x64xbf16> to vector<8x32x64xbf16>
    "tpu.trace_start"() <{level = 10 : i32, message = "bwc,bfc->bwf"}> : () -> ()
    %cst_8 = arith.constant dense<0.000000e+00> : vector<8x8x32xf32>
    %8 = tpu.matmul %3, %7, %cst_8 {dimension_numbers = #tpu.dot_dimension_numbers<[2], [2], [1], [1], [0, 0, 0, 1, 1, 1], [0], [0]>} : vector<8x8x64xbf16>, vector<8x32x64xbf16>, vector<8x8x32xf32> -> vector<8x8x32xf32>
    "tpu.trace_stop"() : () -> ()
    %9 = arith.addf %1, %8 : vector<8x8x32xf32>
    %c0_9 = arith.constant 0 : index
    %c0_10 = arith.constant 0 : index
    %c1 = arith.constant 1 : index
    %c0_11 = arith.constant 0 : index
    %10 = vector.load %arg1[%c0_9, %c0_10, %c1, %c0_11] : memref<1x9x9x64xbf16, #tpu.memory_space<vmem>>, vector<1x8x8x64xbf16>
    %11 = vector.shape_cast %10 : vector<1x8x8x64xbf16> to vector<8x8x64xbf16>
    %c1_12 = arith.constant 1 : index
    %c0_13 = arith.constant 0 : index
    %c0_14 = arith.constant 0 : index
    %12 = vector.load %arg2[%c1_12, %c0_13, %c0_14] : memref<4x32x64xbf16, #tpu.memory_space<vmem>>, vector<1x32x64xbf16>
    %13 = vector.shape_cast %12 : vector<1x32x64xbf16> to vector<32x64xbf16>
    %14 = vector.shape_cast %13 : vector<32x64xbf16> to vector<1x32x64xbf16>
    %15 = vector.broadcast %14 : vector<1x32x64xbf16> to vector<8x32x64xbf16>
    "tpu.trace_start"() <{level = 10 : i32, message = "bwc,bfc->bwf"}> : () -> ()
    %cst_15 = arith.constant dense<0.000000e+00> : vector<8x8x32xf32>
    %16 = tpu.matmul %11, %15, %cst_15 {dimension_numbers = #tpu.dot_dimension_numbers<[2], [2], [1], [1], [0, 0, 0, 1, 1, 1], [0], [0]>} : vector<8x8x64xbf16>, vector<8x32x64xbf16>, vector<8x8x32xf32> -> vector<8x8x32xf32>
    "tpu.trace_stop"() : () -> ()
    %17 = arith.addf %9, %16 : vector<8x8x32xf32>
    %c0_16 = arith.constant 0 : index
    %c1_17 = arith.constant 1 : index
    %c0_18 = arith.constant 0 : index
    %c0_19 = arith.constant 0 : index
    %18 = vector.load %arg1[%c0_16, %c1_17, %c0_18, %c0_19] : memref<1x9x9x64xbf16, #tpu.memory_space<vmem>>, vector<1x8x8x64xbf16>
    %19 = vector.shape_cast %18 : vector<1x8x8x64xbf16> to vector<8x8x64xbf16>
    %c2 = arith.constant 2 : index
    %c0_20 = arith.constant 0 : index
    %c0_21 = arith.constant 0 : index
    %20 = vector.load %arg2[%c2, %c0_20, %c0_21] : memref<4x32x64xbf16, #tpu.memory_space<vmem>>, vector<1x32x64xbf16>
    %21 = vector.shape_cast %20 : vector<1x32x64xbf16> to vector<32x64xbf16>
    %22 = vector.shape_cast %21 : vector<32x64xbf16> to vector<1x32x64xbf16>
    %23 = vector.broadcast %22 : vector<1x32x64xbf16> to vector<8x32x64xbf16>
    "tpu.trace_start"() <{level = 10 : i32, message = "bwc,bfc->bwf"}> : () -> ()
    %cst_22 = arith.constant dense<0.000000e+00> : vector<8x8x32xf32>
    %24 = tpu.matmul %19, %23, %cst_22 {dimension_numbers = #tpu.dot_dimension_numbers<[2], [2], [1], [1], [0, 0, 0, 1, 1, 1], [0], [0]>} : vector<8x8x64xbf16>, vector<8x32x64xbf16>, vector<8x8x32xf32> -> vector<8x8x32xf32>
    "tpu.trace_stop"() : () -> ()
    %25 = arith.addf %17, %24 : vector<8x8x32xf32>
    %c0_23 = arith.constant 0 : index
    %c1_24 = arith.constant 1 : index
    %c1_25 = arith.constant 1 : index
    %c0_26 = arith.constant 0 : index
    %26 = vector.load %arg1[%c0_23, %c1_24, %c1_25, %c0_26] : memref<1x9x9x64xbf16, #tpu.memory_space<vmem>>, vector<1x8x8x64xbf16>
    %27 = vector.shape_cast %26 : vector<1x8x8x64xbf16> to vector<8x8x64xbf16>
    %c3 = arith.constant 3 : index
    %c0_27 = arith.constant 0 : index
    %c0_28 = arith.constant 0 : index
    %28 = vector.load %arg2[%c3, %c0_27, %c0_28] : memref<4x32x64xbf16, #tpu.memory_space<vmem>>, vector<1x32x64xbf16>
    %29 = vector.shape_cast %28 : vector<1x32x64xbf16> to vector<32x64xbf16>
    %30 = vector.shape_cast %29 : vector<32x64xbf16> to vector<1x32x64xbf16>
    %31 = vector.broadcast %30 : vector<1x32x64xbf16> to vector<8x32x64xbf16>
    "tpu.trace_start"() <{level = 10 : i32, message = "bwc,bfc->bwf"}> : () -> ()
    %cst_29 = arith.constant dense<0.000000e+00> : vector<8x8x32xf32>
    %32 = tpu.matmul %27, %31, %cst_29 {dimension_numbers = #tpu.dot_dimension_numbers<[2], [2], [1], [1], [0, 0, 0, 1, 1, 1], [0], [0]>} : vector<8x8x64xbf16>, vector<8x32x64xbf16>, vector<8x8x32xf32> -> vector<8x8x32xf32>
    "tpu.trace_stop"() : () -> ()
    %33 = arith.addf %25, %32 : vector<8x8x32xf32>
    %34 = vector.shape_cast %0 : vector<1x32xf32> to vector<1x1x32xf32>
    %35 = vector.broadcast %34 : vector<1x1x32xf32> to vector<8x8x32xf32>
    %36 = arith.addf %33, %35 : vector<8x8x32xf32>
    %cst_30 = arith.constant 0.000000e+00 : f32
    %37 = vector.broadcast %cst_30 : f32 to vector<8x8x32xf32>
    %38 = arith.maximumf %36, %37 : vector<8x8x32xf32>
    %39 = arith.truncf %38 : vector<8x8x32xf32> to vector<8x8x32xbf16>
    %40 = vector.shape_cast %39 : vector<8x8x32xbf16> to vector<1x8x8x32xbf16>
    %c0_31 = arith.constant 0 : index
    %c0_32 = arith.constant 0 : index
    %c0_33 = arith.constant 0 : index
    %c0_34 = arith.constant 0 : index
    %41 = vector.load %arg4[%c0_31, %c0_32, %c0_33, %c0_34] : memref<1x8x8x32xbf16, #tpu.memory_space<vmem>>, vector<1x8x8x32xbf16>
    tpu.vector_store %arg4[%c0_31, %c0_32, %c0_33, %c0_34], %40 {strides = array<i32>} : memref<1x8x8x32xbf16, #tpu.memory_space<vmem>>, vector<1x8x8x32xbf16>,
    return
  }
  func.func @transform_0(%arg0: i32) -> (i32, i32, i32, i32) {
    %c0_i32 = arith.constant 0 : i32
    %c0_i32_0 = arith.constant 0 : i32
    %c0_i32_1 = arith.constant 0 : i32
    %c0_i32_2 = arith.constant 0 : i32
    return %arg0, %c0_i32, %c0_i32_0, %c0_i32_1 : i32, i32, i32, i32
  }
  func.func @transform_1(%arg0: i32) -> (i32, i32, i32) {
    %c0_i32 = arith.constant 0 : i32
    %c0_i32_0 = arith.constant 0 : i32
    %c0_i32_1 = arith.constant 0 : i32
    %c0_i32_2 = arith.constant 0 : i32
    return %c0_i32, %c0_i32_0, %c0_i32_1 : i32, i32, i32
  }
  func.func @transform_2(%arg0: i32) -> (i32, i32) {
    %c0_i32 = arith.constant 0 : i32
    %c0_i32_0 = arith.constant 0 : i32
    %c0_i32_1 = arith.constant 0 : i32
    return %c0_i32, %c0_i32_0 : i32, i32
  }
  func.func @transform_3(%arg0: i32) -> (i32, i32, i32, i32) {
    %c0_i32 = arith.constant 0 : i32
    %c0_i32_0 = arith.constant 0 : i32
    %c0_i32_1 = arith.constant 0 : i32
    %c0_i32_2 = arith.constant 0 : i32
    return %arg0, %c0_i32, %c0_i32_0, %c0_i32_1 : i32, i32, i32, i32
  }
}

module attributes {stable_mosaic.version = 11 : i64} {
  func.func @_conv_s1_kernel(%arg0: i32, %arg1: memref<1x4x4x128xbf16, #tpu.memory_space<vmem>>, %arg2: memref<4x64x128xbf16, #tpu.memory_space<vmem>>, %arg3: memref<1x64xf32, #tpu.memory_space<vmem>>, %arg4: memref<1x3x3x64xbf16, #tpu.memory_space<vmem>>) attributes {dimension_semantics = [#tpu.dimension_semantics<parallel>], iteration_bounds = array<i64: 2>, scalar_prefetch = 0 : i64, scratch_operands = 0 : i64, tpu.core_type = #tpu.core_type<tc>, window_params = [{transform_indices = @transform_0, window_bounds = array<i64: 1, 4, 4, 128>}, {pipeline_mode = #tpu.pipeline_mode<synchronous>, transform_indices = @transform_1, window_bounds = array<i64: 4, 64, 128>}, {pipeline_mode = #tpu.pipeline_mode<synchronous>, transform_indices = @transform_2, window_bounds = array<i64: 1, 64>}, {transform_indices = @transform_3, window_bounds = array<i64: 1, 3, 3, 64>}]} {
    %c0 = arith.constant 0 : index
    %c0_0 = arith.constant 0 : index
    %0 = vector.load %arg3[%c0, %c0_0] : memref<1x64xf32, #tpu.memory_space<vmem>>, vector<1x64xf32>
    %cst = arith.constant 0.000000e+00 : f32
    %1 = vector.broadcast %cst : f32 to vector<3x3x64xf32>
    %c0_1 = arith.constant 0 : index
    %c0_2 = arith.constant 0 : index
    %c0_3 = arith.constant 0 : index
    %c0_4 = arith.constant 0 : index
    %2 = vector.load %arg1[%c0_1, %c0_2, %c0_3, %c0_4] : memref<1x4x4x128xbf16, #tpu.memory_space<vmem>>, vector<1x3x3x128xbf16>
    %3 = vector.shape_cast %2 : vector<1x3x3x128xbf16> to vector<3x3x128xbf16>
    %c0_5 = arith.constant 0 : index
    %c0_6 = arith.constant 0 : index
    %c0_7 = arith.constant 0 : index
    %4 = vector.load %arg2[%c0_5, %c0_6, %c0_7] : memref<4x64x128xbf16, #tpu.memory_space<vmem>>, vector<1x64x128xbf16>
    %5 = vector.shape_cast %4 : vector<1x64x128xbf16> to vector<64x128xbf16>
    %6 = vector.shape_cast %5 : vector<64x128xbf16> to vector<1x64x128xbf16>
    %7 = vector.broadcast %6 : vector<1x64x128xbf16> to vector<3x64x128xbf16>
    "tpu.trace_start"() <{level = 10 : i32, message = "bwc,bfc->bwf"}> : () -> ()
    %cst_8 = arith.constant dense<0.000000e+00> : vector<3x3x64xf32>
    %8 = tpu.matmul %3, %7, %cst_8 {dimension_numbers = #tpu.dot_dimension_numbers<[2], [2], [1], [1], [0, 0, 0, 1, 1, 1], [0], [0]>} : vector<3x3x128xbf16>, vector<3x64x128xbf16>, vector<3x3x64xf32> -> vector<3x3x64xf32>
    "tpu.trace_stop"() : () -> ()
    %9 = arith.addf %1, %8 : vector<3x3x64xf32>
    %c0_9 = arith.constant 0 : index
    %c0_10 = arith.constant 0 : index
    %c1 = arith.constant 1 : index
    %c0_11 = arith.constant 0 : index
    %10 = vector.load %arg1[%c0_9, %c0_10, %c1, %c0_11] : memref<1x4x4x128xbf16, #tpu.memory_space<vmem>>, vector<1x3x3x128xbf16>
    %11 = vector.shape_cast %10 : vector<1x3x3x128xbf16> to vector<3x3x128xbf16>
    %c1_12 = arith.constant 1 : index
    %c0_13 = arith.constant 0 : index
    %c0_14 = arith.constant 0 : index
    %12 = vector.load %arg2[%c1_12, %c0_13, %c0_14] : memref<4x64x128xbf16, #tpu.memory_space<vmem>>, vector<1x64x128xbf16>
    %13 = vector.shape_cast %12 : vector<1x64x128xbf16> to vector<64x128xbf16>
    %14 = vector.shape_cast %13 : vector<64x128xbf16> to vector<1x64x128xbf16>
    %15 = vector.broadcast %14 : vector<1x64x128xbf16> to vector<3x64x128xbf16>
    "tpu.trace_start"() <{level = 10 : i32, message = "bwc,bfc->bwf"}> : () -> ()
    %cst_15 = arith.constant dense<0.000000e+00> : vector<3x3x64xf32>
    %16 = tpu.matmul %11, %15, %cst_15 {dimension_numbers = #tpu.dot_dimension_numbers<[2], [2], [1], [1], [0, 0, 0, 1, 1, 1], [0], [0]>} : vector<3x3x128xbf16>, vector<3x64x128xbf16>, vector<3x3x64xf32> -> vector<3x3x64xf32>
    "tpu.trace_stop"() : () -> ()
    %17 = arith.addf %9, %16 : vector<3x3x64xf32>
    %c0_16 = arith.constant 0 : index
    %c1_17 = arith.constant 1 : index
    %c0_18 = arith.constant 0 : index
    %c0_19 = arith.constant 0 : index
    %18 = vector.load %arg1[%c0_16, %c1_17, %c0_18, %c0_19] : memref<1x4x4x128xbf16, #tpu.memory_space<vmem>>, vector<1x3x3x128xbf16>
    %19 = vector.shape_cast %18 : vector<1x3x3x128xbf16> to vector<3x3x128xbf16>
    %c2 = arith.constant 2 : index
    %c0_20 = arith.constant 0 : index
    %c0_21 = arith.constant 0 : index
    %20 = vector.load %arg2[%c2, %c0_20, %c0_21] : memref<4x64x128xbf16, #tpu.memory_space<vmem>>, vector<1x64x128xbf16>
    %21 = vector.shape_cast %20 : vector<1x64x128xbf16> to vector<64x128xbf16>
    %22 = vector.shape_cast %21 : vector<64x128xbf16> to vector<1x64x128xbf16>
    %23 = vector.broadcast %22 : vector<1x64x128xbf16> to vector<3x64x128xbf16>
    "tpu.trace_start"() <{level = 10 : i32, message = "bwc,bfc->bwf"}> : () -> ()
    %cst_22 = arith.constant dense<0.000000e+00> : vector<3x3x64xf32>
    %24 = tpu.matmul %19, %23, %cst_22 {dimension_numbers = #tpu.dot_dimension_numbers<[2], [2], [1], [1], [0, 0, 0, 1, 1, 1], [0], [0]>} : vector<3x3x128xbf16>, vector<3x64x128xbf16>, vector<3x3x64xf32> -> vector<3x3x64xf32>
    "tpu.trace_stop"() : () -> ()
    %25 = arith.addf %17, %24 : vector<3x3x64xf32>
    %c0_23 = arith.constant 0 : index
    %c1_24 = arith.constant 1 : index
    %c1_25 = arith.constant 1 : index
    %c0_26 = arith.constant 0 : index
    %26 = vector.load %arg1[%c0_23, %c1_24, %c1_25, %c0_26] : memref<1x4x4x128xbf16, #tpu.memory_space<vmem>>, vector<1x3x3x128xbf16>
    %27 = vector.shape_cast %26 : vector<1x3x3x128xbf16> to vector<3x3x128xbf16>
    %c3 = arith.constant 3 : index
    %c0_27 = arith.constant 0 : index
    %c0_28 = arith.constant 0 : index
    %28 = vector.load %arg2[%c3, %c0_27, %c0_28] : memref<4x64x128xbf16, #tpu.memory_space<vmem>>, vector<1x64x128xbf16>
    %29 = vector.shape_cast %28 : vector<1x64x128xbf16> to vector<64x128xbf16>
    %30 = vector.shape_cast %29 : vector<64x128xbf16> to vector<1x64x128xbf16>
    %31 = vector.broadcast %30 : vector<1x64x128xbf16> to vector<3x64x128xbf16>
    "tpu.trace_start"() <{level = 10 : i32, message = "bwc,bfc->bwf"}> : () -> ()
    %cst_29 = arith.constant dense<0.000000e+00> : vector<3x3x64xf32>
    %32 = tpu.matmul %27, %31, %cst_29 {dimension_numbers = #tpu.dot_dimension_numbers<[2], [2], [1], [1], [0, 0, 0, 1, 1, 1], [0], [0]>} : vector<3x3x128xbf16>, vector<3x64x128xbf16>, vector<3x3x64xf32> -> vector<3x3x64xf32>
    "tpu.trace_stop"() : () -> ()
    %33 = arith.addf %25, %32 : vector<3x3x64xf32>
    %34 = vector.shape_cast %0 : vector<1x64xf32> to vector<1x1x64xf32>
    %35 = vector.broadcast %34 : vector<1x1x64xf32> to vector<3x3x64xf32>
    %36 = arith.addf %33, %35 : vector<3x3x64xf32>
    %cst_30 = arith.constant 0.000000e+00 : f32
    %37 = vector.broadcast %cst_30 : f32 to vector<3x3x64xf32>
    %38 = arith.maximumf %36, %37 : vector<3x3x64xf32>
    %39 = arith.truncf %38 : vector<3x3x64xf32> to vector<3x3x64xbf16>
    %40 = vector.shape_cast %39 : vector<3x3x64xbf16> to vector<1x3x3x64xbf16>
    %c0_31 = arith.constant 0 : index
    %c0_32 = arith.constant 0 : index
    %c0_33 = arith.constant 0 : index
    %c0_34 = arith.constant 0 : index
    %41 = vector.load %arg4[%c0_31, %c0_32, %c0_33, %c0_34] : memref<1x3x3x64xbf16, #tpu.memory_space<vmem>>, vector<1x3x3x64xbf16>
    tpu.vector_store %arg4[%c0_31, %c0_32, %c0_33, %c0_34], %40 {strides = array<i32>} : memref<1x3x3x64xbf16, #tpu.memory_space<vmem>>, vector<1x3x3x64xbf16>,
    return
  }
  func.func @transform_0(%arg0: i32) -> (i32, i32, i32, i32) {
    %c0_i32 = arith.constant 0 : i32
    %c0_i32_0 = arith.constant 0 : i32
    %c0_i32_1 = arith.constant 0 : i32
    %c0_i32_2 = arith.constant 0 : i32
    return %arg0, %c0_i32, %c0_i32_0, %c0_i32_1 : i32, i32, i32, i32
  }
  func.func @transform_1(%arg0: i32) -> (i32, i32, i32) {
    %c0_i32 = arith.constant 0 : i32
    %c0_i32_0 = arith.constant 0 : i32
    %c0_i32_1 = arith.constant 0 : i32
    %c0_i32_2 = arith.constant 0 : i32
    return %c0_i32, %c0_i32_0, %c0_i32_1 : i32, i32, i32
  }
  func.func @transform_2(%arg0: i32) -> (i32, i32) {
    %c0_i32 = arith.constant 0 : i32
    %c0_i32_0 = arith.constant 0 : i32
    %c0_i32_1 = arith.constant 0 : i32
    return %c0_i32, %c0_i32_0 : i32, i32
  }
  func.func @transform_3(%arg0: i32) -> (i32, i32, i32, i32) {
    %c0_i32 = arith.constant 0 : i32
    %c0_i32_0 = arith.constant 0 : i32
    %c0_i32_1 = arith.constant 0 : i32
    %c0_i32_2 = arith.constant 0 : i32
    return %arg0, %c0_i32, %c0_i32_0, %c0_i32_1 : i32, i32, i32, i32
  }
}

module attributes {stable_mosaic.version = 11 : i64} {
  func.func @_conv_s1_kernel(%arg0: i32, %arg1: memref<1x3x3x64xbf16, #tpu.memory_space<vmem>>, %arg2: memref<9x64x64xbf16, #tpu.memory_space<vmem>>, %arg3: memref<1x64xf32, #tpu.memory_space<vmem>>, %arg4: memref<1x1x1x64xbf16, #tpu.memory_space<vmem>>) attributes {dimension_semantics = [#tpu.dimension_semantics<parallel>], iteration_bounds = array<i64: 2>, scalar_prefetch = 0 : i64, scratch_operands = 0 : i64, tpu.core_type = #tpu.core_type<tc>, window_params = [{transform_indices = @transform_0, window_bounds = array<i64: 1, 3, 3, 64>}, {pipeline_mode = #tpu.pipeline_mode<synchronous>, transform_indices = @transform_1, window_bounds = array<i64: 9, 64, 64>}, {pipeline_mode = #tpu.pipeline_mode<synchronous>, transform_indices = @transform_2, window_bounds = array<i64: 1, 64>}, {transform_indices = @transform_3, window_bounds = array<i64: 1, 1, 1, 64>}]} {
    %c0 = arith.constant 0 : index
    %c0_0 = arith.constant 0 : index
    %0 = vector.load %arg3[%c0, %c0_0] : memref<1x64xf32, #tpu.memory_space<vmem>>, vector<1x64xf32>
    %cst = arith.constant 0.000000e+00 : f32
    %1 = vector.broadcast %cst : f32 to vector<1x1x64xf32>
    %c0_1 = arith.constant 0 : index
    %c0_2 = arith.constant 0 : index
    %c0_3 = arith.constant 0 : index
    %c0_4 = arith.constant 0 : index
    %2 = vector.load %arg1[%c0_1, %c0_2, %c0_3, %c0_4] : memref<1x3x3x64xbf16, #tpu.memory_space<vmem>>, vector<1x1x1x64xbf16>
    %3 = vector.shape_cast %2 : vector<1x1x1x64xbf16> to vector<1x1x64xbf16>
    %c0_5 = arith.constant 0 : index
    %c0_6 = arith.constant 0 : index
    %c0_7 = arith.constant 0 : index
    %4 = vector.load %arg2[%c0_5, %c0_6, %c0_7] : memref<9x64x64xbf16, #tpu.memory_space<vmem>>, vector<1x64x64xbf16>
    %5 = vector.shape_cast %4 : vector<1x64x64xbf16> to vector<64x64xbf16>
    %6 = vector.shape_cast %5 : vector<64x64xbf16> to vector<1x64x64xbf16>
    "tpu.trace_start"() <{level = 10 : i32, message = "bwc,bfc->bwf"}> : () -> ()
    %cst_8 = arith.constant dense<0.000000e+00> : vector<1x1x64xf32>
    %7 = tpu.matmul %3, %6, %cst_8 {dimension_numbers = #tpu.dot_dimension_numbers<[2], [2], [1], [1], [0, 0, 0, 1, 1, 1], [0], [0]>} : vector<1x1x64xbf16>, vector<1x64x64xbf16>, vector<1x1x64xf32> -> vector<1x1x64xf32>
    "tpu.trace_stop"() : () -> ()
    %8 = arith.addf %1, %7 : vector<1x1x64xf32>
    %c0_9 = arith.constant 0 : index
    %c0_10 = arith.constant 0 : index
    %c1 = arith.constant 1 : index
    %c0_11 = arith.constant 0 : index
    %9 = vector.load %arg1[%c0_9, %c0_10, %c1, %c0_11] : memref<1x3x3x64xbf16, #tpu.memory_space<vmem>>, vector<1x1x1x64xbf16>
    %10 = vector.shape_cast %9 : vector<1x1x1x64xbf16> to vector<1x1x64xbf16>
    %c1_12 = arith.constant 1 : index
    %c0_13 = arith.constant 0 : index
    %c0_14 = arith.constant 0 : index
    %11 = vector.load %arg2[%c1_12, %c0_13, %c0_14] : memref<9x64x64xbf16, #tpu.memory_space<vmem>>, vector<1x64x64xbf16>
    %12 = vector.shape_cast %11 : vector<1x64x64xbf16> to vector<64x64xbf16>
    %13 = vector.shape_cast %12 : vector<64x64xbf16> to vector<1x64x64xbf16>
    "tpu.trace_start"() <{level = 10 : i32, message = "bwc,bfc->bwf"}> : () -> ()
    %cst_15 = arith.constant dense<0.000000e+00> : vector<1x1x64xf32>
    %14 = tpu.matmul %10, %13, %cst_15 {dimension_numbers = #tpu.dot_dimension_numbers<[2], [2], [1], [1], [0, 0, 0, 1, 1, 1], [0], [0]>} : vector<1x1x64xbf16>, vector<1x64x64xbf16>, vector<1x1x64xf32> -> vector<1x1x64xf32>
    "tpu.trace_stop"() : () -> ()
    %15 = arith.addf %8, %14 : vector<1x1x64xf32>
    %c0_16 = arith.constant 0 : index
    %c0_17 = arith.constant 0 : index
    %c2 = arith.constant 2 : index
    %c0_18 = arith.constant 0 : index
    %16 = vector.load %arg1[%c0_16, %c0_17, %c2, %c0_18] : memref<1x3x3x64xbf16, #tpu.memory_space<vmem>>, vector<1x1x1x64xbf16>
    %17 = vector.shape_cast %16 : vector<1x1x1x64xbf16> to vector<1x1x64xbf16>
    %c2_19 = arith.constant 2 : index
    %c0_20 = arith.constant 0 : index
    %c0_21 = arith.constant 0 : index
    %18 = vector.load %arg2[%c2_19, %c0_20, %c0_21] : memref<9x64x64xbf16, #tpu.memory_space<vmem>>, vector<1x64x64xbf16>
    %19 = vector.shape_cast %18 : vector<1x64x64xbf16> to vector<64x64xbf16>
    %20 = vector.shape_cast %19 : vector<64x64xbf16> to vector<1x64x64xbf16>
    "tpu.trace_start"() <{level = 10 : i32, message = "bwc,bfc->bwf"}> : () -> ()
    %cst_22 = arith.constant dense<0.000000e+00> : vector<1x1x64xf32>
    %21 = tpu.matmul %17, %20, %cst_22 {dimension_numbers = #tpu.dot_dimension_numbers<[2], [2], [1], [1], [0, 0, 0, 1, 1, 1], [0], [0]>} : vector<1x1x64xbf16>, vector<1x64x64xbf16>, vector<1x1x64xf32> -> vector<1x1x64xf32>
    "tpu.trace_stop"() : () -> ()
    %22 = arith.addf %15, %21 : vector<1x1x64xf32>
    %c0_23 = arith.constant 0 : index
    %c1_24 = arith.constant 1 : index
    %c0_25 = arith.constant 0 : index
    %c0_26 = arith.constant 0 : index
    %23 = vector.load %arg1[%c0_23, %c1_24, %c0_25, %c0_26] : memref<1x3x3x64xbf16, #tpu.memory_space<vmem>>, vector<1x1x1x64xbf16>
    %24 = vector.shape_cast %23 : vector<1x1x1x64xbf16> to vector<1x1x64xbf16>
    %c3 = arith.constant 3 : index
    %c0_27 = arith.constant 0 : index
    %c0_28 = arith.constant 0 : index
    %25 = vector.load %arg2[%c3, %c0_27, %c0_28] : memref<9x64x64xbf16, #tpu.memory_space<vmem>>, vector<1x64x64xbf16>
    %26 = vector.shape_cast %25 : vector<1x64x64xbf16> to vector<64x64xbf16>
    %27 = vector.shape_cast %26 : vector<64x64xbf16> to vector<1x64x64xbf16>
    "tpu.trace_start"() <{level = 10 : i32, message = "bwc,bfc->bwf"}> : () -> ()
    %cst_29 = arith.constant dense<0.000000e+00> : vector<1x1x64xf32>
    %28 = tpu.matmul %24, %27, %cst_29 {dimension_numbers = #tpu.dot_dimension_numbers<[2], [2], [1], [1], [0, 0, 0, 1, 1, 1], [0], [0]>} : vector<1x1x64xbf16>, vector<1x64x64xbf16>, vector<1x1x64xf32> -> vector<1x1x64xf32>
    "tpu.trace_stop"() : () -> ()
    %29 = arith.addf %22, %28 : vector<1x1x64xf32>
    %c0_30 = arith.constant 0 : index
    %c1_31 = arith.constant 1 : index
    %c1_32 = arith.constant 1 : index
    %c0_33 = arith.constant 0 : index
    %30 = vector.load %arg1[%c0_30, %c1_31, %c1_32, %c0_33] : memref<1x3x3x64xbf16, #tpu.memory_space<vmem>>, vector<1x1x1x64xbf16>
    %31 = vector.shape_cast %30 : vector<1x1x1x64xbf16> to vector<1x1x64xbf16>
    %c4 = arith.constant 4 : index
    %c0_34 = arith.constant 0 : index
    %c0_35 = arith.constant 0 : index
    %32 = vector.load %arg2[%c4, %c0_34, %c0_35] : memref<9x64x64xbf16, #tpu.memory_space<vmem>>, vector<1x64x64xbf16>
    %33 = vector.shape_cast %32 : vector<1x64x64xbf16> to vector<64x64xbf16>
    %34 = vector.shape_cast %33 : vector<64x64xbf16> to vector<1x64x64xbf16>
    "tpu.trace_start"() <{level = 10 : i32, message = "bwc,bfc->bwf"}> : () -> ()
    %cst_36 = arith.constant dense<0.000000e+00> : vector<1x1x64xf32>
    %35 = tpu.matmul %31, %34, %cst_36 {dimension_numbers = #tpu.dot_dimension_numbers<[2], [2], [1], [1], [0, 0, 0, 1, 1, 1], [0], [0]>} : vector<1x1x64xbf16>, vector<1x64x64xbf16>, vector<1x1x64xf32> -> vector<1x1x64xf32>
    "tpu.trace_stop"() : () -> ()
    %36 = arith.addf %29, %35 : vector<1x1x64xf32>
    %c0_37 = arith.constant 0 : index
    %c1_38 = arith.constant 1 : index
    %c2_39 = arith.constant 2 : index
    %c0_40 = arith.constant 0 : index
    %37 = vector.load %arg1[%c0_37, %c1_38, %c2_39, %c0_40] : memref<1x3x3x64xbf16, #tpu.memory_space<vmem>>, vector<1x1x1x64xbf16>
    %38 = vector.shape_cast %37 : vector<1x1x1x64xbf16> to vector<1x1x64xbf16>
    %c5 = arith.constant 5 : index
    %c0_41 = arith.constant 0 : index
    %c0_42 = arith.constant 0 : index
    %39 = vector.load %arg2[%c5, %c0_41, %c0_42] : memref<9x64x64xbf16, #tpu.memory_space<vmem>>, vector<1x64x64xbf16>
    %40 = vector.shape_cast %39 : vector<1x64x64xbf16> to vector<64x64xbf16>
    %41 = vector.shape_cast %40 : vector<64x64xbf16> to vector<1x64x64xbf16>
    "tpu.trace_start"() <{level = 10 : i32, message = "bwc,bfc->bwf"}> : () -> ()
    %cst_43 = arith.constant dense<0.000000e+00> : vector<1x1x64xf32>
    %42 = tpu.matmul %38, %41, %cst_43 {dimension_numbers = #tpu.dot_dimension_numbers<[2], [2], [1], [1], [0, 0, 0, 1, 1, 1], [0], [0]>} : vector<1x1x64xbf16>, vector<1x64x64xbf16>, vector<1x1x64xf32> -> vector<1x1x64xf32>
    "tpu.trace_stop"() : () -> ()
    %43 = arith.addf %36, %42 : vector<1x1x64xf32>
    %c0_44 = arith.constant 0 : index
    %c2_45 = arith.constant 2 : index
    %c0_46 = arith.constant 0 : index
    %c0_47 = arith.constant 0 : index
    %44 = vector.load %arg1[%c0_44, %c2_45, %c0_46, %c0_47] : memref<1x3x3x64xbf16, #tpu.memory_space<vmem>>, vector<1x1x1x64xbf16>
    %45 = vector.shape_cast %44 : vector<1x1x1x64xbf16> to vector<1x1x64xbf16>
    %c6 = arith.constant 6 : index
    %c0_48 = arith.constant 0 : index
    %c0_49 = arith.constant 0 : index
    %46 = vector.load %arg2[%c6, %c0_48, %c0_49] : memref<9x64x64xbf16, #tpu.memory_space<vmem>>, vector<1x64x64xbf16>
    %47 = vector.shape_cast %46 : vector<1x64x64xbf16> to vector<64x64xbf16>
    %48 = vector.shape_cast %47 : vector<64x64xbf16> to vector<1x64x64xbf16>
    "tpu.trace_start"() <{level = 10 : i32, message = "bwc,bfc->bwf"}> : () -> ()
    %cst_50 = arith.constant dense<0.000000e+00> : vector<1x1x64xf32>
    %49 = tpu.matmul %45, %48, %cst_50 {dimension_numbers = #tpu.dot_dimension_numbers<[2], [2], [1], [1], [0, 0, 0, 1, 1, 1], [0], [0]>} : vector<1x1x64xbf16>, vector<1x64x64xbf16>, vector<1x1x64xf32> -> vector<1x1x64xf32>
    "tpu.trace_stop"() : () -> ()
    %50 = arith.addf %43, %49 : vector<1x1x64xf32>
    %c0_51 = arith.constant 0 : index
    %c2_52 = arith.constant 2 : index
    %c1_53 = arith.constant 1 : index
    %c0_54 = arith.constant 0 : index
    %51 = vector.load %arg1[%c0_51, %c2_52, %c1_53, %c0_54] : memref<1x3x3x64xbf16, #tpu.memory_space<vmem>>, vector<1x1x1x64xbf16>
    %52 = vector.shape_cast %51 : vector<1x1x1x64xbf16> to vector<1x1x64xbf16>
    %c7 = arith.constant 7 : index
    %c0_55 = arith.constant 0 : index
    %c0_56 = arith.constant 0 : index
    %53 = vector.load %arg2[%c7, %c0_55, %c0_56] : memref<9x64x64xbf16, #tpu.memory_space<vmem>>, vector<1x64x64xbf16>
    %54 = vector.shape_cast %53 : vector<1x64x64xbf16> to vector<64x64xbf16>
    %55 = vector.shape_cast %54 : vector<64x64xbf16> to vector<1x64x64xbf16>
    "tpu.trace_start"() <{level = 10 : i32, message = "bwc,bfc->bwf"}> : () -> ()
    %cst_57 = arith.constant dense<0.000000e+00> : vector<1x1x64xf32>
    %56 = tpu.matmul %52, %55, %cst_57 {dimension_numbers = #tpu.dot_dimension_numbers<[2], [2], [1], [1], [0, 0, 0, 1, 1, 1], [0], [0]>} : vector<1x1x64xbf16>, vector<1x64x64xbf16>, vector<1x1x64xf32> -> vector<1x1x64xf32>
    "tpu.trace_stop"() : () -> ()
    %57 = arith.addf %50, %56 : vector<1x1x64xf32>
    %c0_58 = arith.constant 0 : index
    %c2_59 = arith.constant 2 : index
    %c2_60 = arith.constant 2 : index
    %c0_61 = arith.constant 0 : index
    %58 = vector.load %arg1[%c0_58, %c2_59, %c2_60, %c0_61] : memref<1x3x3x64xbf16, #tpu.memory_space<vmem>>, vector<1x1x1x64xbf16>
    %59 = vector.shape_cast %58 : vector<1x1x1x64xbf16> to vector<1x1x64xbf16>
    %c8 = arith.constant 8 : index
    %c0_62 = arith.constant 0 : index
    %c0_63 = arith.constant 0 : index
    %60 = vector.load %arg2[%c8, %c0_62, %c0_63] : memref<9x64x64xbf16, #tpu.memory_space<vmem>>, vector<1x64x64xbf16>
    %61 = vector.shape_cast %60 : vector<1x64x64xbf16> to vector<64x64xbf16>
    %62 = vector.shape_cast %61 : vector<64x64xbf16> to vector<1x64x64xbf16>
    "tpu.trace_start"() <{level = 10 : i32, message = "bwc,bfc->bwf"}> : () -> ()
    %cst_64 = arith.constant dense<0.000000e+00> : vector<1x1x64xf32>
    %63 = tpu.matmul %59, %62, %cst_64 {dimension_numbers = #tpu.dot_dimension_numbers<[2], [2], [1], [1], [0, 0, 0, 1, 1, 1], [0], [0]>} : vector<1x1x64xbf16>, vector<1x64x64xbf16>, vector<1x1x64xf32> -> vector<1x1x64xf32>
    "tpu.trace_stop"() : () -> ()
    %64 = arith.addf %57, %63 : vector<1x1x64xf32>
    %65 = vector.shape_cast %0 : vector<1x64xf32> to vector<1x1x64xf32>
    %66 = arith.addf %64, %65 : vector<1x1x64xf32>
    %cst_65 = arith.constant 0.000000e+00 : f32
    %67 = vector.broadcast %cst_65 : f32 to vector<1x1x64xf32>
    %68 = arith.maximumf %66, %67 : vector<1x1x64xf32>
    %69 = arith.truncf %68 : vector<1x1x64xf32> to vector<1x1x64xbf16>
    %70 = vector.shape_cast %69 : vector<1x1x64xbf16> to vector<1x1x1x64xbf16>
    %c0_66 = arith.constant 0 : index
    %c0_67 = arith.constant 0 : index
    %c0_68 = arith.constant 0 : index
    %c0_69 = arith.constant 0 : index
    %71 = vector.load %arg4[%c0_66, %c0_67, %c0_68, %c0_69] : memref<1x1x1x64xbf16, #tpu.memory_space<vmem>>, vector<1x1x1x64xbf16>
    tpu.vector_store %arg4[%c0_66, %c0_67, %c0_68, %c0_69], %70 {strides = array<i32>} : memref<1x1x1x64xbf16, #tpu.memory_space<vmem>>, vector<1x1x1x64xbf16>,
    return
  }
  func.func @transform_0(%arg0: i32) -> (i32, i32, i32, i32) {
    %c0_i32 = arith.constant 0 : i32
    %c0_i32_0 = arith.constant 0 : i32
    %c0_i32_1 = arith.constant 0 : i32
    %c0_i32_2 = arith.constant 0 : i32
    return %arg0, %c0_i32, %c0_i32_0, %c0_i32_1 : i32, i32, i32, i32
  }
  func.func @transform_1(%arg0: i32) -> (i32, i32, i32) {
    %c0_i32 = arith.constant 0 : i32
    %c0_i32_0 = arith.constant 0 : i32
    %c0_i32_1 = arith.constant 0 : i32
    %c0_i32_2 = arith.constant 0 : i32
    return %c0_i32, %c0_i32_0, %c0_i32_1 : i32, i32, i32
  }
  func.func @transform_2(%arg0: i32) -> (i32, i32) {
    %c0_i32 = arith.constant 0 : i32
    %c0_i32_0 = arith.constant 0 : i32
    %c0_i32_1 = arith.constant 0 : i32
    return %c0_i32, %c0_i32_0 : i32, i32
  }
  func.func @transform_3(%arg0: i32) -> (i32, i32, i32, i32) {
    %c0_i32 = arith.constant 0 : i32
    %c0_i32_0 = arith.constant 0 : i32
    %c0_i32_1 = arith.constant 0 : i32
    %c0_i32_2 = arith.constant 0 : i32
    return %arg0, %c0_i32, %c0_i32_0, %c0_i32_1 : i32, i32, i32, i32
  }
}

module attributes {stable_mosaic.version = 11 : i64} {
  func.func @_mlp_head_kernel(%arg0: i32, %arg1: memref<2x64xbf16, #tpu.memory_space<vmem>>, %arg2: memref<64x512xbf16, #tpu.memory_space<vmem>>, %arg3: memref<1x512xf32, #tpu.memory_space<vmem>>, %arg4: memref<512x128xbf16, #tpu.memory_space<vmem>>, %arg5: memref<1x128xf32, #tpu.memory_space<vmem>>, %arg6: memref<2x128xf32, #tpu.memory_space<vmem>>) attributes {dimension_semantics = [#tpu.dimension_semantics<parallel>], iteration_bounds = array<i64: 1>, scalar_prefetch = 0 : i64, scratch_operands = 0 : i64, tpu.core_type = #tpu.core_type<tc>, window_params = [{transform_indices = @transform_0, window_bounds = array<i64: 2, 64>}, {pipeline_mode = #tpu.pipeline_mode<synchronous>, transform_indices = @transform_1, window_bounds = array<i64: 64, 512>}, {pipeline_mode = #tpu.pipeline_mode<synchronous>, transform_indices = @transform_2, window_bounds = array<i64: 1, 512>}, {pipeline_mode = #tpu.pipeline_mode<synchronous>, transform_indices = @transform_3, window_bounds = array<i64: 512, 128>}, {pipeline_mode = #tpu.pipeline_mode<synchronous>, transform_indices = @transform_4, window_bounds = array<i64: 1, 128>}, {transform_indices = @transform_5, window_bounds = array<i64: 2, 128>}]} {
    %c0 = arith.constant 0 : index
    %c0_0 = arith.constant 0 : index
    %0 = vector.load %arg1[%c0, %c0_0] : memref<2x64xbf16, #tpu.memory_space<vmem>>, vector<2x64xbf16>
    %c0_1 = arith.constant 0 : index
    %c0_2 = arith.constant 0 : index
    %1 = vector.load %arg2[%c0_1, %c0_2] : memref<64x512xbf16, #tpu.memory_space<vmem>>, vector<64x512xbf16>
    %cst = arith.constant dense<0.000000e+00> : vector<2x512xf32>
    %2 = tpu.matmul %0, %1, %cst {dimension_numbers = #tpu.dot_dimension_numbers<[1], [0], [0], [1], [0, 0, 1, 1], [], []>} : vector<2x64xbf16>, vector<64x512xbf16>, vector<2x512xf32> -> vector<2x512xf32>
    %c0_3 = arith.constant 0 : index
    %c0_4 = arith.constant 0 : index
    %3 = vector.load %arg3[%c0_3, %c0_4] : memref<1x512xf32, #tpu.memory_space<vmem>>, vector<1x512xf32>
    %4 = vector.broadcast %3 : vector<1x512xf32> to vector<2x512xf32>
    %5 = arith.addf %2, %4 : vector<2x512xf32>
    %cst_5 = arith.constant 0.000000e+00 : f32
    %6 = vector.broadcast %cst_5 : f32 to vector<2x512xf32>
    %7 = arith.maximumf %5, %6 : vector<2x512xf32>
    %8 = arith.truncf %7 : vector<2x512xf32> to vector<2x512xbf16>
    %c0_6 = arith.constant 0 : index
    %c0_7 = arith.constant 0 : index
    %9 = vector.load %arg4[%c0_6, %c0_7] : memref<512x128xbf16, #tpu.memory_space<vmem>>, vector<512x128xbf16>
    %cst_8 = arith.constant dense<0.000000e+00> : vector<2x128xf32>
    %10 = tpu.matmul %8, %9, %cst_8 {dimension_numbers = #tpu.dot_dimension_numbers<[1], [0], [0], [1], [0, 0, 1, 1], [], []>} : vector<2x512xbf16>, vector<512x128xbf16>, vector<2x128xf32> -> vector<2x128xf32>
    %c0_9 = arith.constant 0 : index
    %c0_10 = arith.constant 0 : index
    %11 = vector.load %arg5[%c0_9, %c0_10] : memref<1x128xf32, #tpu.memory_space<vmem>>, vector<1x128xf32>
    %12 = vector.broadcast %11 : vector<1x128xf32> to vector<2x128xf32>
    %13 = arith.addf %10, %12 : vector<2x128xf32>
    %c0_11 = arith.constant 0 : index
    %c0_12 = arith.constant 0 : index
    %14 = vector.load %arg6[%c0_11, %c0_12] : memref<2x128xf32, #tpu.memory_space<vmem>>, vector<2x128xf32>
    tpu.vector_store %arg6[%c0_11, %c0_12], %13 {strides = array<i32>} : memref<2x128xf32, #tpu.memory_space<vmem>>, vector<2x128xf32>,
    return
  }
  func.func @transform_0(%arg0: i32) -> (i32, i32) {
    %c0_i32 = arith.constant 0 : i32
    %c0_i32_0 = arith.constant 0 : i32
    return %arg0, %c0_i32 : i32, i32
  }
  func.func @transform_1(%arg0: i32) -> (i32, i32) {
    %c0_i32 = arith.constant 0 : i32
    %c0_i32_0 = arith.constant 0 : i32
    %c0_i32_1 = arith.constant 0 : i32
    return %c0_i32, %c0_i32_0 : i32, i32
  }
  func.func @transform_2(%arg0: i32) -> (i32, i32) {
    %c0_i32 = arith.constant 0 : i32
    %c0_i32_0 = arith.constant 0 : i32
    %c0_i32_1 = arith.constant 0 : i32
    return %c0_i32, %c0_i32_0 : i32, i32
  }
  func.func @transform_3(%arg0: i32) -> (i32, i32) {
    %c0_i32 = arith.constant 0 : i32
    %c0_i32_0 = arith.constant 0 : i32
    %c0_i32_1 = arith.constant 0 : i32
    return %c0_i32, %c0_i32_0 : i32, i32
  }
  func.func @transform_4(%arg0: i32) -> (i32, i32) {
    %c0_i32 = arith.constant 0 : i32
    %c0_i32_0 = arith.constant 0 : i32
    %c0_i32_1 = arith.constant 0 : i32
    return %c0_i32, %c0_i32_0 : i32, i32
  }
  func.func @transform_5(%arg0: i32) -> (i32, i32) {
    %c0_i32 = arith.constant 0 : i32
    %c0_i32_0 = arith.constant 0 : i32
    return %arg0, %c0_i32 : i32, i32
  }
}

</mosaic_0001>

<llo_original>
// kernel: nature_cnn_forward.5
$region0: #{nature_cnn_forward.5}
  #allocation0 [shape = 'u32[]', space=smem, size = 0x4, offset = 0x4, fixed_abs, tag = 'smem constant byte address 0x4 - core index']
  #allocation1 [shape = 'u32[144,128]{1,0:T(1,128)}', space=vmem, size = 0x12000, scoped, tag = 'internal scratch']
  %s0 = inlined_call_operand.vmem [shape: bf16[2,4,4,128], index: 0, kind: input, shape index: {}]
  %s1 = inlined_call_operand.vmem [shape: bf16[4,64,128], index: 1, kind: input, shape index: {}]
  %s2 = inlined_call_operand.vmem [shape: f32[1,64], index: 2, kind: input, shape index: {}]
  %s3 = inlined_call_operand.vmem [shape: bf16[2,3,3,64], index: 3, kind: output, shape index: {}]
  %s4 = sld [smem:[#allocation0]]
  $region45: #{nature_cnn_forward.5} parent=0
    _
  %s6 = ssub.s32 1, %s4
  %s7 = scalar_select 0, %s6, %s4
  loop: start=0, step=1, limit=4
  $region2: #{nature_cnn_forward.5} parent=0 // loop_pre_header
    _
  $region3: #{nature_cnn_forward.5} parent=0 // loop_header
    %s9 = sphi 0, %s13
    %p10 = scmp.ge.s32.totalorder %s9, 4
    %s19 = sphi 0, %s21
    %s22 = sphi 0, %s19
    %s23 = sphi 0, %s22
    %s39 = sphi 0, %s23
    %s43 = sphi 0, %s43
    %s45 = sphi 0, %s43
    %s46 = sphi 0, %s45
    %s60 = sphi 0, %s46
    %s64 = sphi 0, %s64
    %s66 = sphi 0, %s64
    %s67 = sphi 0, %s66
    %s81 = sphi 0, %s67
    %s87 = sphi 0, %s89
    %s90 = sphi 0, %s87
    %s91 = sphi 0, %s90
    %s107 = sphi 0, %s91
  $region4: #{nature_cnn_forward.5} parent=0 // loop_header_branch
    %12 = sbr.rel (%p10) target = $region8
  $region5: #{nature_cnn_forward.5} parent=0 // loop_body
    %s14 = ssub.s32 %s9, 1
    %s15 = ssub.s32 %s9, 2
    %s16 = sadd.s32 %s9, 1
    %s17 = ssub.s32 %s9, %s16
    %p18 = scmp.eq.s32.totalorder %s17, 0
    %s20 = sadd.s32 %s19, 1
    %s21 = scalar_select %p18, %s19, %s20
    %p24 = pneg %p18
    %p25 = scmp.eq.s32.totalorder %s9, 1
    %p26 = por %p24, %p25
    %p27 = scmp.ne.s32.totalorder %s19, %s22
    %p28 = scmp.eq.s32.totalorder %s9, 0
    %p29 = por %p27, %p28
    %p30 = scmp.ne.s32.totalorder %s19, %s22
    %p31 = scmp.eq.s32.totalorder %s14, 1
    %p32 = por %p30, %p31
    %p33 = scmp.ne.s32.totalorder %s22, %s23
    %p34 = scmp.eq.s32.totalorder %s14, 0
    %p35 = por %p33, %p34
    %p36 = scmp.ne.s32.totalorder %s22, %s23
    %p37 = scmp.eq.s32.totalorder %s15, 1
    %p38 = por %p36, %p37
    %p40 = scmp.ne.s32.totalorder %s23, %s39
    %p41 = scmp.eq.s32.totalorder %s15, 0
    %p42 = por %p40, %p41
    %s44 = sadd.s32 %s43, 1
    %p47 = scmp.eq.s32.totalorder %s9, 1
    %p48 = scmp.ne.s32.totalorder %s43, %s45
    %p49 = scmp.eq.s32.totalorder %s9, 0
    %p50 = por %p48, %p49
    %p51 = scmp.ne.s32.totalorder %s43, %s45
    %p52 = scmp.eq.s32.totalorder %s14, 1
    %p53 = por %p51, %p52
    %p54 = scmp.ne.s32.totalorder %s45, %s46
    %p55 = scmp.eq.s32.totalorder %s14, 0
    %p56 = por %p54, %p55
    %p57 = scmp.ne.s32.totalorder %s45, %s46
    %p58 = scmp.eq.s32.totalorder %s15, 1
    %p59 = por %p57, %p58
    %p61 = scmp.ne.s32.totalorder %s46, %s60
    %p62 = scmp.eq.s32.totalorder %s15, 0
    %p63 = por %p61, %p62
    %s65 = sadd.s32 %s64, 1
    %p68 = scmp.eq.s32.totalorder %s9, 1
    %p69 = scmp.ne.s32.totalorder %s64, %s66
    %p70 = scmp.eq.s32.totalorder %s9, 0
    %p71 = por %p69, %p70
    %p72 = scmp.ne.s32.totalorder %s64, %s66
    %p73 = scmp.eq.s32.totalorder %s14, 1
    %p74 = por %p72, %p73
    %p75 = scmp.ne.s32.totalorder %s66, %s67
    %p76 = scmp.eq.s32.totalorder %s14, 0
    %p77 = por %p75, %p76
    %p78 = scmp.ne.s32.totalorder %s66, %s67
    %p79 = scmp.eq.s32.totalorder %s15, 1
    %p80 = por %p78, %p79
    %p82 = scmp.ne.s32.totalorder %s67, %s81
    %p83 = scmp.eq.s32.totalorder %s15, 0
    %p84 = por %p82, %p83
    %s85 = ssub.s32 %s9, %s16
    %p86 = scmp.eq.s32.totalorder %s85, 0
    %s88 = sadd.s32 %s87, 1
    %s89 = scalar_select %p86, %s87, %s88
    %p92 = pneg %p86
    %p93 = scmp.eq.s32.totalorder %s9, 1
    %p94 = por %p92, %p93
    %p95 = scmp.ne.s32.totalorder %s87, %s90
    %p96 = scmp.eq.s32.totalorder %s9, 0
    %p97 = por %p95, %p96
    %p98 = scmp.ne.s32.totalorder %s87, %s90
    %p99 = scmp.eq.s32.totalorder %s14, 1
    %p100 = por %p98, %p99
    %p101 = scmp.ne.s32.totalorder %s90, %s91
    %p102 = scmp.eq.s32.totalorder %s14, 0
    %p103 = por %p101, %p102
    %p104 = scmp.ne.s32.totalorder %s90, %s91
    %p105 = scmp.eq.s32.totalorder %s15, 1
    %p106 = por %p104, %p105
    %p108 = scmp.ne.s32.totalorder %s91, %s107
    %p109 = scmp.eq.s32.totalorder %s15, 0
    %p110 = por %p108, %p109
    %p111 = scmp.le.s32.totalorder 1, %s9
    %p112 = scmp.lt.s32.totalorder %s9, 3
    %p113 = pnand %p111, %p112
    %p114 = pneg %p113
    // Predicated region
    $region9: #{nature_cnn_forward.5} parent=5 // pred_check
      _
    $region10: #{nature_cnn_forward.5} parent=5 // pred_check_branch
      %116 = sbr.rel (%p113) target = $region12
    $region11: #{nature_cnn_forward.5} parent=5 // pred_region
      %s117 = ssub.s32 %s9, 1
      // Predicated region
      $region13: #{nature_cnn_forward.5} parent=11 // pred_check
        %p118 = pneg %p56
      $region14: #{nature_cnn_forward.5} parent=11 // pred_check_branch
        %120 = sbr.rel (%p118) target = $region16
      $region15: #{nature_cnn_forward.5} parent=11 // pred_region
        _
      $region16: #{nature_cnn_forward.5} parent=11 // pred_fallthru
        _
      // Predicated region
      $region17: #{nature_cnn_forward.5} parent=11 // pred_check
        %p121 = pneg %p77
      $region18: #{nature_cnn_forward.5} parent=11 // pred_check_branch
        %123 = sbr.rel (%p121) target = $region20
      $region19: #{nature_cnn_forward.5} parent=11 // pred_region
        _
      $region20: #{nature_cnn_forward.5} parent=11 // pred_fallthru
        _
    $region12: #{nature_cnn_forward.5} parent=5 // pred_fallthru
      _
    %p124 = scmp.lt.s32.totalorder %s9, 2
    // Predicated region
    $region21: #{nature_cnn_forward.5} parent=5 // pred_check
      %p125 = pneg %p124
    $region22: #{nature_cnn_forward.5} parent=5 // pred_check_branch
      %127 = sbr.rel (%p125) target = $region24
    $region23: #{nature_cnn_forward.5} parent=5 // pred_region
      // Predicated region
      $region25: #{nature_cnn_forward.5} parent=23 // pred_check
        %p128 = pneg %p29
      $region26: #{nature_cnn_forward.5} parent=23 // pred_check_branch
        %130 = sbr.rel (%p128) target = $region28
      $region27: #{nature_cnn_forward.5} parent=23 // pred_region
        %p131 = scmp.lt.s32.totalorder %s9, 1
        %s132 = scalar_select %p131, %s9, 1
        %s133 = smul.addr %s132, 4
        %s134 = smul.addr %s133, 2
        %s135 = scalar_lea.vmem %s0, %s134
      $region28: #{nature_cnn_forward.5} parent=23 // pred_fallthru
        _
    $region24: #{nature_cnn_forward.5} parent=5 // pred_fallthru
      _
    %p136 = scmp.le.s32.totalorder 1, %s9
    %p137 = scmp.lt.s32.totalorder %s9, 3
    %p138 = pnand %p136, %p137
    %p139 = pneg %p138
    // Predicated region
    $region29: #{nature_cnn_forward.5} parent=5 // pred_check
      _
    $region30: #{nature_cnn_forward.5} parent=5 // pred_check_branch
      %141 = sbr.rel (%p138) target = $region32
    $region31: #{nature_cnn_forward.5} parent=5 // pred_region
      %s142 = ssub.s32 %s9, 1
      %p143 = scmp.lt.s32.totalorder %s14, 1
      %s144 = scalar_select %p143, %s14, 1
      %s145 = smul.addr %s144, 4
      %s146 = smul.addr %s145, 2
      %s147 = scalar_lea.vmem %s0, %s146
      %p148 = pneg %p35
      %p149 = pneg %p32
      %p150 = pneg %p56
      %p151 = pneg %p53
      %p152 = pneg %p77
      %p153 = pneg %p74
      %p154 = pneg %p103
      %p155 = pneg %p100
      %p156 = scmp.lt.s32.totalorder %s14, 1
      %s157 = scalar_select %p156, %s14, 1
      %s158 = smul.addr %s157, 3
      %s159 = smul.addr %s158, 2
      %s160 = scalar_lea.vmem %s3, %s159
      %p161 = scmp.lt.s32.totalorder %s14, 1
      %s162 = scalar_select %p161, %s14, 1
      %s163 = smul.addr %s162, 4
      %s164 = smul.addr %s163, 2
      %s165 = scalar_lea.vmem %s0, %s164
      %p166 = scmp.lt.s32.totalorder %s14, 1
      %s167 = scalar_select %p166, %s14, 1
      %s168 = smul.addr %s167, 3
      %s169 = smul.addr %s168, 2
      %s170 = scalar_lea.vmem %s3, %s169
      %v172 = vld [vmem:[%s2] sm:$0x1]
      %v173 = vld [vmem:[%s165] sm:$0x3]
      %v174 = vld [vmem:[%s165 + $0x2] sm:$0x3]
      %v175 = vld [vmem:[%s165 + $0x4] sm:$0x3]
      %v176 = vld [vmem:[%s1] sm:$0xf]
      %v177 = vld [vmem:[%s1 + $0x4] sm:$0xf]
      %v178 = vld [vmem:[%s1 + $0x8] sm:$0xf]
      %v179 = vld [vmem:[%s1 + $0xc] sm:$0xf]
      %v180 = vld [vmem:[%s1 + $0x10] sm:$0xf]
      %v181 = vld [vmem:[%s1 + $0x14] sm:$0xf]
      %v182 = vld [vmem:[%s1 + $0x18] sm:$0xf]
      %v183 = vld [vmem:[%s1 + $0x1c] sm:$0xf]
      %v184 = vld [vmem:[%s165] sm:$0x3]
      %v185 = vld [vmem:[%s165 + $0x2] sm:$0x3]
      %v186 = vld [vmem:[%s165 + $0x4] sm:$0x3]
      %s187 = scalar_lea.vmem %s1, 32
      %v188 = vld [vmem:[%s187] sm:$0xf]
      %v189 = vld [vmem:[%s187 + $0x4] sm:$0xf]
      %v190 = vld [vmem:[%s187 + $0x8] sm:$0xf]
      %v191 = vld [vmem:[%s187 + $0xc] sm:$0xf]
      %v192 = vld [vmem:[%s187 + $0x10] sm:$0xf]
      %v193 = vld [vmem:[%s187 + $0x14] sm:$0xf]
      %v194 = vld [vmem:[%s187 + $0x18] sm:$0xf]
      %v195 = vld [vmem:[%s187 + $0x1c] sm:$0xf]
      %v198 = vunpack.c.l.s4 1983009808
      %v199 = vunpack.c.0.s8 %v198
      %v200 = vlaneseq
      %v201 = vshrl.u32 %v200, 7
      %v202 = vsub.s32 %v199, %v201
      %v203 = vrot.slane %v184, %v202
      %v205 = vshrl.u32 %v203, 16
      %v207 = vshll.u32 %v203, 16
      %v209 = vrot.slane %v207, 1
      %v210 = vor.u32 %v205, %v209
      %v220 = vunpack.c.l.b16 %v188
      %v221 = vunpack.c.l.b16 %v189
      %v222 = vunpack.c.l.b16 %v190
      %v223 = vunpack.c.l.b16 %v191
      %v224 = vunpack.c.l.b16 %v192
      %v225 = vunpack.c.l.b16 %v193
      %v226 = vunpack.c.l.b16 %v194
      %v227 = vunpack.c.l.b16 %v195
      %v228 = vpack.c.b16 %v221, %v220
      %v229 = vpack.c.b16 %v223, %v222
      %v230 = vpack.c.b16 %v225, %v224
      %v231 = vpack.c.b16 %v227, %v226
      %236 = vmatprep.subr.bf16.mxu0 0
      %237 = vmatpush1.bf16.xpose.msra.mxu0 %v228
      %238 = vmatprep.subr.bf16.mxu0 0
      %239 = vmatpush1.bf16.xpose.msra.mxu0 %v229
      %240 = vmatprep.subr.bf16.mxu0 0
      %241 = vmatpush1.bf16.xpose.msra.mxu0 %v230
      %242 = vmatprep.subr.bf16.mxu0 0
      %243 = vmatpush1.bf16.xpose.msra.mxu0 %v231
      %244 = vmatprep.subr.bf16.mxu0 0
      %245 = vmatpush1.bf16.xpose.msra.mxu0 0
      %246 = vmatprep.subr.bf16.mxu0 0
      %247 = vmatpush1.bf16.xpose.msra.mxu0 0
      %248 = vmatprep.subr.bf16.mxu0 0
      %249 = vmatpush1.bf16.xpose.msra.mxu0 0
      %250 = vmatprep.subr.bf16.mxu0 0
      %251 = vmatpush1.bf16.xpose.msra.mxu0 0
      %252 = vmatprep.subr.bf16.mxu0 0
      %253 = vmatpush1.bf16.xpose.msra.mxu0 0
      %254 = vmatprep.subr.bf16.mxu0 0
      %255 = vmatpush1.bf16.xpose.msra.mxu0 0
      %256 = vmatprep.subr.bf16.mxu0 0
      %257 = vmatpush1.bf16.xpose.msra.mxu0 0
      %258 = vmatprep.subr.bf16.mxu0 0
      %259 = vmatpush1.bf16.xpose.msra.mxu0 0
      %260 = vmatprep.subr.bf16.mxu0 0
      %261 = vmatpush1.bf16.xpose.msra.mxu0 0
      %262 = vmatprep.subr.bf16.mxu0 0
      %263 = vmatpush1.bf16.xpose.msra.mxu0 0
      %264 = vmatprep.subr.bf16.mxu0 0
      %265 = vmatpush1.bf16.xpose.msra.mxu0 0
      %266 = vmatprep.subr.bf16.mxu0 0
      %267 = vmatpush1.bf16.xpose.msra.mxu0 0
      %268 = vmatprep.mubr.bf16.mxu0 0
      %269 = vmatmul.mubr.bf16.gmra.mrb[0].mxu0 %v210
      %v270 = vpop.f32.mrb[0].mxu0
      %v271 = vadd.f32 0.0, %v270
      %v272 = vpop.f32.mrb[0].mxu0
      %v273 = vpop.f32.mrb[0].mxu0
      %v274 = vpop.f32.mrb[0].mxu0
      %275 = vdwg.mxu0
      %v278 = vunpack.c.l.s4 1983009808
      %v279 = vunpack.c.0.s8 %v278
      %v280 = vlaneseq
      %v281 = vshrl.u32 %v280, 7
      %v282 = vsub.s32 %v279, %v281
      %v283 = vrot.slane %v185, %v282
      %v285 = vshrl.u32 %v283, 16
      %v287 = vshll.u32 %v283, 16
      %v289 = vrot.slane %v287, 1
      %v290 = vor.u32 %v285, %v289
      %292 = vmatprep.subr.bf16.mxu0 0
      %293 = vmatpush1.bf16.xpose.msra.mxu0 %v228
      %294 = vmatprep.subr.bf16.mxu0 0
      %295 = vmatpush1.bf16.xpose.msra.mxu0 %v229
      %296 = vmatprep.subr.bf16.mxu0 0
      %297 = vmatpush1.bf16.xpose.msra.mxu0 %v230
      %298 = vmatprep.subr.bf16.mxu0 0
      %299 = vmatpush1.bf16.xpose.msra.mxu0 %v231
      %300 = vmatprep.subr.bf16.mxu0 0
      %301 = vmatpush1.bf16.xpose.msra.mxu0 0
      %302 = vmatprep.subr.bf16.mxu0 0
      %303 = vmatpush1.bf16.xpose.msra.mxu0 0
      %304 = vmatprep.subr.bf16.mxu0 0
      %305 = vmatpush1.bf16.xpose.msra.mxu0 0
      %306 = vmatprep.subr.bf16.mxu0 0
      %307 = vmatpush1.bf16.xpose.msra.mxu0 0
      %308 = vmatprep.subr.bf16.mxu0 0
      %309 = vmatpush1.bf16.xpose.msra.mxu0 0
      %310 = vmatprep.subr.bf16.mxu0 0
      %311 = vmatpush1.bf16.xpose.msra.mxu0 0
      %312 = vmatprep.subr.bf16.mxu0 0
      %313 = vmatpush1.bf16.xpose.msra.mxu0 0
      %314 = vmatprep.subr.bf16.mxu0 0
      %315 = vmatpush1.bf16.xpose.msra.mxu0 0
      %316 = vmatprep.subr.bf16.mxu0 0
      %317 = vmatpush1.bf16.xpose.msra.mxu0 0
      %318 = vmatprep.subr.bf16.mxu0 0
      %319 = vmatpush1.bf16.xpose.msra.mxu0 0
      %320 = vmatprep.subr.bf16.mxu0 0
      %321 = vmatpush1.bf16.xpose.msra.mxu0 0
      %322 = vmatprep.subr.bf16.mxu0 0
      %323 = vmatpush1.bf16.xpose.msra.mxu0 0
      %324 = vmatprep.mubr.bf16.mxu0 0
      %325 = vmatmul.mubr.bf16.gmra.mrb[0].mxu0 %v290
      %v326 = vpop.f32.mrb[0].mxu0
      %v327 = vadd.f32 0.0, %v326
      %v328 = vpop.f32.mrb[0].mxu0
      %v329 = vpop.f32.mrb[0].mxu0
      %v330 = vpop.f32.mrb[0].mxu0
      %331 = vdwg.mxu0
      %v334 = vunpack.c.l.s4 1983009808
      %v335 = vunpack.c.0.s8 %v334
      %v336 = vlaneseq
      %v337 = vshrl.u32 %v336, 7
      %v338 = vsub.s32 %v335, %v337
      %v339 = vrot.slane %v186, %v338
      %v341 = vshrl.u32 %v339, 16
      %v343 = vshll.u32 %v339, 16
      %v345 = vrot.slane %v343, 1
      %v346 = vor.u32 %v341, %v345
      %348 = vmatprep.subr.bf16.mxu0 0
      %349 = vmatpush1.bf16.xpose.msra.mxu0 %v228
      %350 = vmatprep.subr.bf16.mxu0 0
      %351 = vmatpush1.bf16.xpose.msra.mxu0 %v229
      %352 = vmatprep.subr.bf16.mxu0 0
      %353 = vmatpush1.bf16.xpose.msra.mxu0 %v230
      %354 = vmatprep.subr.bf16.mxu0 0
      %355 = vmatpush1.bf16.xpose.msra.mxu0 %v231
      %356 = vmatprep.subr.bf16.mxu0 0
      %357 = vmatpush1.bf16.xpose.msra.mxu0 0
      %358 = vmatprep.subr.bf16.mxu0 0
      %359 = vmatpush1.bf16.xpose.msra.mxu0 0
      %360 = vmatprep.subr.bf16.mxu0 0
      %361 = vmatpush1.bf16.xpose.msra.mxu0 0
      %362 = vmatprep.subr.bf16.mxu0 0
      %363 = vmatpush1.bf16.xpose.msra.mxu0 0
      %364 = vmatprep.subr.bf16.mxu0 0
      %365 = vmatpush1.bf16.xpose.msra.mxu0 0
      %366 = vmatprep.subr.bf16.mxu0 0
      %367 = vmatpush1.bf16.xpose.msra.mxu0 0
      %368 = vmatprep.subr.bf16.mxu0 0
      %369 = vmatpush1.bf16.xpose.msra.mxu0 0
      %370 = vmatprep.subr.bf16.mxu0 0
      %371 = vmatpush1.bf16.xpose.msra.mxu0 0
      %372 = vmatprep.subr.bf16.mxu0 0
      %373 = vmatpush1.bf16.xpose.msra.mxu0 0
      %374 = vmatprep.subr.bf16.mxu0 0
      %375 = vmatpush1.bf16.xpose.msra.mxu0 0
      %376 = vmatprep.subr.bf16.mxu0 0
      %377 = vmatpush1.bf16.xpose.msra.mxu0 0
      %378 = vmatprep.subr.bf16.mxu0 0
      %379 = vmatpush1.bf16.xpose.msra.mxu0 0
      %380 = vmatprep.mubr.bf16.mxu0 0
      %381 = vmatmul.mubr.bf16.gmra.mrb[0].mxu0 %v346
      %v382 = vpop.f32.mrb[0].mxu0
      %v383 = vadd.f32 0.0, %v382
      %v384 = vpop.f32.mrb[0].mxu0
      %v385 = vpop.f32.mrb[0].mxu0
      %v386 = vpop.f32.mrb[0].mxu0
      %387 = vdwg.mxu0
      %v396 = vunpack.c.l.b16 %v176
      %v397 = vunpack.c.l.b16 %v177
      %v398 = vunpack.c.l.b16 %v178
      %v399 = vunpack.c.l.b16 %v179
      %v400 = vunpack.c.l.b16 %v180
      %v401 = vunpack.c.l.b16 %v181
      %v402 = vunpack.c.l.b16 %v182
      %v403 = vunpack.c.l.b16 %v183
      %v404 = vpack.c.b16 %v397, %v396
      %v405 = vpack.c.b16 %v399, %v398
      %v406 = vpack.c.b16 %v401, %v400
      %v407 = vpack.c.b16 %v403, %v402
      %412 = vmatprep.subr.bf16.mxu0 0
      %413 = vmatpush1.bf16.xpose.msra.mxu0 %v404
      %414 = vmatprep.subr.bf16.mxu0 0
      %415 = vmatpush1.bf16.xpose.msra.mxu0 %v405
      %416 = vmatprep.subr.bf16.mxu0 0
      %417 = vmatpush1.bf16.xpose.msra.mxu0 %v406
      %418 = vmatprep.subr.bf16.mxu0 0
      %419 = vmatpush1.bf16.xpose.msra.mxu0 %v407
      %420 = vmatprep.subr.bf16.mxu0 0
      %421 = vmatpush1.bf16.xpose.msra.mxu0 0
      %422 = vmatprep.subr.bf16.mxu0 0
      %423 = vmatpush1.bf16.xpose.msra.mxu0 0
      %424 = vmatprep.subr.bf16.mxu0 0
      %425 = vmatpush1.bf16.xpose.msra.mxu0 0
      %426 = vmatprep.subr.bf16.mxu0 0
      %427 = vmatpush1.bf16.xpose.msra.mxu0 0
      %428 = vmatprep.subr.bf16.mxu0 0
      %429 = vmatpush1.bf16.xpose.msra.mxu0 0
      %430 = vmatprep.subr.bf16.mxu0 0
      %431 = vmatpush1.bf16.xpose.msra.mxu0 0
      %432 = vmatprep.subr.bf16.mxu0 0
      %433 = vmatpush1.bf16.xpose.msra.mxu0 0
      %434 = vmatprep.subr.bf16.mxu0 0
      %435 = vmatpush1.bf16.xpose.msra.mxu0 0
      %436 = vmatprep.subr.bf16.mxu0 0
      %437 = vmatpush1.bf16.xpose.msra.mxu0 0
      %438 = vmatprep.subr.bf16.mxu0 0
      %439 = vmatpush1.bf16.xpose.msra.mxu0 0
      %440 = vmatprep.subr.bf16.mxu0 0
      %441 = vmatpush1.bf16.xpose.msra.mxu0 0
      %442 = vmatprep.subr.bf16.mxu0 0
      %443 = vmatpush1.bf16.xpose.msra.mxu0 0
      %444 = vmatprep.mubr.bf16.mxu0 0
      %445 = vmatmul.mubr.bf16.gmra.mrb[0].mxu0 %v173
      %v446 = vpop.f32.mrb[0].mxu0
      %v447 = vadd.f32 %v271, %v446
      %v448 = vpop.f32.mrb[0].mxu0
      %v449 = vpop.f32.mrb[0].mxu0
      %v450 = vpop.f32.mrb[0].mxu0
      %451 = vdwg.mxu0
      %452 = vmatprep.subr.bf16.mxu0 0
      %453 = vmatpush1.bf16.xpose.msra.mxu0 %v404
      %454 = vmatprep.subr.bf16.mxu0 0
      %455 = vmatpush1.bf16.xpose.msra.mxu0 %v405
      %456 = vmatprep.subr.bf16.mxu0 0
      %457 = vmatpush1.bf16.xpose.msra.mxu0 %v406
      %458 = vmatprep.subr.bf16.mxu0 0
      %459 = vmatpush1.bf16.xpose.msra.mxu0 %v407
      %460 = vmatprep.subr.bf16.mxu0 0
      %461 = vmatpush1.bf16.xpose.msra.mxu0 0
      %462 = vmatprep.subr.bf16.mxu0 0
      %463 = vmatpush1.bf16.xpose.msra.mxu0 0
      %464 = vmatprep.subr.bf16.mxu0 0
      %465 = vmatpush1.bf16.xpose.msra.mxu0 0
      %466 = vmatprep.subr.bf16.mxu0 0
      %467 = vmatpush1.bf16.xpose.msra.mxu0 0
      %468 = vmatprep.subr.bf16.mxu0 0
      %469 = vmatpush1.bf16.xpose.msra.mxu0 0
      %470 = vmatprep.subr.bf16.mxu0 0
      %471 = vmatpush1.bf16.xpose.msra.mxu0 0
      %472 = vmatprep.subr.bf16.mxu0 0
      %473 = vmatpush1.bf16.xpose.msra.mxu0 0
      %474 = vmatprep.subr.bf16.mxu0 0
      %475 = vmatpush1.bf16.xpose.msra.mxu0 0
      %476 = vmatprep.subr.bf16.mxu0 0
      %477 = vmatpush1.bf16.xpose.msra.mxu0 0
      %478 = vmatprep.subr.bf16.mxu0 0
      %479 = vmatpush1.bf16.xpose.msra.mxu0 0
      %480 = vmatprep.subr.bf16.mxu0 0
      %481 = vmatpush1.bf16.xpose.msra.mxu0 0
      %482 = vmatprep.subr.bf16.mxu0 0
      %483 = vmatpush1.bf16.xpose.msra.mxu0 0
      %484 = vmatprep.mubr.bf16.mxu0 0
      %485 = vmatmul.mubr.bf16.gmra.mrb[0].mxu0 %v174
      %v486 = vpop.f32.mrb[0].mxu0
      %v487 = vadd.f32 %v327, %v486
      %v488 = vpop.f32.mrb[0].mxu0
      %v489 = vpop.f32.mrb[0].mxu0
      %v490 = vpop.f32.mrb[0].mxu0
      %491 = vdwg.mxu0
      %492 = vmatprep.subr.bf16.mxu0 0
      %493 = vmatpush1.bf16.xpose.msra.mxu0 %v404
      %494 = vmatprep.subr.bf16.mxu0 0
      %495 = vmatpush1.bf16.xpose.msra.mxu0 %v405
      %496 = vmatprep.subr.bf16.mxu0 0
      %497 = vmatpush1.bf16.xpose.msra.mxu0 %v406
      %498 = vmatprep.subr.bf16.mxu0 0
      %499 = vmatpush1.bf16.xpose.msra.mxu0 %v407
      %500 = vmatprep.subr.bf16.mxu0 0
      %501 = vmatpush1.bf16.xpose.msra.mxu0 0
      %502 = vmatprep.subr.bf16.mxu0 0
      %503 = vmatpush1.bf16.xpose.msra.mxu0 0
      %504 = vmatprep.subr.bf16.mxu0 0
      %505 = vmatpush1.bf16.xpose.msra.mxu0 0
      %506 = vmatprep.subr.bf16.mxu0 0
      %507 = vmatpush1.bf16.xpose.msra.mxu0 0
      %508 = vmatprep.subr.bf16.mxu0 0
      %509 = vmatpush1.bf16.xpose.msra.mxu0 0
      %510 = vmatprep.subr.bf16.mxu0 0
      %511 = vmatpush1.bf16.xpose.msra.mxu0 0
      %512 = vmatprep.subr.bf16.mxu0 0
      %513 = vmatpush1.bf16.xpose.msra.mxu0 0
      %514 = vmatprep.subr.bf16.mxu0 0
      %515 = vmatpush1.bf16.xpose.msra.mxu0 0
      %516 = vmatprep.subr.bf16.mxu0 0
      %517 = vmatpush1.bf16.xpose.msra.mxu0 0
      %518 = vmatprep.subr.bf16.mxu0 0
      %519 = vmatpush1.bf16.xpose.msra.mxu0 0
      %520 = vmatprep.subr.bf16.mxu0 0
      %521 = vmatpush1.bf16.xpose.msra.mxu0 0
      %522 = vmatprep.subr.bf16.mxu0 0
      %523 = vmatpush1.bf16.xpose.msra.mxu0 0
      %524 = vmatprep.mubr.bf16.mxu0 0
      %525 = vmatmul.mubr.bf16.gmra.mrb[0].mxu0 %v175
      %v526 = vpop.f32.mrb[0].mxu0
      %v527 = vadd.f32 %v383, %v526
      %v528 = vpop.f32.mrb[0].mxu0
      %v529 = vpop.f32.mrb[0].mxu0
      %v530 = vpop.f32.mrb[0].mxu0
      %531 = vdwg.mxu0
      %s532 = scalar_lea.vmem %s165, 2
      %v533 = vld [vmem:[%s532] sm:$0x3]
      %v534 = vld [vmem:[%s532 + $0x2] sm:$0x3]
      %v535 = vld [vmem:[%s532 + $0x4] sm:$0x3]
      %s536 = scalar_lea.vmem %s1, 64
      %v537 = vld [vmem:[%s536] sm:$0xf]
      %v538 = vld [vmem:[%s536 + $0x4] sm:$0xf]
      %v539 = vld [vmem:[%s536 + $0x8] sm:$0xf]
      %v540 = vld [vmem:[%s536 + $0xc] sm:$0xf]
      %v541 = vld [vmem:[%s536 + $0x10] sm:$0xf]
      %v542 = vld [vmem:[%s536 + $0x14] sm:$0xf]
      %v543 = vld [vmem:[%s536 + $0x18] sm:$0xf]
      %v544 = vld [vmem:[%s536 + $0x1c] sm:$0xf]
      %v553 = vunpack.c.l.b16 %v537
      %v554 = vunpack.c.l.b16 %v538
      %v555 = vunpack.c.l.b16 %v539
      %v556 = vunpack.c.l.b16 %v540
      %v557 = vunpack.c.l.b16 %v541
      %v558 = vunpack.c.l.b16 %v542
      %v559 = vunpack.c.l.b16 %v543
      %v560 = vunpack.c.l.b16 %v544
      %v561 = vpack.c.b16 %v554, %v553
      %v562 = vpack.c.b16 %v556, %v555
      %v563 = vpack.c.b16 %v558, %v557
      %v564 = vpack.c.b16 %v560, %v559
      %569 = vmatprep.subr.bf16.mxu0 0
      %570 = vmatpush1.bf16.xpose.msra.mxu0 %v561
      %571 = vmatprep.subr.bf16.mxu0 0
      %572 = vmatpush1.bf16.xpose.msra.mxu0 %v562
      %573 = vmatprep.subr.bf16.mxu0 0
      %574 = vmatpush1.bf16.xpose.msra.mxu0 %v563
      %575 = vmatprep.subr.bf16.mxu0 0
      %576 = vmatpush1.bf16.xpose.msra.mxu0 %v564
      %577 = vmatprep.subr.bf16.mxu0 0
      %578 = vmatpush1.bf16.xpose.msra.mxu0 0
      %579 = vmatprep.subr.bf16.mxu0 0
      %580 = vmatpush1.bf16.xpose.msra.mxu0 0
      %581 = vmatprep.subr.bf16.mxu0 0
      %582 = vmatpush1.bf16.xpose.msra.mxu0 0
      %583 = vmatprep.subr.bf16.mxu0 0
      %584 = vmatpush1.bf16.xpose.msra.mxu0 0
      %585 = vmatprep.subr.bf16.mxu0 0
      %586 = vmatpush1.bf16.xpose.msra.mxu0 0
      %587 = vmatprep.subr.bf16.mxu0 0
      %588 = vmatpush1.bf16.xpose.msra.mxu0 0
      %589 = vmatprep.subr.bf16.mxu0 0
      %590 = vmatpush1.bf16.xpose.msra.mxu0 0
      %591 = vmatprep.subr.bf16.mxu0 0
      %592 = vmatpush1.bf16.xpose.msra.mxu0 0
      %593 = vmatprep.subr.bf16.mxu0 0
      %594 = vmatpush1.bf16.xpose.msra.mxu0 0
      %595 = vmatprep.subr.bf16.mxu0 0
      %596 = vmatpush1.bf16.xpose.msra.mxu0 0
      %597 = vmatprep.subr.bf16.mxu0 0
      %598 = vmatpush1.bf16.xpose.msra.mxu0 0
      %599 = vmatprep.subr.bf16.mxu0 0
      %600 = vmatpush1.bf16.xpose.msra.mxu0 0
      %601 = vmatprep.mubr.bf16.mxu0 0
      %602 = vmatmul.mubr.bf16.gmra.mrb[0].mxu0 %v533
      %v603 = vpop.f32.mrb[0].mxu0
      %v604 = vadd.f32 0.0, %v603
      %v605 = vpop.f32.mrb[0].mxu0
      %v606 = vpop.f32.mrb[0].mxu0
      %v607 = vpop.f32.mrb[0].mxu0
      %608 = vdwg.mxu0
      %609 = vmatprep.subr.bf16.mxu0 0
      %610 = vmatpush1.bf16.xpose.msra.mxu0 %v561
      %611 = vmatprep.subr.bf16.mxu0 0
      %612 = vmatpush1.bf16.xpose.msra.mxu0 %v562
      %613 = vmatprep.subr.bf16.mxu0 0
      %614 = vmatpush1.bf16.xpose.msra.mxu0 %v563
      %615 = vmatprep.subr.bf16.mxu0 0
      %616 = vmatpush1.bf16.xpose.msra.mxu0 %v564
      %617 = vmatprep.subr.bf16.mxu0 0
      %618 = vmatpush1.bf16.xpose.msra.mxu0 0
      %619 = vmatprep.subr.bf16.mxu0 0
      %620 = vmatpush1.bf16.xpose.msra.mxu0 0
      %621 = vmatprep.subr.bf16.mxu0 0
      %622 = vmatpush1.bf16.xpose.msra.mxu0 0
      %623 = vmatprep.subr.bf16.mxu0 0
      %624 = vmatpush1.bf16.xpose.msra.mxu0 0
      %625 = vmatprep.subr.bf16.mxu0 0
      %626 = vmatpush1.bf16.xpose.msra.mxu0 0
      %627 = vmatprep.subr.bf16.mxu0 0
      %628 = vmatpush1.bf16.xpose.msra.mxu0 0
      %629 = vmatprep.subr.bf16.mxu0 0
      %630 = vmatpush1.bf16.xpose.msra.mxu0 0
      %631 = vmatprep.subr.bf16.mxu0 0
      %632 = vmatpush1.bf16.xpose.msra.mxu0 0
      %633 = vmatprep.subr.bf16.mxu0 0
      %634 = vmatpush1.bf16.xpose.msra.mxu0 0
      %635 = vmatprep.subr.bf16.mxu0 0
      %636 = vmatpush1.bf16.xpose.msra.mxu0 0
      %637 = vmatprep.subr.bf16.mxu0 0
      %638 = vmatpush1.bf16.xpose.msra.mxu0 0
      %639 = vmatprep.subr.bf16.mxu0 0
      %640 = vmatpush1.bf16.xpose.msra.mxu0 0
      %641 = vmatprep.mubr.bf16.mxu0 0
      %642 = vmatmul.mubr.bf16.gmra.mrb[0].mxu0 %v534
      %v643 = vpop.f32.mrb[0].mxu0
      %v644 = vadd.f32 0.0, %v643
      %v645 = vpop.f32.mrb[0].mxu0
      %v646 = vpop.f32.mrb[0].mxu0
      %v647 = vpop.f32.mrb[0].mxu0
      %648 = vdwg.mxu0
      %649 = vmatprep.subr.bf16.mxu0 0
      %650 = vmatpush1.bf16.xpose.msra.mxu0 %v561
      %651 = vmatprep.subr.bf16.mxu0 0
      %652 = vmatpush1.bf16.xpose.msra.mxu0 %v562
      %653 = vmatprep.subr.bf16.mxu0 0
      %654 = vmatpush1.bf16.xpose.msra.mxu0 %v563
      %655 = vmatprep.subr.bf16.mxu0 0
      %656 = vmatpush1.bf16.xpose.msra.mxu0 %v564
      %657 = vmatprep.subr.bf16.mxu0 0
      %658 = vmatpush1.bf16.xpose.msra.mxu0 0
      %659 = vmatprep.subr.bf16.mxu0 0
      %660 = vmatpush1.bf16.xpose.msra.mxu0 0
      %661 = vmatprep.subr.bf16.mxu0 0
      %662 = vmatpush1.bf16.xpose.msra.mxu0 0
      %663 = vmatprep.subr.bf16.mxu0 0
      %664 = vmatpush1.bf16.xpose.msra.mxu0 0
      %665 = vmatprep.subr.bf16.mxu0 0
      %666 = vmatpush1.bf16.xpose.msra.mxu0 0
      %667 = vmatprep.subr.bf16.mxu0 0
      %668 = vmatpush1.bf16.xpose.msra.mxu0 0
      %669 = vmatprep.subr.bf16.mxu0 0
      %670 = vmatpush1.bf16.xpose.msra.mxu0 0
      %671 = vmatprep.subr.bf16.mxu0 0
      %672 = vmatpush1.bf16.xpose.msra.mxu0 0
      %673 = vmatprep.subr.bf16.mxu0 0
      %674 = vmatpush1.bf16.xpose.msra.mxu0 0
      %675 = vmatprep.subr.bf16.mxu0 0
      %676 = vmatpush1.bf16.xpose.msra.mxu0 0
      %677 = vmatprep.subr.bf16.mxu0 0
      %678 = vmatpush1.bf16.xpose.msra.mxu0 0
      %679 = vmatprep.subr.bf16.mxu0 0
      %680 = vmatpush1.bf16.xpose.msra.mxu0 0
      %681 = vmatprep.mubr.bf16.mxu0 0
      %682 = vmatmul.mubr.bf16.gmra.mrb[0].mxu0 %v535
      %v683 = vpop.f32.mrb[0].mxu0
      %v684 = vadd.f32 0.0, %v683
      %v685 = vpop.f32.mrb[0].mxu0
      %v686 = vpop.f32.mrb[0].mxu0
      %v687 = vpop.f32.mrb[0].mxu0
      %688 = vdwg.mxu0
      %v689 = vadd.f32 %v447, %v604
      %v690 = vadd.f32 %v487, %v644
      %v691 = vadd.f32 %v527, %v684
      %v692 = vld [vmem:[%s532] sm:$0x3]
      %v693 = vld [vmem:[%s532 + $0x2] sm:$0x3]
      %v694 = vld [vmem:[%s532 + $0x4] sm:$0x3]
      %s695 = scalar_lea.vmem %s1, 96
      %v696 = vld [vmem:[%s695] sm:$0xf]
      %v697 = vld [vmem:[%s695 + $0x4] sm:$0xf]
      %v698 = vld [vmem:[%s695 + $0x8] sm:$0xf]
      %v699 = vld [vmem:[%s695 + $0xc] sm:$0xf]
      %v700 = vld [vmem:[%s695 + $0x10] sm:$0xf]
      %v701 = vld [vmem:[%s695 + $0x14] sm:$0xf]
      %v702 = vld [vmem:[%s695 + $0x18] sm:$0xf]
      %v703 = vld [vmem:[%s695 + $0x1c] sm:$0xf]
      %v706 = vunpack.c.l.s4 1983009808
      %v707 = vunpack.c.0.s8 %v706
      %v708 = vlaneseq
      %v709 = vshrl.u32 %v708, 7
      %v710 = vsub.s32 %v707, %v709
      %v711 = vrot.slane %v692, %v710
      %v713 = vshrl.u32 %v711, 16
      %v715 = vshll.u32 %v711, 16
      %v717 = vrot.slane %v715, 1
      %v718 = vor.u32 %v713, %v717
      %v728 = vunpack.c.l.b16 %v696
      %v729 = vunpack.c.l.b16 %v697
      %v730 = vunpack.c.l.b16 %v698
      %v731 = vunpack.c.l.b16 %v699
      %v732 = vunpack.c.l.b16 %v700
      %v733 = vunpack.c.l.b16 %v701
      %v734 = vunpack.c.l.b16 %v702
      %v735 = vunpack.c.l.b16 %v703
      %v736 = vpack.c.b16 %v729, %v728
      %v737 = vpack.c.b16 %v731, %v730
      %v738 = vpack.c.b16 %v733, %v732
      %v739 = vpack.c.b16 %v735, %v734
      %744 = vmatprep.subr.bf16.mxu0 0
      %745 = vmatpush1.bf16.xpose.msra.mxu0 %v736
      %746 = vmatprep.subr.bf16.mxu0 0
      %747 = vmatpush1.bf16.xpose.msra.mxu0 %v737
      %748 = vmatprep.subr.bf16.mxu0 0
      %749 = vmatpush1.bf16.xpose.msra.mxu0 %v738
      %750 = vmatprep.subr.bf16.mxu0 0
      %751 = vmatpush1.bf16.xpose.msra.mxu0 %v739
      %752 = vmatprep.subr.bf16.mxu0 0
      %753 = vmatpush1.bf16.xpose.msra.mxu0 0
      %754 = vmatprep.subr.bf16.mxu0 0
      %755 = vmatpush1.bf16.xpose.msra.mxu0 0
      %756 = vmatprep.subr.bf16.mxu0 0
      %757 = vmatpush1.bf16.xpose.msra.mxu0 0
      %758 = vmatprep.subr.bf16.mxu0 0
      %759 = vmatpush1.bf16.xpose.msra.mxu0 0
      %760 = vmatprep.subr.bf16.mxu0 0
      %761 = vmatpush1.bf16.xpose.msra.mxu0 0
      %762 = vmatprep.subr.bf16.mxu0 0
      %763 = vmatpush1.bf16.xpose.msra.mxu0 0
      %764 = vmatprep.subr.bf16.mxu0 0
      %765 = vmatpush1.bf16.xpose.msra.mxu0 0
      %766 = vmatprep.subr.bf16.mxu0 0
      %767 = vmatpush1.bf16.xpose.msra.mxu0 0
      %768 = vmatprep.subr.bf16.mxu0 0
      %769 = vmatpush1.bf16.xpose.msra.mxu0 0
      %770 = vmatprep.subr.bf16.mxu0 0
      %771 = vmatpush1.bf16.xpose.msra.mxu0 0
      %772 = vmatprep.subr.bf16.mxu0 0
      %773 = vmatpush1.bf16.xpose.msra.mxu0 0
      %774 = vmatprep.subr.bf16.mxu0 0
      %775 = vmatpush1.bf16.xpose.msra.mxu0 0
      %776 = vmatprep.mubr.bf16.mxu0 0
      %777 = vmatmul.mubr.bf16.gmra.mrb[0].mxu0 %v718
      %v778 = vpop.f32.mrb[0].mxu0
      %v779 = vadd.f32 0.0, %v778
      %v780 = vpop.f32.mrb[0].mxu0
      %v781 = vpop.f32.mrb[0].mxu0
      %v782 = vpop.f32.mrb[0].mxu0
      %783 = vdwg.mxu0
      %v786 = vunpack.c.l.s4 1983009808
      %v787 = vunpack.c.0.s8 %v786
      %v788 = vlaneseq
      %v789 = vshrl.u32 %v788, 7
      %v790 = vsub.s32 %v787, %v789
      %v791 = vrot.slane %v693, %v790
      %v793 = vshrl.u32 %v791, 16
      %v795 = vshll.u32 %v791, 16
      %v797 = vrot.slane %v795, 1
      %v798 = vor.u32 %v793, %v797
      %800 = vmatprep.subr.bf16.mxu0 0
      %801 = vmatpush1.bf16.xpose.msra.mxu0 %v736
      %802 = vmatprep.subr.bf16.mxu0 0
      %803 = vmatpush1.bf16.xpose.msra.mxu0 %v737
      %804 = vmatprep.subr.bf16.mxu0 0
      %805 = vmatpush1.bf16.xpose.msra.mxu0 %v738
      %806 = vmatprep.subr.bf16.mxu0 0
      %807 = vmatpush1.bf16.xpose.msra.mxu0 %v739
      %808 = vmatprep.subr.bf16.mxu0 0
      %809 = vmatpush1.bf16.xpose.msra.mxu0 0
      %810 = vmatprep.subr.bf16.mxu0 0
      %811 = vmatpush1.bf16.xpose.msra.mxu0 0
      %812 = vmatprep.subr.bf16.mxu0 0
      %813 = vmatpush1.bf16.xpose.msra.mxu0 0
      %814 = vmatprep.subr.bf16.mxu0 0
      %815 = vmatpush1.bf16.xpose.msra.mxu0 0
      %816 = vmatprep.subr.bf16.mxu0 0
      %817 = vmatpush1.bf16.xpose.msra.mxu0 0
      %818 = vmatprep.subr.bf16.mxu0 0
      %819 = vmatpush1.bf16.xpose.msra.mxu0 0
      %820 = vmatprep.subr.bf16.mxu0 0
      %821 = vmatpush1.bf16.xpose.msra.mxu0 0
      %822 = vmatprep.subr.bf16.mxu0 0
      %823 = vmatpush1.bf16.xpose.msra.mxu0 0
      %824 = vmatprep.subr.bf16.mxu0 0
      %825 = vmatpush1.bf16.xpose.msra.mxu0 0
      %826 = vmatprep.subr.bf16.mxu0 0
      %827 = vmatpush1.bf16.xpose.msra.mxu0 0
      %828 = vmatprep.subr.bf16.mxu0 0
      %829 = vmatpush1.bf16.xpose.msra.mxu0 0
      %830 = vmatprep.subr.bf16.mxu0 0
      %831 = vmatpush1.bf16.xpose.msra.mxu0 0
      %832 = vmatprep.mubr.bf16.mxu0 0
      %833 = vmatmul.mubr.bf16.gmra.mrb[0].mxu0 %v798
      %v834 = vpop.f32.mrb[0].mxu0
      %v835 = vadd.f32 0.0, %v834
      %v836 = vpop.f32.mrb[0].mxu0
      %v837 = vpop.f32.mrb[0].mxu0
      %v838 = vpop.f32.mrb[0].mxu0
      %839 = vdwg.mxu0
      %v842 = vunpack.c.l.s4 1983009808
      %v843 = vunpack.c.0.s8 %v842
      %v844 = vlaneseq
      %v845 = vshrl.u32 %v844, 7
      %v846 = vsub.s32 %v843, %v845
      %v847 = vrot.slane %v694, %v846
      %v849 = vshrl.u32 %v847, 16
      %v851 = vshll.u32 %v847, 16
      %v853 = vrot.slane %v851, 1
      %v854 = vor.u32 %v849, %v853
      %856 = vmatprep.subr.bf16.mxu0 0
      %857 = vmatpush1.bf16.xpose.msra.mxu0 %v736
      %858 = vmatprep.subr.bf16.mxu0 0
      %859 = vmatpush1.bf16.xpose.msra.mxu0 %v737
      %860 = vmatprep.subr.bf16.mxu0 0
      %861 = vmatpush1.bf16.xpose.msra.mxu0 %v738
      %862 = vmatprep.subr.bf16.mxu0 0
      %863 = vmatpush1.bf16.xpose.msra.mxu0 %v739
      %864 = vmatprep.subr.bf16.mxu0 0
      %865 = vmatpush1.bf16.xpose.msra.mxu0 0
      %866 = vmatprep.subr.bf16.mxu0 0
      %867 = vmatpush1.bf16.xpose.msra.mxu0 0
      %868 = vmatprep.subr.bf16.mxu0 0
      %869 = vmatpush1.bf16.xpose.msra.mxu0 0
      %870 = vmatprep.subr.bf16.mxu0 0
      %871 = vmatpush1.bf16.xpose.msra.mxu0 0
      %872 = vmatprep.subr.bf16.mxu0 0
      %873 = vmatpush1.bf16.xpose.msra.mxu0 0
      %874 = vmatprep.subr.bf16.mxu0 0
      %875 = vmatpush1.bf16.xpose.msra.mxu0 0
      %876 = vmatprep.subr.bf16.mxu0 0
      %877 = vmatpush1.bf16.xpose.msra.mxu0 0
      %878 = vmatprep.subr.bf16.mxu0 0
      %879 = vmatpush1.bf16.xpose.msra.mxu0 0
      %880 = vmatprep.subr.bf16.mxu0 0
      %881 = vmatpush1.bf16.xpose.msra.mxu0 0
      %882 = vmatprep.subr.bf16.mxu0 0
      %883 = vmatpush1.bf16.xpose.msra.mxu0 0
      %884 = vmatprep.subr.bf16.mxu0 0
      %885 = vmatpush1.bf16.xpose.msra.mxu0 0
      %886 = vmatprep.subr.bf16.mxu0 0
      %887 = vmatpush1.bf16.xpose.msra.mxu0 0
      %888 = vmatprep.mubr.bf16.mxu0 0
      %889 = vmatmul.mubr.bf16.gmra.mrb[0].mxu0 %v854
      %v890 = vpop.f32.mrb[0].mxu0
      %v891 = vadd.f32 0.0, %v890
      %v892 = vpop.f32.mrb[0].mxu0
      %v893 = vpop.f32.mrb[0].mxu0
      %v894 = vpop.f32.mrb[0].mxu0
      %895 = vdwg.mxu0
      %v896 = vadd.f32 %v689, %v779
      %v897 = vadd.f32 %v690, %v835
      %v898 = vadd.f32 %v691, %v891
      %v900 = vlaneseq
      %v901 = vshrl.u32 %v900, 7
      %v902 = vsub.s32 0, %v901
      %v903 = vrot.slane %v172, %v902
      %v905 = vadd.f32 %v896, %v903
      %v906 = vadd.f32 %v897, %v903
      %v907 = vadd.f32 %v898, %v903
      %v908 = vmax.f32 %v905, 0.0
      %v909 = vmax.f32 %v906, 0.0
      %v910 = vmax.f32 %v907, 0.0
      %v911 = vpack.c.bf16 %v908, %v908
      %v912 = vpack.c.bf16 %v909, %v909
      %v913 = vpack.c.bf16 %v910, %v910
      %vm914 = vcmask 517120
      %vm915 = vsmask.f32 1280
      %vm916 = vmand %vm914, %vm915
      %v917 = vld [vmem:[%s170] sm:$0x3]
      %v918 = vsel %vm916, %v911, %v917
      %919 = vst [vmem:[%s170] sm:$0x3] %v918
      %v920 = vld [vmem:[%s170 + $0x2] sm:$0x3]
      %v921 = vsel %vm916, %v912, %v920
      %922 = vst [vmem:[%s170 + $0x2] sm:$0x3] %v921
      %v923 = vld [vmem:[%s170 + $0x4] sm:$0x3]
      %v924 = vsel %vm916, %v913, %v923
      %925 = vst [vmem:[%s170 + $0x4] sm:$0x3] %v924
      %p926 = scmp.lt.s32.totalorder %s14, 1
      %s927 = scalar_select %p926, %s14, 1
      %s928 = smul.addr %s927, 3
      %s929 = smul.addr %s928, 2
      %s930 = scalar_lea.vmem %s3, %s929
      // Predicated region
      $region33: #{nature_cnn_forward.5} parent=31 // pred_check
        %p931 = pneg %p100
      $region34: #{nature_cnn_forward.5} parent=31 // pred_check_branch
        %933 = sbr.rel (%p931) target = $region36
      $region35: #{nature_cnn_forward.5} parent=31 // pred_region
        _
      $region36: #{nature_cnn_forward.5} parent=31 // pred_fallthru
        _
    $region32: #{nature_cnn_forward.5} parent=5 // pred_fallthru
      _
    %p934 = scmp.le.s32.totalorder 2, %s9
    // Predicated region
    $region37: #{nature_cnn_forward.5} parent=5 // pred_check
      %p935 = pneg %p934
    $region38: #{nature_cnn_forward.5} parent=5 // pred_check_branch
      %937 = sbr.rel (%p935) target = $region40
    $region39: #{nature_cnn_forward.5} parent=5 // pred_region
      %s938 = ssub.s32 %s9, 2
      // Predicated region
      $region41: #{nature_cnn_forward.5} parent=39 // pred_check
        %p939 = pneg %p106
      $region42: #{nature_cnn_forward.5} parent=39 // pred_check_branch
        %941 = sbr.rel (%p939) target = $region44
      $region43: #{nature_cnn_forward.5} parent=39 // pred_region
        %p942 = scmp.lt.s32.totalorder %s15, 1
        %s943 = scalar_select %p942, %s15, 1
        %s944 = smul.addr %s943, 3
        %s945 = smul.addr %s944, 2
        %s946 = scalar_lea.vmem %s3, %s945
      $region44: #{nature_cnn_forward.5} parent=39 // pred_fallthru
        _
    $region40: #{nature_cnn_forward.5} parent=5 // pred_fallthru
      _
  $region6: #{nature_cnn_forward.5} parent=0 // loop_footer
    %s13 = sadd.s32 1, %s9
  $region7: #{nature_cnn_forward.5} parent=0 // loop_footer_branch
    %8 = sbr.rel target = $region3
  $region8: #{nature_cnn_forward.5} parent=0 // loop_exit
    _

// kernel: nature_cnn_forward.4
$region0: #{nature_cnn_forward.4}
  #allocation0 [shape = 'u32[]', space=smem, size = 0x4, offset = 0x4, fixed_abs, tag = 'smem constant byte address 0x4 - core index']
  #allocation1 [shape = 'u32[144,128]{1,0:T(1,128)}', space=vmem, size = 0x12000, scoped, tag = 'internal scratch']
  %s0 = inlined_call_operand.vmem [shape: bf16[2,9,9,64], index: 0, kind: input, shape index: {}]
  %s1 = inlined_call_operand.vmem [shape: bf16[4,32,64], index: 1, kind: input, shape index: {}]
  %s2 = inlined_call_operand.vmem [shape: f32[1,32], index: 2, kind: input, shape index: {}]
  %s3 = inlined_call_operand.vmem [shape: bf16[2,8,8,32], index: 3, kind: output, shape index: {}]
  %s4 = sld [smem:[#allocation0]]
  $region45: #{nature_cnn_forward.4} parent=0
    _
  %s6 = ssub.s32 1, %s4
  %s7 = scalar_select 0, %s6, %s4
  loop: start=0, step=1, limit=4
  $region2: #{nature_cnn_forward.4} parent=0 // loop_pre_header
    _
  $region3: #{nature_cnn_forward.4} parent=0 // loop_header
    %s9 = sphi 0, %s13
    %p10 = scmp.ge.s32.totalorder %s9, 4
    %s19 = sphi 0, %s21
    %s22 = sphi 0, %s19
    %s23 = sphi 0, %s22
    %s39 = sphi 0, %s23
    %s43 = sphi 0, %s43
    %s45 = sphi 0, %s43
    %s46 = sphi 0, %s45
    %s60 = sphi 0, %s46
    %s64 = sphi 0, %s64
    %s66 = sphi 0, %s64
    %s67 = sphi 0, %s66
    %s81 = sphi 0, %s67
    %s87 = sphi 0, %s89
    %s90 = sphi 0, %s87
    %s91 = sphi 0, %s90
    %s107 = sphi 0, %s91
  $region4: #{nature_cnn_forward.4} parent=0 // loop_header_branch
    %12 = sbr.rel (%p10) target = $region8
  $region5: #{nature_cnn_forward.4} parent=0 // loop_body
    %s14 = ssub.s32 %s9, 1
    %s15 = ssub.s32 %s9, 2
    %s16 = sadd.s32 %s9, 1
    %s17 = ssub.s32 %s9, %s16
    %p18 = scmp.eq.s32.totalorder %s17, 0
    %s20 = sadd.s32 %s19, 1
    %s21 = scalar_select %p18, %s19, %s20
    %p24 = pneg %p18
    %p25 = scmp.eq.s32.totalorder %s9, 1
    %p26 = por %p24, %p25
    %p27 = scmp.ne.s32.totalorder %s19, %s22
    %p28 = scmp.eq.s32.totalorder %s9, 0
    %p29 = por %p27, %p28
    %p30 = scmp.ne.s32.totalorder %s19, %s22
    %p31 = scmp.eq.s32.totalorder %s14, 1
    %p32 = por %p30, %p31
    %p33 = scmp.ne.s32.totalorder %s22, %s23
    %p34 = scmp.eq.s32.totalorder %s14, 0
    %p35 = por %p33, %p34
    %p36 = scmp.ne.s32.totalorder %s22, %s23
    %p37 = scmp.eq.s32.totalorder %s15, 1
    %p38 = por %p36, %p37
    %p40 = scmp.ne.s32.totalorder %s23, %s39
    %p41 = scmp.eq.s32.totalorder %s15, 0
    %p42 = por %p40, %p41
    %s44 = sadd.s32 %s43, 1
    %p47 = scmp.eq.s32.totalorder %s9, 1
    %p48 = scmp.ne.s32.totalorder %s43, %s45
    %p49 = scmp.eq.s32.totalorder %s9, 0
    %p50 = por %p48, %p49
    %p51 = scmp.ne.s32.totalorder %s43, %s45
    %p52 = scmp.eq.s32.totalorder %s14, 1
    %p53 = por %p51, %p52
    %p54 = scmp.ne.s32.totalorder %s45, %s46
    %p55 = scmp.eq.s32.totalorder %s14, 0
    %p56 = por %p54, %p55
    %p57 = scmp.ne.s32.totalorder %s45, %s46
    %p58 = scmp.eq.s32.totalorder %s15, 1
    %p59 = por %p57, %p58
    %p61 = scmp.ne.s32.totalorder %s46, %s60
    %p62 = scmp.eq.s32.totalorder %s15, 0
    %p63 = por %p61, %p62
    %s65 = sadd.s32 %s64, 1
    %p68 = scmp.eq.s32.totalorder %s9, 1
    %p69 = scmp.ne.s32.totalorder %s64, %s66
    %p70 = scmp.eq.s32.totalorder %s9, 0
    %p71 = por %p69, %p70
    %p72 = scmp.ne.s32.totalorder %s64, %s66
    %p73 = scmp.eq.s32.totalorder %s14, 1
    %p74 = por %p72, %p73
    %p75 = scmp.ne.s32.totalorder %s66, %s67
    %p76 = scmp.eq.s32.totalorder %s14, 0
    %p77 = por %p75, %p76
    %p78 = scmp.ne.s32.totalorder %s66, %s67
    %p79 = scmp.eq.s32.totalorder %s15, 1
    %p80 = por %p78, %p79
    %p82 = scmp.ne.s32.totalorder %s67, %s81
    %p83 = scmp.eq.s32.totalorder %s15, 0
    %p84 = por %p82, %p83
    %s85 = ssub.s32 %s9, %s16
    %p86 = scmp.eq.s32.totalorder %s85, 0
    %s88 = sadd.s32 %s87, 1
    %s89 = scalar_select %p86, %s87, %s88
    %p92 = pneg %p86
    %p93 = scmp.eq.s32.totalorder %s9, 1
    %p94 = por %p92, %p93
    %p95 = scmp.ne.s32.totalorder %s87, %s90
    %p96 = scmp.eq.s32.totalorder %s9, 0
    %p97 = por %p95, %p96
    %p98 = scmp.ne.s32.totalorder %s87, %s90
    %p99 = scmp.eq.s32.totalorder %s14, 1
    %p100 = por %p98, %p99
    %p101 = scmp.ne.s32.totalorder %s90, %s91
    %p102 = scmp.eq.s32.totalorder %s14, 0
    %p103 = por %p101, %p102
    %p104 = scmp.ne.s32.totalorder %s90, %s91
    %p105 = scmp.eq.s32.totalorder %s15, 1
    %p106 = por %p104, %p105
    %p108 = scmp.ne.s32.totalorder %s91, %s107
    %p109 = scmp.eq.s32.totalorder %s15, 0
    %p110 = por %p108, %p109
    %p111 = scmp.le.s32.totalorder 1, %s9
    %p112 = scmp.lt.s32.totalorder %s9, 3
    %p113 = pnand %p111, %p112
    %p114 = pneg %p113
    // Predicated region
    $region9: #{nature_cnn_forward.4} parent=5 // pred_check
      _
    $region10: #{nature_cnn_forward.4} parent=5 // pred_check_branch
      %116 = sbr.rel (%p113) target = $region12
    $region11: #{nature_cnn_forward.4} parent=5 // pred_region
      %s117 = ssub.s32 %s9, 1
      // Predicated region
      $region13: #{nature_cnn_forward.4} parent=11 // pred_check
        %p118 = pneg %p56
      $region14: #{nature_cnn_forward.4} parent=11 // pred_check_branch
        %120 = sbr.rel (%p118) target = $region16
      $region15: #{nature_cnn_forward.4} parent=11 // pred_region
        _
      $region16: #{nature_cnn_forward.4} parent=11 // pred_fallthru
        _
      // Predicated region
      $region17: #{nature_cnn_forward.4} parent=11 // pred_check
        %p121 = pneg %p77
      $region18: #{nature_cnn_forward.4} parent=11 // pred_check_branch
        %123 = sbr.rel (%p121) target = $region20
      $region19: #{nature_cnn_forward.4} parent=11 // pred_region
        _
      $region20: #{nature_cnn_forward.4} parent=11 // pred_fallthru
        _
    $region12: #{nature_cnn_forward.4} parent=5 // pred_fallthru
      _
    %p124 = scmp.lt.s32.totalorder %s9, 2
    // Predicated region
    $region21: #{nature_cnn_forward.4} parent=5 // pred_check
      %p125 = pneg %p124
    $region22: #{nature_cnn_forward.4} parent=5 // pred_check_branch
      %127 = sbr.rel (%p125) target = $region24
    $region23: #{nature_cnn_forward.4} parent=5 // pred_region
      // Predicated region
      $region25: #{nature_cnn_forward.4} parent=23 // pred_check
        %p128 = pneg %p29
      $region26: #{nature_cnn_forward.4} parent=23 // pred_check_branch
        %130 = sbr.rel (%p128) target = $region28
      $region27: #{nature_cnn_forward.4} parent=23 // pred_region
        %p131 = scmp.lt.s32.totalorder %s9, 1
        %s132 = scalar_select %p131, %s9, 1
        %s133 = smul.addr %s132, 18
        %s134 = smul.addr %s133, 4
        %s135 = scalar_lea.vmem %s0, %s134
      $region28: #{nature_cnn_forward.4} parent=23 // pred_fallthru
        _
    $region24: #{nature_cnn_forward.4} parent=5 // pred_fallthru
      _
    %p136 = scmp.le.s32.totalorder 1, %s9
    %p137 = scmp.lt.s32.totalorder %s9, 3
    %p138 = pnand %p136, %p137
    %p139 = pneg %p138
    // Predicated region
    $region29: #{nature_cnn_forward.4} parent=5 // pred_check
      _
    $region30: #{nature_cnn_forward.4} parent=5 // pred_check_branch
      %141 = sbr.rel (%p138) target = $region32
    $region31: #{nature_cnn_forward.4} parent=5 // pred_region
      %s142 = ssub.s32 %s9, 1
      %p143 = scmp.lt.s32.totalorder %s14, 1
      %s144 = scalar_select %p143, %s14, 1
      %s145 = smul.addr %s144, 18
      %s146 = smul.addr %s145, 4
      %s147 = scalar_lea.vmem %s0, %s146
      %p148 = pneg %p35
      %p149 = pneg %p32
      %p150 = pneg %p56
      %p151 = pneg %p53
      %p152 = pneg %p77
      %p153 = pneg %p74
      %p154 = pneg %p103
      %p155 = pneg %p100
      %p156 = scmp.lt.s32.totalorder %s14, 1
      %s157 = scalar_select %p156, %s14, 1
      %s158 = smul.addr %s157, 8
      %s159 = smul.addr %s158, 4
      %s160 = scalar_lea.vmem %s3, %s159
      %p161 = scmp.lt.s32.totalorder %s14, 1
      %s162 = scalar_select %p161, %s14, 1
      %s163 = smul.addr %s162, 18
      %s164 = smul.addr %s163, 4
      %s165 = scalar_lea.vmem %s0, %s164
      %p166 = scmp.lt.s32.totalorder %s14, 1
      %s167 = scalar_select %p166, %s14, 1
      %s168 = smul.addr %s167, 8
      %s169 = smul.addr %s168, 4
      %s170 = scalar_lea.vmem %s3, %s169
      %v172 = vld [vmem:[%s2] sm:$0x1]
      %v173 = vld [vmem:[%s165] sm:$0xf]
      %v174 = vld [vmem:[%s165 + $0x8] sm:$0xf]
      %v175 = vld [vmem:[%s165 + $0x10] sm:$0xf]
      %v176 = vld [vmem:[%s165 + $0x18] sm:$0xf]
      %v177 = vld [vmem:[%s165 + $0x20] sm:$0xf]
      %v178 = vld [vmem:[%s165 + $0x28] sm:$0xf]
      %v179 = vld [vmem:[%s165 + $0x30] sm:$0xf]
      %v180 = vld [vmem:[%s165 + $0x38] sm:$0xf]
      %v181 = vld [vmem:[%s1] sm:$0xf]
      %v182 = vld [vmem:[%s1 + $0x4] sm:$0xf]
      %v183 = vld [vmem:[%s1 + $0x8] sm:$0xf]
      %v184 = vld [vmem:[%s1 + $0xc] sm:$0xf]
      %v185 = vld [vmem:[%s165] sm:$0xf]
      %v186 = vld [vmem:[%s165 + $0x4] sm:$0x1]
      %v187 = vld [vmem:[%s165 + $0x8] sm:$0xf]
      %v188 = vld [vmem:[%s165 + $0xc] sm:$0x1]
      %v189 = vld [vmem:[%s165 + $0x10] sm:$0xf]
      %v190 = vld [vmem:[%s165 + $0x14] sm:$0x1]
      %v191 = vld [vmem:[%s165 + $0x18] sm:$0xf]
      %v192 = vld [vmem:[%s165 + $0x1c] sm:$0x1]
      %v193 = vld [vmem:[%s165 + $0x20] sm:$0xf]
      %v194 = vld [vmem:[%s165 + $0x24] sm:$0x1]
      %v195 = vld [vmem:[%s165 + $0x28] sm:$0xf]
      %v196 = vld [vmem:[%s165 + $0x2c] sm:$0x1]
      %v197 = vld [vmem:[%s165 + $0x30] sm:$0xf]
      %v198 = vld [vmem:[%s165 + $0x34] sm:$0x1]
      %v199 = vld [vmem:[%s165 + $0x38] sm:$0xf]
      %v200 = vld [vmem:[%s165 + $0x3c] sm:$0x1]
      %s201 = scalar_lea.vmem %s1, 16
      %v202 = vld [vmem:[%s201] sm:$0xf]
      %v203 = vld [vmem:[%s201 + $0x4] sm:$0xf]
      %v204 = vld [vmem:[%s201 + $0x8] sm:$0xf]
      %v205 = vld [vmem:[%s201 + $0xc] sm:$0xf]
      %v208 = vunpack.c.l.b16 %v185
      %v209 = vunpack.c.l.b16 %v186
      %v210 = vpack.c.b16 %v209, %v208
      %v212 = vshrl.u32 %v210, 16
      %v214 = vshll.u32 %v210, 16
      %v216 = vrot.slane %v214, 1
      %v217 = vor.u32 %v212, %v216
      %v222 = vunpack.c.l.b16 %v202
      %v223 = vunpack.c.l.b16 %v203
      %v224 = vunpack.c.l.b16 %v204
      %v225 = vunpack.c.l.b16 %v205
      %v226 = vpack.c.b16 %v223, %v222
      %v227 = vpack.c.b16 %v225, %v224
      %vm228 = vcmask 523264
      %v230 = vsel %vm228, %v217, 0
      %v233 = vsel %vm228, %v226, 0
      %v236 = vsel %vm228, %v227, 0
      %238 = vmatprep.subr.bf16.mxu0 0
      %239 = vmatpush1.bf16.xpose.msra.mxu0 %v233
      %240 = vmatprep.subr.bf16.mxu0 0
      %241 = vmatpush1.bf16.xpose.msra.mxu0 %v236
      %242 = vmatprep.subr.bf16.mxu0 0
      %243 = vmatpush1.bf16.xpose.msra.mxu0 0
      %244 = vmatprep.subr.bf16.mxu0 0
      %245 = vmatpush1.bf16.xpose.msra.mxu0 0
      %246 = vmatprep.subr.bf16.mxu0 0
      %247 = vmatpush1.bf16.xpose.msra.mxu0 0
      %248 = vmatprep.subr.bf16.mxu0 0
      %249 = vmatpush1.bf16.xpose.msra.mxu0 0
      %250 = vmatprep.subr.bf16.mxu0 0
      %251 = vmatpush1.bf16.xpose.msra.mxu0 0
      %252 = vmatprep.subr.bf16.mxu0 0
      %253 = vmatpush1.bf16.xpose.msra.mxu0 0
      %254 = vmatprep.subr.bf16.mxu0 0
      %255 = vmatpush1.bf16.xpose.msra.mxu0 0
      %256 = vmatprep.subr.bf16.mxu0 0
      %257 = vmatpush1.bf16.xpose.msra.mxu0 0
      %258 = vmatprep.subr.bf16.mxu0 0
      %259 = vmatpush1.bf16.xpose.msra.mxu0 0
      %260 = vmatprep.subr.bf16.mxu0 0
      %261 = vmatpush1.bf16.xpose.msra.mxu0 0
      %262 = vmatprep.subr.bf16.mxu0 0
      %263 = vmatpush1.bf16.xpose.msra.mxu0 0
      %264 = vmatprep.subr.bf16.mxu0 0
      %265 = vmatpush1.bf16.xpose.msra.mxu0 0
      %266 = vmatprep.subr.bf16.mxu0 0
      %267 = vmatpush1.bf16.xpose.msra.mxu0 0
      %268 = vmatprep.subr.bf16.mxu0 0
      %269 = vmatpush1.bf16.xpose.msra.mxu0 0
      %270 = vmatprep.mubr.bf16.mxu0 0
      %271 = vmatmul.mubr.bf16.gmra.mrb[0].mxu0 %v230
      %v272 = vpop.f32.mrb[0].mxu0
      %v273 = vadd.f32 0.0, %v272
      %v274 = vpop.f32.mrb[0].mxu0
      %v275 = vpop.f32.mrb[0].mxu0
      %v276 = vpop.f32.mrb[0].mxu0
      %277 = vdwg.mxu0
      %v280 = vunpack.c.l.b16 %v187
      %v281 = vunpack.c.l.b16 %v188
      %v282 = vpack.c.b16 %v281, %v280
      %v284 = vshrl.u32 %v282, 16
      %v286 = vshll.u32 %v282, 16
      %v288 = vrot.slane %v286, 1
      %v289 = vor.u32 %v284, %v288
      %v291 = vsel %vm228, %v289, 0
      %293 = vmatprep.subr.bf16.mxu0 0
      %294 = vmatpush1.bf16.xpose.msra.mxu0 %v233
      %295 = vmatprep.subr.bf16.mxu0 0
      %296 = vmatpush1.bf16.xpose.msra.mxu0 %v236
      %297 = vmatprep.subr.bf16.mxu0 0
      %298 = vmatpush1.bf16.xpose.msra.mxu0 0
      %299 = vmatprep.subr.bf16.mxu0 0
      %300 = vmatpush1.bf16.xpose.msra.mxu0 0
      %301 = vmatprep.subr.bf16.mxu0 0
      %302 = vmatpush1.bf16.xpose.msra.mxu0 0
      %303 = vmatprep.subr.bf16.mxu0 0
      %304 = vmatpush1.bf16.xpose.msra.mxu0 0
      %305 = vmatprep.subr.bf16.mxu0 0
      %306 = vmatpush1.bf16.xpose.msra.mxu0 0
      %307 = vmatprep.subr.bf16.mxu0 0
      %308 = vmatpush1.bf16.xpose.msra.mxu0 0
      %309 = vmatprep.subr.bf16.mxu0 0
      %310 = vmatpush1.bf16.xpose.msra.mxu0 0
      %311 = vmatprep.subr.bf16.mxu0 0
      %312 = vmatpush1.bf16.xpose.msra.mxu0 0
      %313 = vmatprep.subr.bf16.mxu0 0
      %314 = vmatpush1.bf16.xpose.msra.mxu0 0
      %315 = vmatprep.subr.bf16.mxu0 0
      %316 = vmatpush1.bf16.xpose.msra.mxu0 0
      %317 = vmatprep.subr.bf16.mxu0 0
      %318 = vmatpush1.bf16.xpose.msra.mxu0 0
      %319 = vmatprep.subr.bf16.mxu0 0
      %320 = vmatpush1.bf16.xpose.msra.mxu0 0
      %321 = vmatprep.subr.bf16.mxu0 0
      %322 = vmatpush1.bf16.xpose.msra.mxu0 0
      %323 = vmatprep.subr.bf16.mxu0 0
      %324 = vmatpush1.bf16.xpose.msra.mxu0 0
      %325 = vmatprep.mubr.bf16.mxu0 0
      %326 = vmatmul.mubr.bf16.gmra.mrb[0].mxu0 %v291
      %v327 = vpop.f32.mrb[0].mxu0
      %v328 = vadd.f32 0.0, %v327
      %v329 = vpop.f32.mrb[0].mxu0
      %v330 = vpop.f32.mrb[0].mxu0
      %v331 = vpop.f32.mrb[0].mxu0
      %332 = vdwg.mxu0
      %v335 = vunpack.c.l.b16 %v189
      %v336 = vunpack.c.l.b16 %v190
      %v337 = vpack.c.b16 %v336, %v335
      %v339 = vshrl.u32 %v337, 16
      %v341 = vshll.u32 %v337, 16
      %v343 = vrot.slane %v341, 1
      %v344 = vor.u32 %v339, %v343
      %v346 = vsel %vm228, %v344, 0
      %348 = vmatprep.subr.bf16.mxu0 0
      %349 = vmatpush1.bf16.xpose.msra.mxu0 %v233
      %350 = vmatprep.subr.bf16.mxu0 0
      %351 = vmatpush1.bf16.xpose.msra.mxu0 %v236
      %352 = vmatprep.subr.bf16.mxu0 0
      %353 = vmatpush1.bf16.xpose.msra.mxu0 0
      %354 = vmatprep.subr.bf16.mxu0 0
      %355 = vmatpush1.bf16.xpose.msra.mxu0 0
      %356 = vmatprep.subr.bf16.mxu0 0
      %357 = vmatpush1.bf16.xpose.msra.mxu0 0
      %358 = vmatprep.subr.bf16.mxu0 0
      %359 = vmatpush1.bf16.xpose.msra.mxu0 0
      %360 = vmatprep.subr.bf16.mxu0 0
      %361 = vmatpush1.bf16.xpose.msra.mxu0 0
      %362 = vmatprep.subr.bf16.mxu0 0
      %363 = vmatpush1.bf16.xpose.msra.mxu0 0
      %364 = vmatprep.subr.bf16.mxu0 0
      %365 = vmatpush1.bf16.xpose.msra.mxu0 0
      %366 = vmatprep.subr.bf16.mxu0 0
      %367 = vmatpush1.bf16.xpose.msra.mxu0 0
      %368 = vmatprep.subr.bf16.mxu0 0
      %369 = vmatpush1.bf16.xpose.msra.mxu0 0
      %370 = vmatprep.subr.bf16.mxu0 0
      %371 = vmatpush1.bf16.xpose.msra.mxu0 0
      %372 = vmatprep.subr.bf16.mxu0 0
      %373 = vmatpush1.bf16.xpose.msra.mxu0 0
      %374 = vmatprep.subr.bf16.mxu0 0
      %375 = vmatpush1.bf16.xpose.msra.mxu0 0
      %376 = vmatprep.subr.bf16.mxu0 0
      %377 = vmatpush1.bf16.xpose.msra.mxu0 0
      %378 = vmatprep.subr.bf16.mxu0 0
      %379 = vmatpush1.bf16.xpose.msra.mxu0 0
      %380 = vmatprep.mubr.bf16.mxu0 0
      %381 = vmatmul.mubr.bf16.gmra.mrb[0].mxu0 %v346
      %v382 = vpop.f32.mrb[0].mxu0
      %v383 = vadd.f32 0.0, %v382
      %v384 = vpop.f32.mrb[0].mxu0
      %v385 = vpop.f32.mrb[0].mxu0
      %v386 = vpop.f32.mrb[0].mxu0
      %387 = vdwg.mxu0
      %v390 = vunpack.c.l.b16 %v191
      %v391 = vunpack.c.l.b16 %v192
      %v392 = vpack.c.b16 %v391, %v390
      %v394 = vshrl.u32 %v392, 16
      %v396 = vshll.u32 %v392, 16
      %v398 = vrot.slane %v396, 1
      %v399 = vor.u32 %v394, %v398
      %v401 = vsel %vm228, %v399, 0
      %403 = vmatprep.subr.bf16.mxu0 0
      %404 = vmatpush1.bf16.xpose.msra.mxu0 %v233
      %405 = vmatprep.subr.bf16.mxu0 0
      %406 = vmatpush1.bf16.xpose.msra.mxu0 %v236
      %407 = vmatprep.subr.bf16.mxu0 0
      %408 = vmatpush1.bf16.xpose.msra.mxu0 0
      %409 = vmatprep.subr.bf16.mxu0 0
      %410 = vmatpush1.bf16.xpose.msra.mxu0 0
      %411 = vmatprep.subr.bf16.mxu0 0
      %412 = vmatpush1.bf16.xpose.msra.mxu0 0
      %413 = vmatprep.subr.bf16.mxu0 0
      %414 = vmatpush1.bf16.xpose.msra.mxu0 0
      %415 = vmatprep.subr.bf16.mxu0 0
      %416 = vmatpush1.bf16.xpose.msra.mxu0 0
      %417 = vmatprep.subr.bf16.mxu0 0
      %418 = vmatpush1.bf16.xpose.msra.mxu0 0
      %419 = vmatprep.subr.bf16.mxu0 0
      %420 = vmatpush1.bf16.xpose.msra.mxu0 0
      %421 = vmatprep.subr.bf16.mxu0 0
      %422 = vmatpush1.bf16.xpose.msra.mxu0 0
      %423 = vmatprep.subr.bf16.mxu0 0
      %424 = vmatpush1.bf16.xpose.msra.mxu0 0
      %425 = vmatprep.subr.bf16.mxu0 0
      %426 = vmatpush1.bf16.xpose.msra.mxu0 0
      %427 = vmatprep.subr.bf16.mxu0 0
      %428 = vmatpush1.bf16.xpose.msra.mxu0 0
      %429 = vmatprep.subr.bf16.mxu0 0
      %430 = vmatpush1.bf16.xpose.msra.mxu0 0
      %431 = vmatprep.subr.bf16.mxu0 0
      %432 = vmatpush1.bf16.xpose.msra.mxu0 0
      %433 = vmatprep.subr.bf16.mxu0 0
      %434 = vmatpush1.bf16.xpose.msra.mxu0 0
      %435 = vmatprep.mubr.bf16.mxu0 0
      %436 = vmatmul.mubr.bf16.gmra.mrb[0].mxu0 %v401
      %v437 = vpop.f32.mrb[0].mxu0
      %v438 = vadd.f32 0.0, %v437
      %v439 = vpop.f32.mrb[0].mxu0
      %v440 = vpop.f32.mrb[0].mxu0
      %v441 = vpop.f32.mrb[0].mxu0
      %442 = vdwg.mxu0
      %v445 = vunpack.c.l.b16 %v193
      %v446 = vunpack.c.l.b16 %v194
      %v447 = vpack.c.b16 %v446, %v445
      %v449 = vshrl.u32 %v447, 16
      %v451 = vshll.u32 %v447, 16
      %v453 = vrot.slane %v451, 1
      %v454 = vor.u32 %v449, %v453
      %v456 = vsel %vm228, %v454, 0
      %458 = vmatprep.subr.bf16.mxu0 0
      %459 = vmatpush1.bf16.xpose.msra.mxu0 %v233
      %460 = vmatprep.subr.bf16.mxu0 0
      %461 = vmatpush1.bf16.xpose.msra.mxu0 %v236
      %462 = vmatprep.subr.bf16.mxu0 0
      %463 = vmatpush1.bf16.xpose.msra.mxu0 0
      %464 = vmatprep.subr.bf16.mxu0 0
      %465 = vmatpush1.bf16.xpose.msra.mxu0 0
      %466 = vmatprep.subr.bf16.mxu0 0
      %467 = vmatpush1.bf16.xpose.msra.mxu0 0
      %468 = vmatprep.subr.bf16.mxu0 0
      %469 = vmatpush1.bf16.xpose.msra.mxu0 0
      %470 = vmatprep.subr.bf16.mxu0 0
      %471 = vmatpush1.bf16.xpose.msra.mxu0 0
      %472 = vmatprep.subr.bf16.mxu0 0
      %473 = vmatpush1.bf16.xpose.msra.mxu0 0
      %474 = vmatprep.subr.bf16.mxu0 0
      %475 = vmatpush1.bf16.xpose.msra.mxu0 0
      %476 = vmatprep.subr.bf16.mxu0 0
      %477 = vmatpush1.bf16.xpose.msra.mxu0 0
      %478 = vmatprep.subr.bf16.mxu0 0
      %479 = vmatpush1.bf16.xpose.msra.mxu0 0
      %480 = vmatprep.subr.bf16.mxu0 0
      %481 = vmatpush1.bf16.xpose.msra.mxu0 0
      %482 = vmatprep.subr.bf16.mxu0 0
      %483 = vmatpush1.bf16.xpose.msra.mxu0 0
      %484 = vmatprep.subr.bf16.mxu0 0
      %485 = vmatpush1.bf16.xpose.msra.mxu0 0
      %486 = vmatprep.subr.bf16.mxu0 0
      %487 = vmatpush1.bf16.xpose.msra.mxu0 0
      %488 = vmatprep.subr.bf16.mxu0 0
      %489 = vmatpush1.bf16.xpose.msra.mxu0 0
      %490 = vmatprep.mubr.bf16.mxu0 0
      %491 = vmatmul.mubr.bf16.gmra.mrb[0].mxu0 %v456
      %v492 = vpop.f32.mrb[0].mxu0
      %v493 = vadd.f32 0.0, %v492
      %v494 = vpop.f32.mrb[0].mxu0
      %v495 = vpop.f32.mrb[0].mxu0
      %v496 = vpop.f32.mrb[0].mxu0
      %497 = vdwg.mxu0
      %v500 = vunpack.c.l.b16 %v195
      %v501 = vunpack.c.l.b16 %v196
      %v502 = vpack.c.b16 %v501, %v500
      %v504 = vshrl.u32 %v502, 16
      %v506 = vshll.u32 %v502, 16
      %v508 = vrot.slane %v506, 1
      %v509 = vor.u32 %v504, %v508
      %v511 = vsel %vm228, %v509, 0
      %513 = vmatprep.subr.bf16.mxu0 0
      %514 = vmatpush1.bf16.xpose.msra.mxu0 %v233
      %515 = vmatprep.subr.bf16.mxu0 0
      %516 = vmatpush1.bf16.xpose.msra.mxu0 %v236
      %517 = vmatprep.subr.bf16.mxu0 0
      %518 = vmatpush1.bf16.xpose.msra.mxu0 0
      %519 = vmatprep.subr.bf16.mxu0 0
      %520 = vmatpush1.bf16.xpose.msra.mxu0 0
      %521 = vmatprep.subr.bf16.mxu0 0
      %522 = vmatpush1.bf16.xpose.msra.mxu0 0
      %523 = vmatprep.subr.bf16.mxu0 0
      %524 = vmatpush1.bf16.xpose.msra.mxu0 0
      %525 = vmatprep.subr.bf16.mxu0 0
      %526 = vmatpush1.bf16.xpose.msra.mxu0 0
      %527 = vmatprep.subr.bf16.mxu0 0
      %528 = vmatpush1.bf16.xpose.msra.mxu0 0
      %529 = vmatprep.subr.bf16.mxu0 0
      %530 = vmatpush1.bf16.xpose.msra.mxu0 0
      %531 = vmatprep.subr.bf16.mxu0 0
      %532 = vmatpush1.bf16.xpose.msra.mxu0 0
      %533 = vmatprep.subr.bf16.mxu0 0
      %534 = vmatpush1.bf16.xpose.msra.mxu0 0
      %535 = vmatprep.subr.bf16.mxu0 0
      %536 = vmatpush1.bf16.xpose.msra.mxu0 0
      %537 = vmatprep.subr.bf16.mxu0 0
      %538 = vmatpush1.bf16.xpose.msra.mxu0 0
      %539 = vmatprep.subr.bf16.mxu0 0
      %540 = vmatpush1.bf16.xpose.msra.mxu0 0
      %541 = vmatprep.subr.bf16.mxu0 0
      %542 = vmatpush1.bf16.xpose.msra.mxu0 0
      %543 = vmatprep.subr.bf16.mxu0 0
      %544 = vmatpush1.bf16.xpose.msra.mxu0 0
      %545 = vmatprep.mubr.bf16.mxu0 0
      %546 = vmatmul.mubr.bf16.gmra.mrb[0].mxu0 %v511
      %v547 = vpop.f32.mrb[0].mxu0
      %v548 = vadd.f32 0.0, %v547
      %v549 = vpop.f32.mrb[0].mxu0
      %v550 = vpop.f32.mrb[0].mxu0
      %v551 = vpop.f32.mrb[0].mxu0
      %552 = vdwg.mxu0
      %v555 = vunpack.c.l.b16 %v197
      %v556 = vunpack.c.l.b16 %v198
      %v557 = vpack.c.b16 %v556, %v555
      %v559 = vshrl.u32 %v557, 16
      %v561 = vshll.u32 %v557, 16
      %v563 = vrot.slane %v561, 1
      %v564 = vor.u32 %v559, %v563
      %v566 = vsel %vm228, %v564, 0
      %568 = vmatprep.subr.bf16.mxu0 0
      %569 = vmatpush1.bf16.xpose.msra.mxu0 %v233
      %570 = vmatprep.subr.bf16.mxu0 0
      %571 = vmatpush1.bf16.xpose.msra.mxu0 %v236
      %572 = vmatprep.subr.bf16.mxu0 0
      %573 = vmatpush1.bf16.xpose.msra.mxu0 0
      %574 = vmatprep.subr.bf16.mxu0 0
      %575 = vmatpush1.bf16.xpose.msra.mxu0 0
      %576 = vmatprep.subr.bf16.mxu0 0
      %577 = vmatpush1.bf16.xpose.msra.mxu0 0
      %578 = vmatprep.subr.bf16.mxu0 0
      %579 = vmatpush1.bf16.xpose.msra.mxu0 0
      %580 = vmatprep.subr.bf16.mxu0 0
      %581 = vmatpush1.bf16.xpose.msra.mxu0 0
      %582 = vmatprep.subr.bf16.mxu0 0
      %583 = vmatpush1.bf16.xpose.msra.mxu0 0
      %584 = vmatprep.subr.bf16.mxu0 0
      %585 = vmatpush1.bf16.xpose.msra.mxu0 0
      %586 = vmatprep.subr.bf16.mxu0 0
      %587 = vmatpush1.bf16.xpose.msra.mxu0 0
      %588 = vmatprep.subr.bf16.mxu0 0
      %589 = vmatpush1.bf16.xpose.msra.mxu0 0
      %590 = vmatprep.subr.bf16.mxu0 0
      %591 = vmatpush1.bf16.xpose.msra.mxu0 0
      %592 = vmatprep.subr.bf16.mxu0 0
      %593 = vmatpush1.bf16.xpose.msra.mxu0 0
      %594 = vmatprep.subr.bf16.mxu0 0
      %595 = vmatpush1.bf16.xpose.msra.mxu0 0
      %596 = vmatprep.subr.bf16.mxu0 0
      %597 = vmatpush1.bf16.xpose.msra.mxu0 0
      %598 = vmatprep.subr.bf16.mxu0 0
      %599 = vmatpush1.bf16.xpose.msra.mxu0 0
      %600 = vmatprep.mubr.bf16.mxu0 0
      %601 = vmatmul.mubr.bf16.gmra.mrb[0].mxu0 %v566
      %v602 = vpop.f32.mrb[0].mxu0
      %v603 = vadd.f32 0.0, %v602
      %v604 = vpop.f32.mrb[0].mxu0
      %v605 = vpop.f32.mrb[0].mxu0
      %v606 = vpop.f32.mrb[0].mxu0
      %607 = vdwg.mxu0
      %v610 = vunpack.c.l.b16 %v199
      %v611 = vunpack.c.l.b16 %v200
      %v612 = vpack.c.b16 %v611, %v610
      %v614 = vshrl.u32 %v612, 16
      %v616 = vshll.u32 %v612, 16
      %v618 = vrot.slane %v616, 1
      %v619 = vor.u32 %v614, %v618
      %v621 = vsel %vm228, %v619, 0
      %623 = vmatprep.subr.bf16.mxu0 0
      %624 = vmatpush1.bf16.xpose.msra.mxu0 %v233
      %625 = vmatprep.subr.bf16.mxu0 0
      %626 = vmatpush1.bf16.xpose.msra.mxu0 %v236
      %627 = vmatprep.subr.bf16.mxu0 0
      %628 = vmatpush1.bf16.xpose.msra.mxu0 0
      %629 = vmatprep.subr.bf16.mxu0 0
      %630 = vmatpush1.bf16.xpose.msra.mxu0 0
      %631 = vmatprep.subr.bf16.mxu0 0
      %632 = vmatpush1.bf16.xpose.msra.mxu0 0
      %633 = vmatprep.subr.bf16.mxu0 0
      %634 = vmatpush1.bf16.xpose.msra.mxu0 0
      %635 = vmatprep.subr.bf16.mxu0 0
      %636 = vmatpush1.bf16.xpose.msra.mxu0 0
      %637 = vmatprep.subr.bf16.mxu0 0
      %638 = vmatpush1.bf16.xpose.msra.mxu0 0
      %639 = vmatprep.subr.bf16.mxu0 0
      %640 = vmatpush1.bf16.xpose.msra.mxu0 0
      %641 = vmatprep.subr.bf16.mxu0 0
      %642 = vmatpush1.bf16.xpose.msra.mxu0 0
      %643 = vmatprep.subr.bf16.mxu0 0
      %644 = vmatpush1.bf16.xpose.msra.mxu0 0
      %645 = vmatprep.subr.bf16.mxu0 0
      %646 = vmatpush1.bf16.xpose.msra.mxu0 0
      %647 = vmatprep.subr.bf16.mxu0 0
      %648 = vmatpush1.bf16.xpose.msra.mxu0 0
      %649 = vmatprep.subr.bf16.mxu0 0
      %650 = vmatpush1.bf16.xpose.msra.mxu0 0
      %651 = vmatprep.subr.bf16.mxu0 0
      %652 = vmatpush1.bf16.xpose.msra.mxu0 0
      %653 = vmatprep.subr.bf16.mxu0 0
      %654 = vmatpush1.bf16.xpose.msra.mxu0 0
      %655 = vmatprep.mubr.bf16.mxu0 0
      %656 = vmatmul.mubr.bf16.gmra.mrb[0].mxu0 %v621
      %v657 = vpop.f32.mrb[0].mxu0
      %v658 = vadd.f32 0.0, %v657
      %v659 = vpop.f32.mrb[0].mxu0
      %v660 = vpop.f32.mrb[0].mxu0
      %v661 = vpop.f32.mrb[0].mxu0
      %662 = vdwg.mxu0
      %v667 = vunpack.c.l.b16 %v181
      %v668 = vunpack.c.l.b16 %v182
      %v669 = vunpack.c.l.b16 %v183
      %v670 = vunpack.c.l.b16 %v184
      %v671 = vpack.c.b16 %v668, %v667
      %v672 = vpack.c.b16 %v670, %v669
      %v674 = vsel %vm228, %v173, 0
      %v677 = vsel %vm228, %v671, 0
      %v680 = vsel %vm228, %v672, 0
      %682 = vmatprep.subr.bf16.mxu0 0
      %683 = vmatpush1.bf16.xpose.msra.mxu0 %v677
      %684 = vmatprep.subr.bf16.mxu0 0
      %685 = vmatpush1.bf16.xpose.msra.mxu0 %v680
      %686 = vmatprep.subr.bf16.mxu0 0
      %687 = vmatpush1.bf16.xpose.msra.mxu0 0
      %688 = vmatprep.subr.bf16.mxu0 0
      %689 = vmatpush1.bf16.xpose.msra.mxu0 0
      %690 = vmatprep.subr.bf16.mxu0 0
      %691 = vmatpush1.bf16.xpose.msra.mxu0 0
      %692 = vmatprep.subr.bf16.mxu0 0
      %693 = vmatpush1.bf16.xpose.msra.mxu0 0
      %694 = vmatprep.subr.bf16.mxu0 0
      %695 = vmatpush1.bf16.xpose.msra.mxu0 0
      %696 = vmatprep.subr.bf16.mxu0 0
      %697 = vmatpush1.bf16.xpose.msra.mxu0 0
      %698 = vmatprep.subr.bf16.mxu0 0
      %699 = vmatpush1.bf16.xpose.msra.mxu0 0
      %700 = vmatprep.subr.bf16.mxu0 0
      %701 = vmatpush1.bf16.xpose.msra.mxu0 0
      %702 = vmatprep.subr.bf16.mxu0 0
      %703 = vmatpush1.bf16.xpose.msra.mxu0 0
      %704 = vmatprep.subr.bf16.mxu0 0
      %705 = vmatpush1.bf16.xpose.msra.mxu0 0
      %706 = vmatprep.subr.bf16.mxu0 0
      %707 = vmatpush1.bf16.xpose.msra.mxu0 0
      %708 = vmatprep.subr.bf16.mxu0 0
      %709 = vmatpush1.bf16.xpose.msra.mxu0 0
      %710 = vmatprep.subr.bf16.mxu0 0
      %711 = vmatpush1.bf16.xpose.msra.mxu0 0
      %712 = vmatprep.subr.bf16.mxu0 0
      %713 = vmatpush1.bf16.xpose.msra.mxu0 0
      %714 = vmatprep.mubr.bf16.mxu0 0
      %715 = vmatmul.mubr.bf16.gmra.mrb[0].mxu0 %v674
      %v716 = vpop.f32.mrb[0].mxu0
      %v717 = vadd.f32 %v273, %v716
      %v718 = vpop.f32.mrb[0].mxu0
      %v719 = vpop.f32.mrb[0].mxu0
      %v720 = vpop.f32.mrb[0].mxu0
      %721 = vdwg.mxu0
      %v723 = vsel %vm228, %v174, 0
      %725 = vmatprep.subr.bf16.mxu0 0
      %726 = vmatpush1.bf16.xpose.msra.mxu0 %v677
      %727 = vmatprep.subr.bf16.mxu0 0
      %728 = vmatpush1.bf16.xpose.msra.mxu0 %v680
      %729 = vmatprep.subr.bf16.mxu0 0
      %730 = vmatpush1.bf16.xpose.msra.mxu0 0
      %731 = vmatprep.subr.bf16.mxu0 0
      %732 = vmatpush1.bf16.xpose.msra.mxu0 0
      %733 = vmatprep.subr.bf16.mxu0 0
      %734 = vmatpush1.bf16.xpose.msra.mxu0 0
      %735 = vmatprep.subr.bf16.mxu0 0
      %736 = vmatpush1.bf16.xpose.msra.mxu0 0
      %737 = vmatprep.subr.bf16.mxu0 0
      %738 = vmatpush1.bf16.xpose.msra.mxu0 0
      %739 = vmatprep.subr.bf16.mxu0 0
      %740 = vmatpush1.bf16.xpose.msra.mxu0 0
      %741 = vmatprep.subr.bf16.mxu0 0
      %742 = vmatpush1.bf16.xpose.msra.mxu0 0
      %743 = vmatprep.subr.bf16.mxu0 0
      %744 = vmatpush1.bf16.xpose.msra.mxu0 0
      %745 = vmatprep.subr.bf16.mxu0 0
      %746 = vmatpush1.bf16.xpose.msra.mxu0 0
      %747 = vmatprep.subr.bf16.mxu0 0
      %748 = vmatpush1.bf16.xpose.msra.mxu0 0
      %749 = vmatprep.subr.bf16.mxu0 0
      %750 = vmatpush1.bf16.xpose.msra.mxu0 0
      %751 = vmatprep.subr.bf16.mxu0 0
      %752 = vmatpush1.bf16.xpose.msra.mxu0 0
      %753 = vmatprep.subr.bf16.mxu0 0
      %754 = vmatpush1.bf16.xpose.msra.mxu0 0
      %755 = vmatprep.subr.bf16.mxu0 0
      %756 = vmatpush1.bf16.xpose.msra.mxu0 0
      %757 = vmatprep.mubr.bf16.mxu0 0
      %758 = vmatmul.mubr.bf16.gmra.mrb[0].mxu0 %v723
      %v759 = vpop.f32.mrb[0].mxu0
      %v760 = vadd.f32 %v328, %v759
      %v761 = vpop.f32.mrb[0].mxu0
      %v762 = vpop.f32.mrb[0].mxu0
      %v763 = vpop.f32.mrb[0].mxu0
      %764 = vdwg.mxu0
      %v766 = vsel %vm228, %v175, 0
      %768 = vmatprep.subr.bf16.mxu0 0
      %769 = vmatpush1.bf16.xpose.msra.mxu0 %v677
      %770 = vmatprep.subr.bf16.mxu0 0
      %771 = vmatpush1.bf16.xpose.msra.mxu0 %v680
      %772 = vmatprep.subr.bf16.mxu0 0
      %773 = vmatpush1.bf16.xpose.msra.mxu0 0
      %774 = vmatprep.subr.bf16.mxu0 0
      %775 = vmatpush1.bf16.xpose.msra.mxu0 0
      %776 = vmatprep.subr.bf16.mxu0 0
      %777 = vmatpush1.bf16.xpose.msra.mxu0 0
      %778 = vmatprep.subr.bf16.mxu0 0
      %779 = vmatpush1.bf16.xpose.msra.mxu0 0
      %780 = vmatprep.subr.bf16.mxu0 0
      %781 = vmatpush1.bf16.xpose.msra.mxu0 0
      %782 = vmatprep.subr.bf16.mxu0 0
      %783 = vmatpush1.bf16.xpose.msra.mxu0 0
      %784 = vmatprep.subr.bf16.mxu0 0
      %785 = vmatpush1.bf16.xpose.msra.mxu0 0
      %786 = vmatprep.subr.bf16.mxu0 0
      %787 = vmatpush1.bf16.xpose.msra.mxu0 0
      %788 = vmatprep.subr.bf16.mxu0 0
      %789 = vmatpush1.bf16.xpose.msra.mxu0 0
      %790 = vmatprep.subr.bf16.mxu0 0
      %791 = vmatpush1.bf16.xpose.msra.mxu0 0
      %792 = vmatprep.subr.bf16.mxu0 0
      %793 = vmatpush1.bf16.xpose.msra.mxu0 0
      %794 = vmatprep.subr.bf16.mxu0 0
      %795 = vmatpush1.bf16.xpose.msra.mxu0 0
      %796 = vmatprep.subr.bf16.mxu0 0
      %797 = vmatpush1.bf16.xpose.msra.mxu0 0
      %798 = vmatprep.subr.bf16.mxu0 0
      %799 = vmatpush1.bf16.xpose.msra.mxu0 0
      %800 = vmatprep.mubr.bf16.mxu0 0
      %801 = vmatmul.mubr.bf16.gmra.mrb[0].mxu0 %v766
      %v802 = vpop.f32.mrb[0].mxu0
      %v803 = vadd.f32 %v383, %v802
      %v804 = vpop.f32.mrb[0].mxu0
      %v805 = vpop.f32.mrb[0].mxu0
      %v806 = vpop.f32.mrb[0].mxu0
      %807 = vdwg.mxu0
      %v809 = vsel %vm228, %v176, 0
      %811 = vmatprep.subr.bf16.mxu0 0
      %812 = vmatpush1.bf16.xpose.msra.mxu0 %v677
      %813 = vmatprep.subr.bf16.mxu0 0
      %814 = vmatpush1.bf16.xpose.msra.mxu0 %v680
      %815 = vmatprep.subr.bf16.mxu0 0
      %816 = vmatpush1.bf16.xpose.msra.mxu0 0
      %817 = vmatprep.subr.bf16.mxu0 0
      %818 = vmatpush1.bf16.xpose.msra.mxu0 0
      %819 = vmatprep.subr.bf16.mxu0 0
      %820 = vmatpush1.bf16.xpose.msra.mxu0 0
      %821 = vmatprep.subr.bf16.mxu0 0
      %822 = vmatpush1.bf16.xpose.msra.mxu0 0
      %823 = vmatprep.subr.bf16.mxu0 0
      %824 = vmatpush1.bf16.xpose.msra.mxu0 0
      %825 = vmatprep.subr.bf16.mxu0 0
      %826 = vmatpush1.bf16.xpose.msra.mxu0 0
      %827 = vmatprep.subr.bf16.mxu0 0
      %828 = vmatpush1.bf16.xpose.msra.mxu0 0
      %829 = vmatprep.subr.bf16.mxu0 0
      %830 = vmatpush1.bf16.xpose.msra.mxu0 0
      %831 = vmatprep.subr.bf16.mxu0 0
      %832 = vmatpush1.bf16.xpose.msra.mxu0 0
      %833 = vmatprep.subr.bf16.mxu0 0
      %834 = vmatpush1.bf16.xpose.msra.mxu0 0
      %835 = vmatprep.subr.bf16.mxu0 0
      %836 = vmatpush1.bf16.xpose.msra.mxu0 0
      %837 = vmatprep.subr.bf16.mxu0 0
      %838 = vmatpush1.bf16.xpose.msra.mxu0 0
      %839 = vmatprep.subr.bf16.mxu0 0
      %840 = vmatpush1.bf16.xpose.msra.mxu0 0
      %841 = vmatprep.subr.bf16.mxu0 0
      %842 = vmatpush1.bf16.xpose.msra.mxu0 0
      %843 = vmatprep.mubr.bf16.mxu0 0
      %844 = vmatmul.mubr.bf16.gmra.mrb[0].mxu0 %v809
      %v845 = vpop.f32.mrb[0].mxu0
      %v846 = vadd.f32 %v438, %v845
      %v847 = vpop.f32.mrb[0].mxu0
      %v848 = vpop.f32.mrb[0].mxu0
      %v849 = vpop.f32.mrb[0].mxu0
      %850 = vdwg.mxu0
      %v852 = vsel %vm228, %v177, 0
      %854 = vmatprep.subr.bf16.mxu0 0
      %855 = vmatpush1.bf16.xpose.msra.mxu0 %v677
      %856 = vmatprep.subr.bf16.mxu0 0
      %857 = vmatpush1.bf16.xpose.msra.mxu0 %v680
      %858 = vmatprep.subr.bf16.mxu0 0
      %859 = vmatpush1.bf16.xpose.msra.mxu0 0
      %860 = vmatprep.subr.bf16.mxu0 0
      %861 = vmatpush1.bf16.xpose.msra.mxu0 0
      %862 = vmatprep.subr.bf16.mxu0 0
      %863 = vmatpush1.bf16.xpose.msra.mxu0 0
      %864 = vmatprep.subr.bf16.mxu0 0
      %865 = vmatpush1.bf16.xpose.msra.mxu0 0
      %866 = vmatprep.subr.bf16.mxu0 0
      %867 = vmatpush1.bf16.xpose.msra.mxu0 0
      %868 = vmatprep.subr.bf16.mxu0 0
      %869 = vmatpush1.bf16.xpose.msra.mxu0 0
      %870 = vmatprep.subr.bf16.mxu0 0
      %871 = vmatpush1.bf16.xpose.msra.mxu0 0
      %872 = vmatprep.subr.bf16.mxu0 0
      %873 = vmatpush1.bf16.xpose.msra.mxu0 0
      %874 = vmatprep.subr.bf16.mxu0 0
      %875 = vmatpush1.bf16.xpose.msra.mxu0 0
      %876 = vmatprep.subr.bf16.mxu0 0
      %877 = vmatpush1.bf16.xpose.msra.mxu0 0
      %878 = vmatprep.subr.bf16.mxu0 0
      %879 = vmatpush1.bf16.xpose.msra.mxu0 0
      %880 = vmatprep.subr.bf16.mxu0 0
      %881 = vmatpush1.bf16.xpose.msra.mxu0 0
      %882 = vmatprep.subr.bf16.mxu0 0
      %883 = vmatpush1.bf16.xpose.msra.mxu0 0
      %884 = vmatprep.subr.bf16.mxu0 0
      %885 = vmatpush1.bf16.xpose.msra.mxu0 0
      %886 = vmatprep.mubr.bf16.mxu0 0
      %887 = vmatmul.mubr.bf16.gmra.mrb[0].mxu0 %v852
      %v888 = vpop.f32.mrb[0].mxu0
      %v889 = vadd.f32 %v493, %v888
      %v890 = vpop.f32.mrb[0].mxu0
      %v891 = vpop.f32.mrb[0].mxu0
      %v892 = vpop.f32.mrb[0].mxu0
      %893 = vdwg.mxu0
      %v895 = vsel %vm228, %v178, 0
      %897 = vmatprep.subr.bf16.mxu0 0
      %898 = vmatpush1.bf16.xpose.msra.mxu0 %v677
      %899 = vmatprep.subr.bf16.mxu0 0
      %900 = vmatpush1.bf16.xpose.msra.mxu0 %v680
      %901 = vmatprep.subr.bf16.mxu0 0
      %902 = vmatpush1.bf16.xpose.msra.mxu0 0
      %903 = vmatprep.subr.bf16.mxu0 0
      %904 = vmatpush1.bf16.xpose.msra.mxu0 0
      %905 = vmatprep.subr.bf16.mxu0 0
      %906 = vmatpush1.bf16.xpose.msra.mxu0 0
      %907 = vmatprep.subr.bf16.mxu0 0
      %908 = vmatpush1.bf16.xpose.msra.mxu0 0
      %909 = vmatprep.subr.bf16.mxu0 0
      %910 = vmatpush1.bf16.xpose.msra.mxu0 0
      %911 = vmatprep.subr.bf16.mxu0 0
      %912 = vmatpush1.bf16.xpose.msra.mxu0 0
      %913 = vmatprep.subr.bf16.mxu0 0
      %914 = vmatpush1.bf16.xpose.msra.mxu0 0
      %915 = vmatprep.subr.bf16.mxu0 0
      %916 = vmatpush1.bf16.xpose.msra.mxu0 0
      %917 = vmatprep.subr.bf16.mxu0 0
      %918 = vmatpush1.bf16.xpose.msra.mxu0 0
      %919 = vmatprep.subr.bf16.mxu0 0
      %920 = vmatpush1.bf16.xpose.msra.mxu0 0
      %921 = vmatprep.subr.bf16.mxu0 0
      %922 = vmatpush1.bf16.xpose.msra.mxu0 0
      %923 = vmatprep.subr.bf16.mxu0 0
      %924 = vmatpush1.bf16.xpose.msra.mxu0 0
      %925 = vmatprep.subr.bf16.mxu0 0
      %926 = vmatpush1.bf16.xpose.msra.mxu0 0
      %927 = vmatprep.subr.bf16.mxu0 0
      %928 = vmatpush1.bf16.xpose.msra.mxu0 0
      %929 = vmatprep.mubr.bf16.mxu0 0
      %930 = vmatmul.mubr.bf16.gmra.mrb[0].mxu0 %v895
      %v931 = vpop.f32.mrb[0].mxu0
      %v932 = vadd.f32 %v548, %v931
      %v933 = vpop.f32.mrb[0].mxu0
      %v934 = vpop.f32.mrb[0].mxu0
      %v935 = vpop.f32.mrb[0].mxu0
      %936 = vdwg.mxu0
      %v938 = vsel %vm228, %v179, 0
      %940 = vmatprep.subr.bf16.mxu0 0
      %941 = vmatpush1.bf16.xpose.msra.mxu0 %v677
      %942 = vmatprep.subr.bf16.mxu0 0
      %943 = vmatpush1.bf16.xpose.msra.mxu0 %v680
      %944 = vmatprep.subr.bf16.mxu0 0
      %945 = vmatpush1.bf16.xpose.msra.mxu0 0
      %946 = vmatprep.subr.bf16.mxu0 0
      %947 = vmatpush1.bf16.xpose.msra.mxu0 0
      %948 = vmatprep.subr.bf16.mxu0 0
      %949 = vmatpush1.bf16.xpose.msra.mxu0 0
      %950 = vmatprep.subr.bf16.mxu0 0
      %951 = vmatpush1.bf16.xpose.msra.mxu0 0
      %952 = vmatprep.subr.bf16.mxu0 0
      %953 = vmatpush1.bf16.xpose.msra.mxu0 0
      %954 = vmatprep.subr.bf16.mxu0 0
      %955 = vmatpush1.bf16.xpose.msra.mxu0 0
      %956 = vmatprep.subr.bf16.mxu0 0
      %957 = vmatpush1.bf16.xpose.msra.mxu0 0
      %958 = vmatprep.subr.bf16.mxu0 0
      %959 = vmatpush1.bf16.xpose.msra.mxu0 0
      %960 = vmatprep.subr.bf16.mxu0 0
      %961 = vmatpush1.bf16.xpose.msra.mxu0 0
      %962 = vmatprep.subr.bf16.mxu0 0
      %963 = vmatpush1.bf16.xpose.msra.mxu0 0
      %964 = vmatprep.subr.bf16.mxu0 0
      %965 = vmatpush1.bf16.xpose.msra.mxu0 0
      %966 = vmatprep.subr.bf16.mxu0 0
      %967 = vmatpush1.bf16.xpose.msra.mxu0 0
      %968 = vmatprep.subr.bf16.mxu0 0
      %969 = vmatpush1.bf16.xpose.msra.mxu0 0
      %970 = vmatprep.subr.bf16.mxu0 0
      %971 = vmatpush1.bf16.xpose.msra.mxu0 0
      %972 = vmatprep.mubr.bf16.mxu0 0
      %973 = vmatmul.mubr.bf16.gmra.mrb[0].mxu0 %v938
      %v974 = vpop.f32.mrb[0].mxu0
      %v975 = vadd.f32 %v603, %v974
      %v976 = vpop.f32.mrb[0].mxu0
      %v977 = vpop.f32.mrb[0].mxu0
      %v978 = vpop.f32.mrb[0].mxu0
      %979 = vdwg.mxu0
      %v981 = vsel %vm228, %v180, 0
      %983 = vmatprep.subr.bf16.mxu0 0
      %984 = vmatpush1.bf16.xpose.msra.mxu0 %v677
      %985 = vmatprep.subr.bf16.mxu0 0
      %986 = vmatpush1.bf16.xpose.msra.mxu0 %v680
      %987 = vmatprep.subr.bf16.mxu0 0
      %988 = vmatpush1.bf16.xpose.msra.mxu0 0
      %989 = vmatprep.subr.bf16.mxu0 0
      %990 = vmatpush1.bf16.xpose.msra.mxu0 0
      %991 = vmatprep.subr.bf16.mxu0 0
      %992 = vmatpush1.bf16.xpose.msra.mxu0 0
      %993 = vmatprep.subr.bf16.mxu0 0
      %994 = vmatpush1.bf16.xpose.msra.mxu0 0
      %995 = vmatprep.subr.bf16.mxu0 0
      %996 = vmatpush1.bf16.xpose.msra.mxu0 0
      %997 = vmatprep.subr.bf16.mxu0 0
      %998 = vmatpush1.bf16.xpose.msra.mxu0 0
      %999 = vmatprep.subr.bf16.mxu0 0
      %1000 = vmatpush1.bf16.xpose.msra.mxu0 0
      %1001 = vmatprep.subr.bf16.mxu0 0
      %1002 = vmatpush1.bf16.xpose.msra.mxu0 0
      %1003 = vmatprep.subr.bf16.mxu0 0
      %1004 = vmatpush1.bf16.xpose.msra.mxu0 0
      %1005 = vmatprep.subr.bf16.mxu0 0
      %1006 = vmatpush1.bf16.xpose.msra.mxu0 0
      %1007 = vmatprep.subr.bf16.mxu0 0
      %1008 = vmatpush1.bf16.xpose.msra.mxu0 0
      %1009 = vmatprep.subr.bf16.mxu0 0
      %1010 = vmatpush1.bf16.xpose.msra.mxu0 0
      %1011 = vmatprep.subr.bf16.mxu0 0
      %1012 = vmatpush1.bf16.xpose.msra.mxu0 0
      %1013 = vmatprep.subr.bf16.mxu0 0
      %1014 = vmatpush1.bf16.xpose.msra.mxu0 0
      %1015 = vmatprep.mubr.bf16.mxu0 0
      %1016 = vmatmul.mubr.bf16.gmra.mrb[0].mxu0 %v981
      %v1017 = vpop.f32.mrb[0].mxu0
      %v1018 = vadd.f32 %v658, %v1017
      %v1019 = vpop.f32.mrb[0].mxu0
      %v1020 = vpop.f32.mrb[0].mxu0
      %v1021 = vpop.f32.mrb[0].mxu0
      %1022 = vdwg.mxu0
      %s1023 = scalar_lea.vmem %s165, 8
      %v1024 = vld [vmem:[%s1023] sm:$0xf]
      %v1025 = vld [vmem:[%s1023 + $0x8] sm:$0xf]
      %v1026 = vld [vmem:[%s1023 + $0x10] sm:$0xf]
      %v1027 = vld [vmem:[%s1023 + $0x18] sm:$0xf]
      %v1028 = vld [vmem:[%s1023 + $0x20] sm:$0xf]
      %v1029 = vld [vmem:[%s1023 + $0x28] sm:$0xf]
      %v1030 = vld [vmem:[%s1023 + $0x30] sm:$0xf]
      %v1031 = vld [vmem:[%s1023 + $0x38] sm:$0xf]
      %s1032 = scalar_lea.vmem %s1, 32
      %v1033 = vld [vmem:[%s1032] sm:$0xf]
      %v1034 = vld [vmem:[%s1032 + $0x4] sm:$0xf]
      %v1035 = vld [vmem:[%s1032 + $0x8] sm:$0xf]
      %v1036 = vld [vmem:[%s1032 + $0xc] sm:$0xf]
      %v1041 = vunpack.c.l.b16 %v1033
      %v1042 = vunpack.c.l.b16 %v1034
      %v1043 = vunpack.c.l.b16 %v1035
      %v1044 = vunpack.c.l.b16 %v1036
      %v1045 = vpack.c.b16 %v1042, %v1041
      %v1046 = vpack.c.b16 %v1044, %v1043
      %v1048 = vsel %vm228, %v1024, 0
      %v1051 = vsel %vm228, %v1045, 0
      %v1054 = vsel %vm228, %v1046, 0
      %1056 = vmatprep.subr.bf16.mxu0 0
      %1057 = vmatpush1.bf16.xpose.msra.mxu0 %v1051
      %1058 = vmatprep.subr.bf16.mxu0 0
      %1059 = vmatpush1.bf16.xpose.msra.mxu0 %v1054
      %1060 = vmatprep.subr.bf16.mxu0 0
      %1061 = vmatpush1.bf16.xpose.msra.mxu0 0
      %1062 = vmatprep.subr.bf16.mxu0 0
      %1063 = vmatpush1.bf16.xpose.msra.mxu0 0
      %1064 = vmatprep.subr.bf16.mxu0 0
      %1065 = vmatpush1.bf16.xpose.msra.mxu0 0
      %1066 = vmatprep.subr.bf16.mxu0 0
      %1067 = vmatpush1.bf16.xpose.msra.mxu0 0
      %1068 = vmatprep.subr.bf16.mxu0 0
      %1069 = vmatpush1.bf16.xpose.msra.mxu0 0
      %1070 = vmatprep.subr.bf16.mxu0 0
      %1071 = vmatpush1.bf16.xpose.msra.mxu0 0
      %1072 = vmatprep.subr.bf16.mxu0 0
      %1073 = vmatpush1.bf16.xpose.msra.mxu0 0
      %1074 = vmatprep.subr.bf16.mxu0 0
      %1075 = vmatpush1.bf16.xpose.msra.mxu0 0
      %1076 = vmatprep.subr.bf16.mxu0 0
      %1077 = vmatpush1.bf16.xpose.msra.mxu0 0
      %1078 = vmatprep.subr.bf16.mxu0 0
      %1079 = vmatpush1.bf16.xpose.msra.mxu0 0
      %1080 = vmatprep.subr.bf16.mxu0 0
      %1081 = vmatpush1.bf16.xpose.msra.mxu0 0
      %1082 = vmatprep.subr.bf16.mxu0 0
      %1083 = vmatpush1.bf16.xpose.msra.mxu0 0
      %1084 = vmatprep.subr.bf16.mxu0 0
      %1085 = vmatpush1.bf16.xpose.msra.mxu0 0
      %1086 = vmatprep.subr.bf16.mxu0 0
      %1087 = vmatpush1.bf16.xpose.msra.mxu0 0
      %1088 = vmatprep.mubr.bf16.mxu0 0
      %1089 = vmatmul.mubr.bf16.gmra.mrb[0].mxu0 %v1048
      %v1090 = vpop.f32.mrb[0].mxu0
      %v1091 = vadd.f32 0.0, %v1090
      %v1092 = vpop.f32.mrb[0].mxu0
      %v1093 = vpop.f32.mrb[0].mxu0
      %v1094 = vpop.f32.mrb[0].mxu0
      %1095 = vdwg.mxu0
      %v1097 = vsel %vm228, %v1025, 0
      %1099 = vmatprep.subr.bf16.mxu0 0
      %1100 = vmatpush1.bf16.xpose.msra.mxu0 %v1051
      %1101 = vmatprep.subr.bf16.mxu0 0
      %1102 = vmatpush1.bf16.xpose.msra.mxu0 %v1054
      %1103 = vmatprep.subr.bf16.mxu0 0
      %1104 = vmatpush1.bf16.xpose.msra.mxu0 0
      %1105 = vmatprep.subr.bf16.mxu0 0
      %1106 = vmatpush1.bf16.xpose.msra.mxu0 0
      %1107 = vmatprep.subr.bf16.mxu0 0
      %1108 = vmatpush1.bf16.xpose.msra.mxu0 0
      %1109 = vmatprep.subr.bf16.mxu0 0
      %1110 = vmatpush1.bf16.xpose.msra.mxu0 0
      %1111 = vmatprep.subr.bf16.mxu0 0
      %1112 = vmatpush1.bf16.xpose.msra.mxu0 0
      %1113 = vmatprep.subr.bf16.mxu0 0
      %1114 = vmatpush1.bf16.xpose.msra.mxu0 0
      %1115 = vmatprep.subr.bf16.mxu0 0
      %1116 = vmatpush1.bf16.xpose.msra.mxu0 0
      %1117 = vmatprep.subr.bf16.mxu0 0
      %1118 = vmatpush1.bf16.xpose.msra.mxu0 0
      %1119 = vmatprep.subr.bf16.mxu0 0
      %1120 = vmatpush1.bf16.xpose.msra.mxu0 0
      %1121 = vmatprep.subr.bf16.mxu0 0
      %1122 = vmatpush1.bf16.xpose.msra.mxu0 0
      %1123 = vmatprep.subr.bf16.mxu0 0
      %1124 = vmatpush1.bf16.xpose.msra.mxu0 0
      %1125 = vmatprep.subr.bf16.mxu0 0
      %1126 = vmatpush1.bf16.xpose.msra.mxu0 0
      %1127 = vmatprep.subr.bf16.mxu0 0
      %1128 = vmatpush1.bf16.xpose.msra.mxu0 0
      %1129 = vmatprep.subr.bf16.mxu0 0
      %1130 = vmatpush1.bf16.xpose.msra.mxu0 0
      %1131 = vmatprep.mubr.bf16.mxu0 0
      %1132 = vmatmul.mubr.bf16.gmra.mrb[0].mxu0 %v1097
      %v1133 = vpop.f32.mrb[0].mxu0
      %v1134 = vadd.f32 0.0, %v1133
      %v1135 = vpop.f32.mrb[0].mxu0
      %v1136 = vpop.f32.mrb[0].mxu0
      %v1137 = vpop.f32.mrb[0].mxu0
      %1138 = vdwg.mxu0
      %v1140 = vsel %vm228, %v1026, 0
      %1142 = vmatprep.subr.bf16.mxu0 0
      %1143 = vmatpush1.bf16.xpose.msra.mxu0 %v1051
      %1144 = vmatprep.subr.bf16.mxu0 0
      %1145 = vmatpush1.bf16.xpose.msra.mxu0 %v1054
      %1146 = vmatprep.subr.bf16.mxu0 0
      %1147 = vmatpush1.bf16.xpose.msra.mxu0 0
      %1148 = vmatprep.subr.bf16.mxu0 0
      %1149 = vmatpush1.bf16.xpose.msra.mxu0 0
      %1150 = vmatprep.subr.bf16.mxu0 0
      %1151 = vmatpush1.bf16.xpose.msra.mxu0 0
      %1152 = vmatprep.subr.bf16.mxu0 0
      %1153 = vmatpush1.bf16.xpose.msra.mxu0 0
      %1154 = vmatprep.subr.bf16.mxu0 0
      %1155 = vmatpush1.bf16.xpose.msra.mxu0 0
      %1156 = vmatprep.subr.bf16.mxu0 0
      %1157 = vmatpush1.bf16.xpose.msra.mxu0 0
      %1158 = vmatprep.subr.bf16.mxu0 0
      %1159 = vmatpush1.bf16.xpose.msra.mxu0 0
      %1160 = vmatprep.subr.bf16.mxu0 0
      %1161 = vmatpush1.bf16.xpose.msra.mxu0 0
      %1162 = vmatprep.subr.bf16.mxu0 0
      %1163 = vmatpush1.bf16.xpose.msra.mxu0 0
      %1164 = vmatprep.subr.bf16.mxu0 0
      %1165 = vmatpush1.bf16.xpose.msra.mxu0 0
      %1166 = vmatprep.subr.bf16.mxu0 0
      %1167 = vmatpush1.bf16.xpose.msra.mxu0 0
      %1168 = vmatprep.subr.bf16.mxu0 0
      %1169 = vmatpush1.bf16.xpose.msra.mxu0 0
      %1170 = vmatprep.subr.bf16.mxu0 0
      %1171 = vmatpush1.bf16.xpose.msra.mxu0 0
      %1172 = vmatprep.subr.bf16.mxu0 0
      %1173 = vmatpush1.bf16.xpose.msra.mxu0 0
      %1174 = vmatprep.mubr.bf16.mxu0 0
      %1175 = vmatmul.mubr.bf16.gmra.mrb[0].mxu0 %v1140
      %v1176 = vpop.f32.mrb[0].mxu0
      %v1177 = vadd.f32 0.0, %v1176
      %v1178 = vpop.f32.mrb[0].mxu0
      %v1179 = vpop.f32.mrb[0].mxu0
      %v1180 = vpop.f32.mrb[0].mxu0
      %1181 = vdwg.mxu0
      %v1183 = vsel %vm228, %v1027, 0
      %1185 = vmatprep.subr.bf16.mxu0 0
      %1186 = vmatpush1.bf16.xpose.msra.mxu0 %v1051
      %1187 = vmatprep.subr.bf16.mxu0 0
      %1188 = vmatpush1.bf16.xpose.msra.mxu0 %v1054
      %1189 = vmatprep.subr.bf16.mxu0 0
      %1190 = vmatpush1.bf16.xpose.msra.mxu0 0
      %1191 = vmatprep.subr.bf16.mxu0 0
      %1192 = vmatpush1.bf16.xpose.msra.mxu0 0
      %1193 = vmatprep.subr.bf16.mxu0 0
      %1194 = vmatpush1.bf16.xpose.msra.mxu0 0
      %1195 = vmatprep.subr.bf16.mxu0 0
      %1196 = vmatpush1.bf16.xpose.msra.mxu0 0
      %1197 = vmatprep.subr.bf16.mxu0 0
      %1198 = vmatpush1.bf16.xpose.msra.mxu0 0
      %1199 = vmatprep.subr.bf16.mxu0 0
      %1200 = vmatpush1.bf16.xpose.msra.mxu0 0
      %1201 = vmatprep.subr.bf16.mxu0 0
      %1202 = vmatpush1.bf16.xpose.msra.mxu0 0
      %1203 = vmatprep.subr.bf16.mxu0 0
      %1204 = vmatpush1.bf16.xpose.msra.mxu0 0
      %1205 = vmatprep.subr.bf16.mxu0 0
      %1206 = vmatpush1.bf16.xpose.msra.mxu0 0
      %1207 = vmatprep.subr.bf16.mxu0 0
      %1208 = vmatpush1.bf16.xpose.msra.mxu0 0
      %1209 = vmatprep.subr.bf16.mxu0 0
      %1210 = vmatpush1.bf16.xpose.msra.mxu0 0
      %1211 = vmatprep.subr.bf16.mxu0 0
      %1212 = vmatpush1.bf16.xpose.msra.mxu0 0
      %1213 = vmatprep.subr.bf16.mxu0 0
      %1214 = vmatpush1.bf16.xpose.msra.mxu0 0
      %1215 = vmatprep.subr.bf16.mxu0 0
      %1216 = vmatpush1.bf16.xpose.msra.mxu0 0
      %1217 = vmatprep.mubr.bf16.mxu0 0
      %1218 = vmatmul.mubr.bf16.gmra.mrb[0].mxu0 %v1183
      %v1219 = vpop.f32.mrb[0].mxu0
      %v1220 = vadd.f32 0.0, %v1219
      %v1221 = vpop.f32.mrb[0].mxu0
      %v1222 = vpop.f32.mrb[0].mxu0
      %v1223 = vpop.f32.mrb[0].mxu0
      %1224 = vdwg.mxu0
      %v1226 = vsel %vm228, %v1028, 0
      %1228 = vmatprep.subr.bf16.mxu0 0
      %1229 = vmatpush1.bf16.xpose.msra.mxu0 %v1051
      %1230 = vmatprep.subr.bf16.mxu0 0
      %1231 = vmatpush1.bf16.xpose.msra.mxu0 %v1054
      %1232 = vmatprep.subr.bf16.mxu0 0
      %1233 = vmatpush1.bf16.xpose.msra.mxu0 0
      %1234 = vmatprep.subr.bf16.mxu0 0
      %1235 = vmatpush1.bf16.xpose.msra.mxu0 0
      %1236 = vmatprep.subr.bf16.mxu0 0
      %1237 = vmatpush1.bf16.xpose.msra.mxu0 0
      %1238 = vmatprep.subr.bf16.mxu0 0
      %1239 = vmatpush1.bf16.xpose.msra.mxu0 0
      %1240 = vmatprep.subr.bf16.mxu0 0
      %1241 = vmatpush1.bf16.xpose.msra.mxu0 0
      %1242 = vmatprep.subr.bf16.mxu0 0
      %1243 = vmatpush1.bf16.xpose.msra.mxu0 0
      %1244 = vmatprep.subr.bf16.mxu0 0
      %1245 = vmatpush1.bf16.xpose.msra.mxu0 0
      %1246 = vmatprep.subr.bf16.mxu0 0
      %1247 = vmatpush1.bf16.xpose.msra.mxu0 0
      %1248 = vmatprep.subr.bf16.mxu0 0
      %1249 = vmatpush1.bf16.xpose.msra.mxu0 0
      %1250 = vmatprep.subr.bf16.mxu0 0
      %1251 = vmatpush1.bf16.xpose.msra.mxu0 0
      %1252 = vmatprep.subr.bf16.mxu0 0
      %1253 = vmatpush1.bf16.xpose.msra.mxu0 0
      %1254 = vmatprep.subr.bf16.mxu0 0
      %1255 = vmatpush1.bf16.xpose.msra.mxu0 0
      %1256 = vmatprep.subr.bf16.mxu0 0
      %1257 = vmatpush1.bf16.xpose.msra.mxu0 0
      %1258 = vmatprep.subr.bf16.mxu0 0
      %1259 = vmatpush1.bf16.xpose.msra.mxu0 0
      %1260 = vmatprep.mubr.bf16.mxu0 0
      %1261 = vmatmul.mubr.bf16.gmra.mrb[0].mxu0 %v1226
      %v1262 = vpop.f32.mrb[0].mxu0
      %v1263 = vadd.f32 0.0, %v1262
      %v1264 = vpop.f32.mrb[0].mxu0
      %v1265 = vpop.f32.mrb[0].mxu0
      %v1266 = vpop.f32.mrb[0].mxu0
      %1267 = vdwg.mxu0
      %v1269 = vsel %vm228, %v1029, 0
      %1271 = vmatprep.subr.bf16.mxu0 0
      %1272 = vmatpush1.bf16.xpose.msra.mxu0 %v1051
      %1273 = vmatprep.subr.bf16.mxu0 0
      %1274 = vmatpush1.bf16.xpose.msra.mxu0 %v1054
      %1275 = vmatprep.subr.bf16.mxu0 0
      %1276 = vmatpush1.bf16.xpose.msra.mxu0 0
      %1277 = vmatprep.subr.bf16.mxu0 0
      %1278 = vmatpush1.bf16.xpose.msra.mxu0 0
      %1279 = vmatprep.subr.bf16.mxu0 0
      %1280 = vmatpush1.bf16.xpose.msra.mxu0 0
      %1281 = vmatprep.subr.bf16.mxu0 0
      %1282 = vmatpush1.bf16.xpose.msra.mxu0 0
      %1283 = vmatprep.subr.bf16.mxu0 0
      %1284 = vmatpush1.bf16.xpose.msra.mxu0 0
      %1285 = vmatprep.subr.bf16.mxu0 0
      %1286 = vmatpush1.bf16.xpose.msra.mxu0 0
      %1287 = vmatprep.subr.bf16.mxu0 0
      %1288 = vmatpush1.bf16.xpose.msra.mxu0 0
      %1289 = vmatprep.subr.bf16.mxu0 0
      %1290 = vmatpush1.bf16.xpose.msra.mxu0 0
      %1291 = vmatprep.subr.bf16.mxu0 0
      %1292 = vmatpush1.bf16.xpose.msra.mxu0 0
      %1293 = vmatprep.subr.bf16.mxu0 0
      %1294 = vmatpush1.bf16.xpose.msra.mxu0 0
      %1295 = vmatprep.subr.bf16.mxu0 0
      %1296 = vmatpush1.bf16.xpose.msra.mxu0 0
      %1297 = vmatprep.subr.bf16.mxu0 0
      %1298 = vmatpush1.bf16.xpose.msra.mxu0 0
      %1299 = vmatprep.subr.bf16.mxu0 0
      %1300 = vmatpush1.bf16.xpose.msra.mxu0 0
      %1301 = vmatprep.subr.bf16.mxu0 0
      %1302 = vmatpush1.bf16.xpose.msra.mxu0 0
      %1303 = vmatprep.mubr.bf16.mxu0 0
      %1304 = vmatmul.mubr.bf16.gmra.mrb[0].mxu0 %v1269
      %v1305 = vpop.f32.mrb[0].mxu0
      %v1306 = vadd.f32 0.0, %v1305
      %v1307 = vpop.f32.mrb[0].mxu0
      %v1308 = vpop.f32.mrb[0].mxu0
      %v1309 = vpop.f32.mrb[0].mxu0
      %1310 = vdwg.mxu0
      %v1312 = vsel %vm228, %v1030, 0
      %1314 = vmatprep.subr.bf16.mxu0 0
      %1315 = vmatpush1.bf16.xpose.msra.mxu0 %v1051
      %1316 = vmatprep.subr.bf16.mxu0 0
      %1317 = vmatpush1.bf16.xpose.msra.mxu0 %v1054
      %1318 = vmatprep.subr.bf16.mxu0 0
      %1319 = vmatpush1.bf16.xpose.msra.mxu0 0
      %1320 = vmatprep.subr.bf16.mxu0 0
      %1321 = vmatpush1.bf16.xpose.msra.mxu0 0
      %1322 = vmatprep.subr.bf16.mxu0 0
      %1323 = vmatpush1.bf16.xpose.msra.mxu0 0
      %1324 = vmatprep.subr.bf16.mxu0 0
      %1325 = vmatpush1.bf16.xpose.msra.mxu0 0
      %1326 = vmatprep.subr.bf16.mxu0 0
      %1327 = vmatpush1.bf16.xpose.msra.mxu0 0
      %1328 = vmatprep.subr.bf16.mxu0 0
      %1329 = vmatpush1.bf16.xpose.msra.mxu0 0
      %1330 = vmatprep.subr.bf16.mxu0 0
      %1331 = vmatpush1.bf16.xpose.msra.mxu0 0
      %1332 = vmatprep.subr.bf16.mxu0 0
      %1333 = vmatpush1.bf16.xpose.msra.mxu0 0
      %1334 = vmatprep.subr.bf16.mxu0 0
      %1335 = vmatpush1.bf16.xpose.msra.mxu0 0
      %1336 = vmatprep.subr.bf16.mxu0 0
      %1337 = vmatpush1.bf16.xpose.msra.mxu0 0
      %1338 = vmatprep.subr.bf16.mxu0 0
      %1339 = vmatpush1.bf16.xpose.msra.mxu0 0
      %1340 = vmatprep.subr.bf16.mxu0 0
      %1341 = vmatpush1.bf16.xpose.msra.mxu0 0
      %1342 = vmatprep.subr.bf16.mxu0 0
      %1343 = vmatpush1.bf16.xpose.msra.mxu0 0
      %1344 = vmatprep.subr.bf16.mxu0 0
      %1345 = vmatpush1.bf16.xpose.msra.mxu0 0
      %1346 = vmatprep.mubr.bf16.mxu0 0
      %1347 = vmatmul.mubr.bf16.gmra.mrb[0].mxu0 %v1312
      %v1348 = vpop.f32.mrb[0].mxu0
      %v1349 = vadd.f32 0.0, %v1348
      %v1350 = vpop.f32.mrb[0].mxu0
      %v1351 = vpop.f32.mrb[0].mxu0
      %v1352 = vpop.f32.mrb[0].mxu0
      %1353 = vdwg.mxu0
      %v1355 = vsel %vm228, %v1031, 0
      %1357 = vmatprep.subr.bf16.mxu0 0
      %1358 = vmatpush1.bf16.xpose.msra.mxu0 %v1051
      %1359 = vmatprep.subr.bf16.mxu0 0
      %1360 = vmatpush1.bf16.xpose.msra.mxu0 %v1054
      %1361 = vmatprep.subr.bf16.mxu0 0
      %1362 = vmatpush1.bf16.xpose.msra.mxu0 0
      %1363 = vmatprep.subr.bf16.mxu0 0
      %1364 = vmatpush1.bf16.xpose.msra.mxu0 0
      %1365 = vmatprep.subr.bf16.mxu0 0
      %1366 = vmatpush1.bf16.xpose.msra.mxu0 0
      %1367 = vmatprep.subr.bf16.mxu0 0
      %1368 = vmatpush1.bf16.xpose.msra.mxu0 0
      %1369 = vmatprep.subr.bf16.mxu0 0
      %1370 = vmatpush1.bf16.xpose.msra.mxu0 0
      %1371 = vmatprep.subr.bf16.mxu0 0
      %1372 = vmatpush1.bf16.xpose.msra.mxu0 0
      %1373 = vmatprep.subr.bf16.mxu0 0
      %1374 = vmatpush1.bf16.xpose.msra.mxu0 0
      %1375 = vmatprep.subr.bf16.mxu0 0
      %1376 = vmatpush1.bf16.xpose.msra.mxu0 0
      %1377 = vmatprep.subr.bf16.mxu0 0
      %1378 = vmatpush1.bf16.xpose.msra.mxu0 0
      %1379 = vmatprep.subr.bf16.mxu0 0
      %1380 = vmatpush1.bf16.xpose.msra.mxu0 0
      %1381 = vmatprep.subr.bf16.mxu0 0
      %1382 = vmatpush1.bf16.xpose.msra.mxu0 0
      %1383 = vmatprep.subr.bf16.mxu0 0
      %1384 = vmatpush1.bf16.xpose.msra.mxu0 0
      %1385 = vmatprep.subr.bf16.mxu0 0
      %1386 = vmatpush1.bf16.xpose.msra.mxu0 0
      %1387 = vmatprep.subr.bf16.mxu0 0
      %1388 = vmatpush1.bf16.xpose.msra.mxu0 0
      %1389 = vmatprep.mubr.bf16.mxu0 0
      %1390 = vmatmul.mubr.bf16.gmra.mrb[0].mxu0 %v1355
      %v1391 = vpop.f32.mrb[0].mxu0
      %v1392 = vadd.f32 0.0, %v1391
      %v1393 = vpop.f32.mrb[0].mxu0
      %v1394 = vpop.f32.mrb[0].mxu0
      %v1395 = vpop.f32.mrb[0].mxu0
      %1396 = vdwg.mxu0
      %v1397 = vadd.f32 %v717, %v1091
      %v1398 = vadd.f32 %v760, %v1134
      %v1399 = vadd.f32 %v803, %v1177
      %v1400 = vadd.f32 %v846, %v1220
      %v1401 = vadd.f32 %v889, %v1263
      %v1402 = vadd.f32 %v932, %v1306
      %v1403 = vadd.f32 %v975, %v1349
      %v1404 = vadd.f32 %v1018, %v1392
      %v1405 = vld [vmem:[%s1023] sm:$0xf]
      %v1406 = vld [vmem:[%s1023 + $0x4] sm:$0x1]
      %v1407 = vld [vmem:[%s1023 + $0x8] sm:$0xf]
      %v1408 = vld [vmem:[%s1023 + $0xc] sm:$0x1]
      %v1409 = vld [vmem:[%s1023 + $0x10] sm:$0xf]
      %v1410 = vld [vmem:[%s1023 + $0x14] sm:$0x1]
      %v1411 = vld [vmem:[%s1023 + $0x18] sm:$0xf]
      %v1412 = vld [vmem:[%s1023 + $0x1c] sm:$0x1]
      %v1413 = vld [vmem:[%s1023 + $0x20] sm:$0xf]
      %v1414 = vld [vmem:[%s1023 + $0x24] sm:$0x1]
      %v1415 = vld [vmem:[%s1023 + $0x28] sm:$0xf]
      %v1416 = vld [vmem:[%s1023 + $0x2c] sm:$0x1]
      %v1417 = vld [vmem:[%s1023 + $0x30] sm:$0xf]
      %v1418 = vld [vmem:[%s1023 + $0x34] sm:$0x1]
      %v1419 = vld [vmem:[%s1023 + $0x38] sm:$0xf]
      %v1420 = vld [vmem:[%s1023 + $0x3c] sm:$0x1]
      %s1421 = scalar_lea.vmem %s1, 48
      %v1422 = vld [vmem:[%s1421] sm:$0xf]
      %v1423 = vld [vmem:[%s1421 + $0x4] sm:$0xf]
      %v1424 = vld [vmem:[%s1421 + $0x8] sm:$0xf]
      %v1425 = vld [vmem:[%s1421 + $0xc] sm:$0xf]
      %v1428 = vunpack.c.l.b16 %v1405
      %v1429 = vunpack.c.l.b16 %v1406
      %v1430 = vpack.c.b16 %v1429, %v1428
      %v1432 = vshrl.u32 %v1430, 16
      %v1434 = vshll.u32 %v1430, 16
      %v1436 = vrot.slane %v1434, 1
      %v1437 = vor.u32 %v1432, %v1436
      %v1442 = vunpack.c.l.b16 %v1422
      %v1443 = vunpack.c.l.b16 %v1423
      %v1444 = vunpack.c.l.b16 %v1424
      %v1445 = vunpack.c.l.b16 %v1425
      %v1446 = vpack.c.b16 %v1443, %v1442
      %v1447 = vpack.c.b16 %v1445, %v1444
      %v1449 = vsel %vm228, %v1437, 0
      %v1452 = vsel %vm228, %v1446, 0
      %v1455 = vsel %vm228, %v1447, 0
      %1457 = vmatprep.subr.bf16.mxu0 0
      %1458 = vmatpush1.bf16.xpose.msra.mxu0 %v1452
      %1459 = vmatprep.subr.bf16.mxu0 0
      %1460 = vmatpush1.bf16.xpose.msra.mxu0 %v1455
      %1461 = vmatprep.subr.bf16.mxu0 0
      %1462 = vmatpush1.bf16.xpose.msra.mxu0 0
      %1463 = vmatprep.subr.bf16.mxu0 0
      %1464 = vmatpush1.bf16.xpose.msra.mxu0 0
      %1465 = vmatprep.subr.bf16.mxu0 0
      %1466 = vmatpush1.bf16.xpose.msra.mxu0 0
      %1467 = vmatprep.subr.bf16.mxu0 0
      %1468 = vmatpush1.bf16.xpose.msra.mxu0 0
      %1469 = vmatprep.subr.bf16.mxu0 0
      %1470 = vmatpush1.bf16.xpose.msra.mxu0 0
      %1471 = vmatprep.subr.bf16.mxu0 0
      %1472 = vmatpush1.bf16.xpose.msra.mxu0 0
      %1473 = vmatprep.subr.bf16.mxu0 0
      %1474 = vmatpush1.bf16.xpose.msra.mxu0 0
      %1475 = vmatprep.subr.bf16.mxu0 0
      %1476 = vmatpush1.bf16.xpose.msra.mxu0 0
      %1477 = vmatprep.subr.bf16.mxu0 0
      %1478 = vmatpush1.bf16.xpose.msra.mxu0 0
      %1479 = vmatprep.subr.bf16.mxu0 0
      %1480 = vmatpush1.bf16.xpose.msra.mxu0 0
      %1481 = vmatprep.subr.bf16.mxu0 0
      %1482 = vmatpush1.bf16.xpose.msra.mxu0 0
      %1483 = vmatprep.subr.bf16.mxu0 0
      %1484 = vmatpush1.bf16.xpose.msra.mxu0 0
      %1485 = vmatprep.subr.bf16.mxu0 0
      %1486 = vmatpush1.bf16.xpose.msra.mxu0 0
      %1487 = vmatprep.subr.bf16.mxu0 0
      %1488 = vmatpush1.bf16.xpose.msra.mxu0 0
      %1489 = vmatprep.mubr.bf16.mxu0 0
      %1490 = vmatmul.mubr.bf16.gmra.mrb[0].mxu0 %v1449
      %v1491 = vpop.f32.mrb[0].mxu0
      %v1492 = vadd.f32 0.0, %v1491
      %v1493 = vpop.f32.mrb[0].mxu0
      %v1494 = vpop.f32.mrb[0].mxu0
      %v1495 = vpop.f32.mrb[0].mxu0
      %1496 = vdwg.mxu0
      %v1499 = vunpack.c.l.b16 %v1407
      %v1500 = vunpack.c.l.b16 %v1408
      %v1501 = vpack.c.b16 %v1500, %v1499
      %v1503 = vshrl.u32 %v1501, 16
      %v1505 = vshll.u32 %v1501, 16
      %v1507 = vrot.slane %v1505, 1
      %v1508 = vor.u32 %v1503, %v1507
      %v1510 = vsel %vm228, %v1508, 0
      %1512 = vmatprep.subr.bf16.mxu0 0
      %1513 = vmatpush1.bf16.xpose.msra.mxu0 %v1452
      %1514 = vmatprep.subr.bf16.mxu0 0
      %1515 = vmatpush1.bf16.xpose.msra.mxu0 %v1455
      %1516 = vmatprep.subr.bf16.mxu0 0
      %1517 = vmatpush1.bf16.xpose.msra.mxu0 0
      %1518 = vmatprep.subr.bf16.mxu0 0
      %1519 = vmatpush1.bf16.xpose.msra.mxu0 0
      %1520 = vmatprep.subr.bf16.mxu0 0
      %1521 = vmatpush1.bf16.xpose.msra.mxu0 0
      %1522 = vmatprep.subr.bf16.mxu0 0
      %1523 = vmatpush1.bf16.xpose.msra.mxu0 0
      %1524 = vmatprep.subr.bf16.mxu0 0
      %1525 = vmatpush1.bf16.xpose.msra.mxu0 0
      %1526 = vmatprep.subr.bf16.mxu0 0
      %1527 = vmatpush1.bf16.xpose.msra.mxu0 0
      %1528 = vmatprep.subr.bf16.mxu0 0
      %1529 = vmatpush1.bf16.xpose.msra.mxu0 0
      %1530 = vmatprep.subr.bf16.mxu0 0
      %1531 = vmatpush1.bf16.xpose.msra.mxu0 0
      %1532 = vmatprep.subr.bf16.mxu0 0
      %1533 = vmatpush1.bf16.xpose.msra.mxu0 0
      %1534 = vmatprep.subr.bf16.mxu0 0
      %1535 = vmatpush1.bf16.xpose.msra.mxu0 0
      %1536 = vmatprep.subr.bf16.mxu0 0
      %1537 = vmatpush1.bf16.xpose.msra.mxu0 0
      %1538 = vmatprep.subr.bf16.mxu0 0
      %1539 = vmatpush1.bf16.xpose.msra.mxu0 0
      %1540 = vmatprep.subr.bf16.mxu0 0
      %1541 = vmatpush1.bf16.xpose.msra.mxu0 0
      %1542 = vmatprep.subr.bf16.mxu0 0
      %1543 = vmatpush1.bf16.xpose.msra.mxu0 0
      %1544 = vmatprep.mubr.bf16.mxu0 0
      %1545 = vmatmul.mubr.bf16.gmra.mrb[0].mxu0 %v1510
      %v1546 = vpop.f32.mrb[0].mxu0
      %v1547 = vadd.f32 0.0, %v1546
      %v1548 = vpop.f32.mrb[0].mxu0
      %v1549 = vpop.f32.mrb[0].mxu0
      %v1550 = vpop.f32.mrb[0].mxu0
      %1551 = vdwg.mxu0
      %v1554 = vunpack.c.l.b16 %v1409
      %v1555 = vunpack.c.l.b16 %v1410
      %v1556 = vpack.c.b16 %v1555, %v1554
      %v1558 = vshrl.u32 %v1556, 16
      %v1560 = vshll.u32 %v1556, 16
      %v1562 = vrot.slane %v1560, 1
      %v1563 = vor.u32 %v1558, %v1562
      %v1565 = vsel %vm228, %v1563, 0
      %1567 = vmatprep.subr.bf16.mxu0 0
      %1568 = vmatpush1.bf16.xpose.msra.mxu0 %v1452
      %1569 = vmatprep.subr.bf16.mxu0 0
      %1570 = vmatpush1.bf16.xpose.msra.mxu0 %v1455
      %1571 = vmatprep.subr.bf16.mxu0 0
      %1572 = vmatpush1.bf16.xpose.msra.mxu0 0
      %1573 = vmatprep.subr.bf16.mxu0 0
      %1574 = vmatpush1.bf16.xpose.msra.mxu0 0
      %1575 = vmatprep.subr.bf16.mxu0 0
      %1576 = vmatpush1.bf16.xpose.msra.mxu0 0
      %1577 = vmatprep.subr.bf16.mxu0 0
      %1578 = vmatpush1.bf16.xpose.msra.mxu0 0
      %1579 = vmatprep.subr.bf16.mxu0 0
      %1580 = vmatpush1.bf16.xpose.msra.mxu0 0
      %1581 = vmatprep.subr.bf16.mxu0 0
      %1582 = vmatpush1.bf16.xpose.msra.mxu0 0
      %1583 = vmatprep.subr.bf16.mxu0 0
      %1584 = vmatpush1.bf16.xpose.msra.mxu0 0
      %1585 = vmatprep.subr.bf16.mxu0 0
      %1586 = vmatpush1.bf16.xpose.msra.mxu0 0
      %1587 = vmatprep.subr.bf16.mxu0 0
      %1588 = vmatpush1.bf16.xpose.msra.mxu0 0
      %1589 = vmatprep.subr.bf16.mxu0 0
      %1590 = vmatpush1.bf16.xpose.msra.mxu0 0
      %1591 = vmatprep.subr.bf16.mxu0 0
      %1592 = vmatpush1.bf16.xpose.msra.mxu0 0
      %1593 = vmatprep.subr.bf16.mxu0 0
      %1594 = vmatpush1.bf16.xpose.msra.mxu0 0
      %1595 = vmatprep.subr.bf16.mxu0 0
      %1596 = vmatpush1.bf16.xpose.msra.mxu0 0
      %1597 = vmatprep.subr.bf16.mxu0 0
      %1598 = vmatpush1.bf16.xpose.msra.mxu0 0
      %1599 = vmatprep.mubr.bf16.mxu0 0
      %1600 = vmatmul.mubr.bf16.gmra.mrb[0].mxu0 %v1565
      %v1601 = vpop.f32.mrb[0].mxu0
      %v1602 = vadd.f32 0.0, %v1601
      %v1603 = vpop.f32.mrb[0].mxu0
      %v1604 = vpop.f32.mrb[0].mxu0
      %v1605 = vpop.f32.mrb[0].mxu0
      %1606 = vdwg.mxu0
      %v1609 = vunpack.c.l.b16 %v1411
      %v1610 = vunpack.c.l.b16 %v1412
      %v1611 = vpack.c.b16 %v1610, %v1609
      %v1613 = vshrl.u32 %v1611, 16
      %v1615 = vshll.u32 %v1611, 16
      %v1617 = vrot.slane %v1615, 1
      %v1618 = vor.u32 %v1613, %v1617
      %v1620 = vsel %vm228, %v1618, 0
      %1622 = vmatprep.subr.bf16.mxu0 0
      %1623 = vmatpush1.bf16.xpose.msra.mxu0 %v1452
      %1624 = vmatprep.subr.bf16.mxu0 0
      %1625 = vmatpush1.bf16.xpose.msra.mxu0 %v1455
      %1626 = vmatprep.subr.bf16.mxu0 0
      %1627 = vmatpush1.bf16.xpose.msra.mxu0 0
      %1628 = vmatprep.subr.bf16.mxu0 0
      %1629 = vmatpush1.bf16.xpose.msra.mxu0 0
      %1630 = vmatprep.subr.bf16.mxu0 0
      %1631 = vmatpush1.bf16.xpose.msra.mxu0 0
      %1632 = vmatprep.subr.bf16.mxu0 0
      %1633 = vmatpush1.bf16.xpose.msra.mxu0 0
      %1634 = vmatprep.subr.bf16.mxu0 0
      %1635 = vmatpush1.bf16.xpose.msra.mxu0 0
      %1636 = vmatprep.subr.bf16.mxu0 0
      %1637 = vmatpush1.bf16.xpose.msra.mxu0 0
      %1638 = vmatprep.subr.bf16.mxu0 0
      %1639 = vmatpush1.bf16.xpose.msra.mxu0 0
      %1640 = vmatprep.subr.bf16.mxu0 0
      %1641 = vmatpush1.bf16.xpose.msra.mxu0 0
      %1642 = vmatprep.subr.bf16.mxu0 0
      %1643 = vmatpush1.bf16.xpose.msra.mxu0 0
      %1644 = vmatprep.subr.bf16.mxu0 0
      %1645 = vmatpush1.bf16.xpose.msra.mxu0 0
      %1646 = vmatprep.subr.bf16.mxu0 0
      %1647 = vmatpush1.bf16.xpose.msra.mxu0 0
      %1648 = vmatprep.subr.bf16.mxu0 0
      %1649 = vmatpush1.bf16.xpose.msra.mxu0 0
      %1650 = vmatprep.subr.bf16.mxu0 0
      %1651 = vmatpush1.bf16.xpose.msra.mxu0 0
      %1652 = vmatprep.subr.bf16.mxu0 0
      %1653 = vmatpush1.bf16.xpose.msra.mxu0 0
      %1654 = vmatprep.mubr.bf16.mxu0 0
      %1655 = vmatmul.mubr.bf16.gmra.mrb[0].mxu0 %v1620
      %v1656 = vpop.f32.mrb[0].mxu0
      %v1657 = vadd.f32 0.0, %v1656
      %v1658 = vpop.f32.mrb[0].mxu0
      %v1659 = vpop.f32.mrb[0].mxu0
      %v1660 = vpop.f32.mrb[0].mxu0
      %1661 = vdwg.mxu0
      %v1664 = vunpack.c.l.b16 %v1413
      %v1665 = vunpack.c.l.b16 %v1414
      %v1666 = vpack.c.b16 %v1665, %v1664
      %v1668 = vshrl.u32 %v1666, 16
      %v1670 = vshll.u32 %v1666, 16
      %v1672 = vrot.slane %v1670, 1
      %v1673 = vor.u32 %v1668, %v1672
      %v1675 = vsel %vm228, %v1673, 0
      %1677 = vmatprep.subr.bf16.mxu0 0
      %1678 = vmatpush1.bf16.xpose.msra.mxu0 %v1452
      %1679 = vmatprep.subr.bf16.mxu0 0
      %1680 = vmatpush1.bf16.xpose.msra.mxu0 %v1455
      %1681 = vmatprep.subr.bf16.mxu0 0
      %1682 = vmatpush1.bf16.xpose.msra.mxu0 0
      %1683 = vmatprep.subr.bf16.mxu0 0
      %1684 = vmatpush1.bf16.xpose.msra.mxu0 0
      %1685 = vmatprep.subr.bf16.mxu0 0
      %1686 = vmatpush1.bf16.xpose.msra.mxu0 0
      %1687 = vmatprep.subr.bf16.mxu0 0
      %1688 = vmatpush1.bf16.xpose.msra.mxu0 0
      %1689 = vmatprep.subr.bf16.mxu0 0
      %1690 = vmatpush1.bf16.xpose.msra.mxu0 0
      %1691 = vmatprep.subr.bf16.mxu0 0
      %1692 = vmatpush1.bf16.xpose.msra.mxu0 0
      %1693 = vmatprep.subr.bf16.mxu0 0
      %1694 = vmatpush1.bf16.xpose.msra.mxu0 0
      %1695 = vmatprep.subr.bf16.mxu0 0
      %1696 = vmatpush1.bf16.xpose.msra.mxu0 0
      %1697 = vmatprep.subr.bf16.mxu0 0
      %1698 = vmatpush1.bf16.xpose.msra.mxu0 0
      %1699 = vmatprep.subr.bf16.mxu0 0
      %1700 = vmatpush1.bf16.xpose.msra.mxu0 0
      %1701 = vmatprep.subr.bf16.mxu0 0
      %1702 = vmatpush1.bf16.xpose.msra.mxu0 0
      %1703 = vmatprep.subr.bf16.mxu0 0
      %1704 = vmatpush1.bf16.xpose.msra.mxu0 0
      %1705 = vmatprep.subr.bf16.mxu0 0
      %1706 = vmatpush1.bf16.xpose.msra.mxu0 0
      %1707 = vmatprep.subr.bf16.mxu0 0
      %1708 = vmatpush1.bf16.xpose.msra.mxu0 0
      %1709 = vmatprep.mubr.bf16.mxu0 0
      %1710 = vmatmul.mubr.bf16.gmra.mrb[0].mxu0 %v1675
      %v1711 = vpop.f32.mrb[0].mxu0
      %v1712 = vadd.f32 0.0, %v1711
      %v1713 = vpop.f32.mrb[0].mxu0
      %v1714 = vpop.f32.mrb[0].mxu0
      %v1715 = vpop.f32.mrb[0].mxu0
      %1716 = vdwg.mxu0
      %v1719 = vunpack.c.l.b16 %v1415
      %v1720 = vunpack.c.l.b16 %v1416
      %v1721 = vpack.c.b16 %v1720, %v1719
      %v1723 = vshrl.u32 %v1721, 16
      %v1725 = vshll.u32 %v1721, 16
      %v1727 = vrot.slane %v1725, 1
      %v1728 = vor.u32 %v1723, %v1727
      %v1730 = vsel %vm228, %v1728, 0
      %1732 = vmatprep.subr.bf16.mxu0 0
      %1733 = vmatpush1.bf16.xpose.msra.mxu0 %v1452
      %1734 = vmatprep.subr.bf16.mxu0 0
      %1735 = vmatpush1.bf16.xpose.msra.mxu0 %v1455
      %1736 = vmatprep.subr.bf16.mxu0 0
      %1737 = vmatpush1.bf16.xpose.msra.mxu0 0
      %1738 = vmatprep.subr.bf16.mxu0 0
      %1739 = vmatpush1.bf16.xpose.msra.mxu0 0
      %1740 = vmatprep.subr.bf16.mxu0 0
      %1741 = vmatpush1.bf16.xpose.msra.mxu0 0
      %1742 = vmatprep.subr.bf16.mxu0 0
      %1743 = vmatpush1.bf16.xpose.msra.mxu0 0
      %1744 = vmatprep.subr.bf16.mxu0 0
      %1745 = vmatpush1.bf16.xpose.msra.mxu0 0
      %1746 = vmatprep.subr.bf16.mxu0 0
      %1747 = vmatpush1.bf16.xpose.msra.mxu0 0
      %1748 = vmatprep.subr.bf16.mxu0 0
      %1749 = vmatpush1.bf16.xpose.msra.mxu0 0
      %1750 = vmatprep.subr.bf16.mxu0 0
      %1751 = vmatpush1.bf16.xpose.msra.mxu0 0
      %1752 = vmatprep.subr.bf16.mxu0 0
      %1753 = vmatpush1.bf16.xpose.msra.mxu0 0
      %1754 = vmatprep.subr.bf16.mxu0 0
      %1755 = vmatpush1.bf16.xpose.msra.mxu0 0
      %1756 = vmatprep.subr.bf16.mxu0 0
      %1757 = vmatpush1.bf16.xpose.msra.mxu0 0
      %1758 = vmatprep.subr.bf16.mxu0 0
      %1759 = vmatpush1.bf16.xpose.msra.mxu0 0
      %1760 = vmatprep.subr.bf16.mxu0 0
      %1761 = vmatpush1.bf16.xpose.msra.mxu0 0
      %1762 = vmatprep.subr.bf16.mxu0 0
      %1763 = vmatpush1.bf16.xpose.msra.mxu0 0
      %1764 = vmatprep.mubr.bf16.mxu0 0
      %1765 = vmatmul.mubr.bf16.gmra.mrb[0].mxu0 %v1730
      %v1766 = vpop.f32.mrb[0].mxu0
      %v1767 = vadd.f32 0.0, %v1766
      %v1768 = vpop.f32.mrb[0].mxu0
      %v1769 = vpop.f32.mrb[0].mxu0
      %v1770 = vpop.f32.mrb[0].mxu0
      %1771 = vdwg.mxu0
      %v1774 = vunpack.c.l.b16 %v1417
      %v1775 = vunpack.c.l.b16 %v1418
      %v1776 = vpack.c.b16 %v1775, %v1774
      %v1778 = vshrl.u32 %v1776, 16
      %v1780 = vshll.u32 %v1776, 16
      %v1782 = vrot.slane %v1780, 1
      %v1783 = vor.u32 %v1778, %v1782
      %v1785 = vsel %vm228, %v1783, 0
      %1787 = vmatprep.subr.bf16.mxu0 0
      %1788 = vmatpush1.bf16.xpose.msra.mxu0 %v1452
      %1789 = vmatprep.subr.bf16.mxu0 0
      %1790 = vmatpush1.bf16.xpose.msra.mxu0 %v1455
      %1791 = vmatprep.subr.bf16.mxu0 0
      %1792 = vmatpush1.bf16.xpose.msra.mxu0 0
      %1793 = vmatprep.subr.bf16.mxu0 0
      %1794 = vmatpush1.bf16.xpose.msra.mxu0 0
      %1795 = vmatprep.subr.bf16.mxu0 0
      %1796 = vmatpush1.bf16.xpose.msra.mxu0 0
      %1797 = vmatprep.subr.bf16.mxu0 0
      %1798 = vmatpush1.bf16.xpose.msra.mxu0 0
      %1799 = vmatprep.subr.bf16.mxu0 0
      %1800 = vmatpush1.bf16.xpose.msra.mxu0 0
      %1801 = vmatprep.subr.bf16.mxu0 0
      %1802 = vmatpush1.bf16.xpose.msra.mxu0 0
      %1803 = vmatprep.subr.bf16.mxu0 0
      %1804 = vmatpush1.bf16.xpose.msra.mxu0 0
      %1805 = vmatprep.subr.bf16.mxu0 0
      %1806 = vmatpush1.bf16.xpose.msra.mxu0 0
      %1807 = vmatprep.subr.bf16.mxu0 0
      %1808 = vmatpush1.bf16.xpose.msra.mxu0 0
      %1809 = vmatprep.subr.bf16.mxu0 0
      %1810 = vmatpush1.bf16.xpose.msra.mxu0 0
      %1811 = vmatprep.subr.bf16.mxu0 0
      %1812 = vmatpush1.bf16.xpose.msra.mxu0 0
      %1813 = vmatprep.subr.bf16.mxu0 0
      %1814 = vmatpush1.bf16.xpose.msra.mxu0 0
      %1815 = vmatprep.subr.bf16.mxu0 0
      %1816 = vmatpush1.bf16.xpose.msra.mxu0 0
      %1817 = vmatprep.subr.bf16.mxu0 0
      %1818 = vmatpush1.bf16.xpose.msra.mxu0 0
      %1819 = vmatprep.mubr.bf16.mxu0 0
      %1820 = vmatmul.mubr.bf16.gmra.mrb[0].mxu0 %v1785
      %v1821 = vpop.f32.mrb[0].mxu0
      %v1822 = vadd.f32 0.0, %v1821
      %v1823 = vpop.f32.mrb[0].mxu0
      %v1824 = vpop.f32.mrb[0].mxu0
      %v1825 = vpop.f32.mrb[0].mxu0
      %1826 = vdwg.mxu0
      %v1829 = vunpack.c.l.b16 %v1419
      %v1830 = vunpack.c.l.b16 %v1420
      %v1831 = vpack.c.b16 %v1830, %v1829
      %v1833 = vshrl.u32 %v1831, 16
      %v1835 = vshll.u32 %v1831, 16
      %v1837 = vrot.slane %v1835, 1
      %v1838 = vor.u32 %v1833, %v1837
      %v1840 = vsel %vm228, %v1838, 0
      %1842 = vmatprep.subr.bf16.mxu0 0
      %1843 = vmatpush1.bf16.xpose.msra.mxu0 %v1452
      %1844 = vmatprep.subr.bf16.mxu0 0
      %1845 = vmatpush1.bf16.xpose.msra.mxu0 %v1455
      %1846 = vmatprep.subr.bf16.mxu0 0
      %1847 = vmatpush1.bf16.xpose.msra.mxu0 0
      %1848 = vmatprep.subr.bf16.mxu0 0
      %1849 = vmatpush1.bf16.xpose.msra.mxu0 0
      %1850 = vmatprep.subr.bf16.mxu0 0
      %1851 = vmatpush1.bf16.xpose.msra.mxu0 0
      %1852 = vmatprep.subr.bf16.mxu0 0
      %1853 = vmatpush1.bf16.xpose.msra.mxu0 0
      %1854 = vmatprep.subr.bf16.mxu0 0
      %1855 = vmatpush1.bf16.xpose.msra.mxu0 0
      %1856 = vmatprep.subr.bf16.mxu0 0
      %1857 = vmatpush1.bf16.xpose.msra.mxu0 0
      %1858 = vmatprep.subr.bf16.mxu0 0
      %1859 = vmatpush1.bf16.xpose.msra.mxu0 0
      %1860 = vmatprep.subr.bf16.mxu0 0
      %1861 = vmatpush1.bf16.xpose.msra.mxu0 0
      %1862 = vmatprep.subr.bf16.mxu0 0
      %1863 = vmatpush1.bf16.xpose.msra.mxu0 0
      %1864 = vmatprep.subr.bf16.mxu0 0
      %1865 = vmatpush1.bf16.xpose.msra.mxu0 0
      %1866 = vmatprep.subr.bf16.mxu0 0
      %1867 = vmatpush1.bf16.xpose.msra.mxu0 0
      %1868 = vmatprep.subr.bf16.mxu0 0
      %1869 = vmatpush1.bf16.xpose.msra.mxu0 0
      %1870 = vmatprep.subr.bf16.mxu0 0
      %1871 = vmatpush1.bf16.xpose.msra.mxu0 0
      %1872 = vmatprep.subr.bf16.mxu0 0
      %1873 = vmatpush1.bf16.xpose.msra.mxu0 0
      %1874 = vmatprep.mubr.bf16.mxu0 0
      %1875 = vmatmul.mubr.bf16.gmra.mrb[0].mxu0 %v1840
      %v1876 = vpop.f32.mrb[0].mxu0
      %v1877 = vadd.f32 0.0, %v1876
      %v1878 = vpop.f32.mrb[0].mxu0
      %v1879 = vpop.f32.mrb[0].mxu0
      %v1880 = vpop.f32.mrb[0].mxu0
      %1881 = vdwg.mxu0
      %v1882 = vadd.f32 %v1397, %v1492
      %v1883 = vadd.f32 %v1398, %v1547
      %v1884 = vadd.f32 %v1399, %v1602
      %v1885 = vadd.f32 %v1400, %v1657
      %v1886 = vadd.f32 %v1401, %v1712
      %v1887 = vadd.f32 %v1402, %v1767
      %v1888 = vadd.f32 %v1403, %v1822
      %v1889 = vadd.f32 %v1404, %v1877
      %v1891 = vlaneseq
      %v1892 = vshrl.u32 %v1891, 7
      %v1893 = vsub.s32 0, %v1892
      %v1894 = vrot.slane %v172, %v1893
      %v1896 = vadd.f32 %v1882, %v1894
      %v1897 = vadd.f32 %v1883, %v1894
      %v1898 = vadd.f32 %v1884, %v1894
      %v1899 = vadd.f32 %v1885, %v1894
      %v1900 = vadd.f32 %v1886, %v1894
      %v1901 = vadd.f32 %v1887, %v1894
      %v1902 = vadd.f32 %v1888, %v1894
      %v1903 = vadd.f32 %v1889, %v1894
      %v1904 = vmax.f32 %v1896, 0.0
      %v1905 = vmax.f32 %v1897, 0.0
      %v1906 = vmax.f32 %v1898, 0.0
      %v1907 = vmax.f32 %v1899, 0.0
      %v1908 = vmax.f32 %v1900, 0.0
      %v1909 = vmax.f32 %v1901, 0.0
      %v1910 = vmax.f32 %v1902, 0.0
      %v1911 = vmax.f32 %v1903, 0.0
      %v1912 = vpack.c.bf16 %v1904, %v1904
      %v1913 = vpack.c.bf16 %v1905, %v1905
      %v1914 = vpack.c.bf16 %v1906, %v1906
      %v1915 = vpack.c.bf16 %v1907, %v1907
      %v1916 = vpack.c.bf16 %v1908, %v1908
      %v1917 = vpack.c.bf16 %v1909, %v1909
      %v1918 = vpack.c.bf16 %v1910, %v1910
      %v1919 = vpack.c.bf16 %v1911, %v1911
      %vm1920 = vcmask 257024
      %1921 = vst.msk [vmem:[%s170] sm:$0xf] %vm1920, %v1912
      %1922 = vst.msk [vmem:[%s170 + $0x4] sm:$0xf] %vm1920, %v1913
      %1923 = vst.msk [vmem:[%s170 + $0x8] sm:$0xf] %vm1920, %v1914
      %1924 = vst.msk [vmem:[%s170 + $0xc] sm:$0xf] %vm1920, %v1915
      %1925 = vst.msk [vmem:[%s170 + $0x10] sm:$0xf] %vm1920, %v1916
      %1926 = vst.msk [vmem:[%s170 + $0x14] sm:$0xf] %vm1920, %v1917
      %1927 = vst.msk [vmem:[%s170 + $0x18] sm:$0xf] %vm1920, %v1918
      %1928 = vst.msk [vmem:[%s170 + $0x1c] sm:$0xf] %vm1920, %v1919
      %p1929 = scmp.lt.s32.totalorder %s14, 1
      %s1930 = scalar_select %p1929, %s14, 1
      %s1931 = smul.addr %s1930, 8
      %s1932 = smul.addr %s1931, 4
      %s1933 = scalar_lea.vmem %s3, %s1932
      // Predicated region
      $region33: #{nature_cnn_forward.4} parent=31 // pred_check
        %p1934 = pneg %p100
      $region34: #{nature_cnn_forward.4} parent=31 // pred_check_branch
        %1936 = sbr.rel (%p1934) target = $region36
      $region35: #{nature_cnn_forward.4} parent=31 // pred_region
        _
      $region36: #{nature_cnn_forward.4} parent=31 // pred_fallthru
        _
    $region32: #{nature_cnn_forward.4} parent=5 // pred_fallthru
      _
    %p1937 = scmp.le.s32.totalorder 2, %s9
    // Predicated region
    $region37: #{nature_cnn_forward.4} parent=5 // pred_check
      %p1938 = pneg %p1937
    $region38: #{nature_cnn_forward.4} parent=5 // pred_check_branch
      %1940 = sbr.rel (%p1938) target = $region40
    $region39: #{nature_cnn_forward.4} parent=5 // pred_region
      %s1941 = ssub.s32 %s9, 2
      // Predicated region
      $region41: #{nature_cnn_forward.4} parent=39 // pred_check
        %p1942 = pneg %p106
      $region42: #{nature_cnn_forward.4} parent=39 // pred_check_branch
        %1944 = sbr.rel (%p1942) target = $region44
      $region43: #{nature_cnn_forward.4} parent=39 // pred_region
        %p1945 = scmp.lt.s32.totalorder %s15, 1
        %s1946 = scalar_select %p1945, %s15, 1
        %s1947 = smul.addr %s1946, 8
        %s1948 = smul.addr %s1947, 4
        %s1949 = scalar_lea.vmem %s3, %s1948
      $region44: #{nature_cnn_forward.4} parent=39 // pred_fallthru
        _
    $region40: #{nature_cnn_forward.4} parent=5 // pred_fallthru
      _
  $region6: #{nature_cnn_forward.4} parent=0 // loop_footer
    %s13 = sadd.s32 1, %s9
  $region7: #{nature_cnn_forward.4} parent=0 // loop_footer_branch
    %8 = sbr.rel target = $region3
  $region8: #{nature_cnn_forward.4} parent=0 // loop_exit
    _

// kernel: nature_cnn_forward.6
$region0: #{nature_cnn_forward.6}
  #allocation0 [shape = 'u32[]', space=smem, size = 0x4, offset = 0x4, fixed_abs, tag = 'smem constant byte address 0x4 - core index']
  #allocation1 [shape = 'u32[144,128]{1,0:T(1,128)}', space=vmem, size = 0x12000, scoped, tag = 'internal scratch']
  %s0 = inlined_call_operand.vmem [shape: bf16[2,3,3,64], index: 0, kind: input, shape index: {}]
  %s1 = inlined_call_operand.vmem [shape: bf16[9,64,64], index: 1, kind: input, shape index: {}]
  %s2 = inlined_call_operand.vmem [shape: f32[1,64], index: 2, kind: input, shape index: {}]
  %s3 = inlined_call_operand.vmem [shape: bf16[2,1,1,64], index: 3, kind: output, shape index: {}]
  %s4 = sld [smem:[#allocation0]]
  $region45: #{nature_cnn_forward.6} parent=0
    _
  %s6 = ssub.s32 1, %s4
  %s7 = scalar_select 0, %s6, %s4
  loop: start=0, step=1, limit=4
  $region2: #{nature_cnn_forward.6} parent=0 // loop_pre_header
    _
  $region3: #{nature_cnn_forward.6} parent=0 // loop_header
    %s9 = sphi 0, %s13
    %p10 = scmp.ge.s32.totalorder %s9, 4
    %s19 = sphi 0, %s21
    %s22 = sphi 0, %s19
    %s23 = sphi 0, %s22
    %s39 = sphi 0, %s23
    %s43 = sphi 0, %s43
    %s45 = sphi 0, %s43
    %s46 = sphi 0, %s45
    %s60 = sphi 0, %s46
    %s64 = sphi 0, %s64
    %s66 = sphi 0, %s64
    %s67 = sphi 0, %s66
    %s81 = sphi 0, %s67
    %s87 = sphi 0, %s89
    %s90 = sphi 0, %s87
    %s91 = sphi 0, %s90
    %s107 = sphi 0, %s91
  $region4: #{nature_cnn_forward.6} parent=0 // loop_header_branch
    %12 = sbr.rel (%p10) target = $region8
  $region5: #{nature_cnn_forward.6} parent=0 // loop_body
    %s14 = ssub.s32 %s9, 1
    %s15 = ssub.s32 %s9, 2
    %s16 = sadd.s32 %s9, 1
    %s17 = ssub.s32 %s9, %s16
    %p18 = scmp.eq.s32.totalorder %s17, 0
    %s20 = sadd.s32 %s19, 1
    %s21 = scalar_select %p18, %s19, %s20
    %p24 = pneg %p18
    %p25 = scmp.eq.s32.totalorder %s9, 1
    %p26 = por %p24, %p25
    %p27 = scmp.ne.s32.totalorder %s19, %s22
    %p28 = scmp.eq.s32.totalorder %s9, 0
    %p29 = por %p27, %p28
    %p30 = scmp.ne.s32.totalorder %s19, %s22
    %p31 = scmp.eq.s32.totalorder %s14, 1
    %p32 = por %p30, %p31
    %p33 = scmp.ne.s32.totalorder %s22, %s23
    %p34 = scmp.eq.s32.totalorder %s14, 0
    %p35 = por %p33, %p34
    %p36 = scmp.ne.s32.totalorder %s22, %s23
    %p37 = scmp.eq.s32.totalorder %s15, 1
    %p38 = por %p36, %p37
    %p40 = scmp.ne.s32.totalorder %s23, %s39
    %p41 = scmp.eq.s32.totalorder %s15, 0
    %p42 = por %p40, %p41
    %s44 = sadd.s32 %s43, 1
    %p47 = scmp.eq.s32.totalorder %s9, 1
    %p48 = scmp.ne.s32.totalorder %s43, %s45
    %p49 = scmp.eq.s32.totalorder %s9, 0
    %p50 = por %p48, %p49
    %p51 = scmp.ne.s32.totalorder %s43, %s45
    %p52 = scmp.eq.s32.totalorder %s14, 1
    %p53 = por %p51, %p52
    %p54 = scmp.ne.s32.totalorder %s45, %s46
    %p55 = scmp.eq.s32.totalorder %s14, 0
    %p56 = por %p54, %p55
    %p57 = scmp.ne.s32.totalorder %s45, %s46
    %p58 = scmp.eq.s32.totalorder %s15, 1
    %p59 = por %p57, %p58
    %p61 = scmp.ne.s32.totalorder %s46, %s60
    %p62 = scmp.eq.s32.totalorder %s15, 0
    %p63 = por %p61, %p62
    %s65 = sadd.s32 %s64, 1
    %p68 = scmp.eq.s32.totalorder %s9, 1
    %p69 = scmp.ne.s32.totalorder %s64, %s66
    %p70 = scmp.eq.s32.totalorder %s9, 0
    %p71 = por %p69, %p70
    %p72 = scmp.ne.s32.totalorder %s64, %s66
    %p73 = scmp.eq.s32.totalorder %s14, 1
    %p74 = por %p72, %p73
    %p75 = scmp.ne.s32.totalorder %s66, %s67
    %p76 = scmp.eq.s32.totalorder %s14, 0
    %p77 = por %p75, %p76
    %p78 = scmp.ne.s32.totalorder %s66, %s67
    %p79 = scmp.eq.s32.totalorder %s15, 1
    %p80 = por %p78, %p79
    %p82 = scmp.ne.s32.totalorder %s67, %s81
    %p83 = scmp.eq.s32.totalorder %s15, 0
    %p84 = por %p82, %p83
    %s85 = ssub.s32 %s9, %s16
    %p86 = scmp.eq.s32.totalorder %s85, 0
    %s88 = sadd.s32 %s87, 1
    %s89 = scalar_select %p86, %s87, %s88
    %p92 = pneg %p86
    %p93 = scmp.eq.s32.totalorder %s9, 1
    %p94 = por %p92, %p93
    %p95 = scmp.ne.s32.totalorder %s87, %s90
    %p96 = scmp.eq.s32.totalorder %s9, 0
    %p97 = por %p95, %p96
    %p98 = scmp.ne.s32.totalorder %s87, %s90
    %p99 = scmp.eq.s32.totalorder %s14, 1
    %p100 = por %p98, %p99
    %p101 = scmp.ne.s32.totalorder %s90, %s91
    %p102 = scmp.eq.s32.totalorder %s14, 0
    %p103 = por %p101, %p102
    %p104 = scmp.ne.s32.totalorder %s90, %s91
    %p105 = scmp.eq.s32.totalorder %s15, 1
    %p106 = por %p104, %p105
    %p108 = scmp.ne.s32.totalorder %s91, %s107
    %p109 = scmp.eq.s32.totalorder %s15, 0
    %p110 = por %p108, %p109
    %p111 = scmp.le.s32.totalorder 1, %s9
    %p112 = scmp.lt.s32.totalorder %s9, 3
    %p113 = pnand %p111, %p112
    %p114 = pneg %p113
    // Predicated region
    $region9: #{nature_cnn_forward.6} parent=5 // pred_check
      _
    $region10: #{nature_cnn_forward.6} parent=5 // pred_check_branch
      %116 = sbr.rel (%p113) target = $region12
    $region11: #{nature_cnn_forward.6} parent=5 // pred_region
      %s117 = ssub.s32 %s9, 1
      // Predicated region
      $region13: #{nature_cnn_forward.6} parent=11 // pred_check
        %p118 = pneg %p56
      $region14: #{nature_cnn_forward.6} parent=11 // pred_check_branch
        %120 = sbr.rel (%p118) target = $region16
      $region15: #{nature_cnn_forward.6} parent=11 // pred_region
        _
      $region16: #{nature_cnn_forward.6} parent=11 // pred_fallthru
        _
      // Predicated region
      $region17: #{nature_cnn_forward.6} parent=11 // pred_check
        %p121 = pneg %p77
      $region18: #{nature_cnn_forward.6} parent=11 // pred_check_branch
        %123 = sbr.rel (%p121) target = $region20
      $region19: #{nature_cnn_forward.6} parent=11 // pred_region
        _
      $region20: #{nature_cnn_forward.6} parent=11 // pred_fallthru
        _
    $region12: #{nature_cnn_forward.6} parent=5 // pred_fallthru
      _
    %p124 = scmp.lt.s32.totalorder %s9, 2
    // Predicated region
    $region21: #{nature_cnn_forward.6} parent=5 // pred_check
      %p125 = pneg %p124
    $region22: #{nature_cnn_forward.6} parent=5 // pred_check_branch
      %127 = sbr.rel (%p125) target = $region24
    $region23: #{nature_cnn_forward.6} parent=5 // pred_region
      // Predicated region
      $region25: #{nature_cnn_forward.6} parent=23 // pred_check
        %p128 = pneg %p29
      $region26: #{nature_cnn_forward.6} parent=23 // pred_check_branch
        %130 = sbr.rel (%p128) target = $region28
      $region27: #{nature_cnn_forward.6} parent=23 // pred_region
        %p131 = scmp.lt.s32.totalorder %s9, 1
        %s132 = scalar_select %p131, %s9, 1
        %s133 = smul.addr %s132, 3
        %s134 = smul.addr %s133, 2
        %s135 = scalar_lea.vmem %s0, %s134
      $region28: #{nature_cnn_forward.6} parent=23 // pred_fallthru
        _
    $region24: #{nature_cnn_forward.6} parent=5 // pred_fallthru
      _
    %p136 = scmp.le.s32.totalorder 1, %s9
    %p137 = scmp.lt.s32.totalorder %s9, 3
    %p138 = pnand %p136, %p137
    %p139 = pneg %p138
    // Predicated region
    $region29: #{nature_cnn_forward.6} parent=5 // pred_check
      _
    $region30: #{nature_cnn_forward.6} parent=5 // pred_check_branch
      %141 = sbr.rel (%p138) target = $region32
    $region31: #{nature_cnn_forward.6} parent=5 // pred_region
      %s142 = ssub.s32 %s9, 1
      %p143 = scmp.lt.s32.totalorder %s14, 1
      %s144 = scalar_select %p143, %s14, 1
      %s145 = smul.addr %s144, 3
      %s146 = smul.addr %s145, 2
      %s147 = scalar_lea.vmem %s0, %s146
      %p148 = pneg %p35
      %p149 = pneg %p32
      %p150 = pneg %p56
      %p151 = pneg %p53
      %p152 = pneg %p77
      %p153 = pneg %p74
      %p154 = pneg %p103
      %p155 = pneg %p100
      %p156 = scmp.lt.s32.totalorder %s14, 1
      %s157 = scalar_select %p156, %s14, 1
      %s158 = scalar_lea.vmem %s3, %s157
      %p159 = scmp.lt.s32.totalorder %s14, 1
      %s160 = scalar_select %p159, %s14, 1
      %s161 = smul.addr %s160, 3
      %s162 = smul.addr %s161, 2
      %s163 = scalar_lea.vmem %s0, %s162
      %p164 = scmp.lt.s32.totalorder %s14, 1
      %s165 = scalar_select %p164, %s14, 1
      %s166 = scalar_lea.vmem %s3, %s165
      %v168 = vld [vmem:[%s2] sm:$0x1]
      %v169 = vld [vmem:[%s163] sm:$0x1]
      %v170 = vld [vmem:[%s1] sm:$0xf]
      %v171 = vld [vmem:[%s1 + $0x4] sm:$0xf]
      %v172 = vld [vmem:[%s1 + $0x8] sm:$0xf]
      %v173 = vld [vmem:[%s1 + $0xc] sm:$0xf]
      %v174 = vld [vmem:[%s1 + $0x10] sm:$0xf]
      %v175 = vld [vmem:[%s1 + $0x14] sm:$0xf]
      %v176 = vld [vmem:[%s1 + $0x18] sm:$0xf]
      %v177 = vld [vmem:[%s1 + $0x1c] sm:$0xf]
      %v178 = vld [vmem:[%s163] sm:$0x1]
      %s179 = scalar_lea.vmem %s1, 32
      %v180 = vld [vmem:[%s179] sm:$0xf]
      %v181 = vld [vmem:[%s179 + $0x4] sm:$0xf]
      %v182 = vld [vmem:[%s179 + $0x8] sm:$0xf]
      %v183 = vld [vmem:[%s179 + $0xc] sm:$0xf]
      %v184 = vld [vmem:[%s179 + $0x10] sm:$0xf]
      %v185 = vld [vmem:[%s179 + $0x14] sm:$0xf]
      %v186 = vld [vmem:[%s179 + $0x18] sm:$0xf]
      %v187 = vld [vmem:[%s179 + $0x1c] sm:$0xf]
      %v190 = vunpack.c.l.s4 1983009808
      %v191 = vunpack.c.0.s8 %v190
      %v192 = vlaneseq
      %v193 = vshrl.u32 %v192, 7
      %v194 = vsub.s32 %v191, %v193
      %v195 = vrot.slane %v178, %v194
      %v197 = vshrl.u32 %v195, 16
      %v207 = vunpack.c.l.b16 %v180
      %v208 = vunpack.c.l.b16 %v181
      %v209 = vunpack.c.l.b16 %v182
      %v210 = vunpack.c.l.b16 %v183
      %v211 = vunpack.c.l.b16 %v184
      %v212 = vunpack.c.l.b16 %v185
      %v213 = vunpack.c.l.b16 %v186
      %v214 = vunpack.c.l.b16 %v187
      %v215 = vpack.c.b16 %v208, %v207
      %v216 = vpack.c.b16 %v210, %v209
      %v217 = vpack.c.b16 %v212, %v211
      %v218 = vpack.c.b16 %v214, %v213
      %vm219 = vcmask 523264
      %v221 = vsel %vm219, %v197, 0
      %v224 = vsel %vm219, %v215, 0
      %v227 = vsel %vm219, %v216, 0
      %v230 = vsel %vm219, %v217, 0
      %v233 = vsel %vm219, %v218, 0
      %235 = vmatprep.subr.bf16.mxu0 0
      %236 = vmatpush1.bf16.xpose.msra.mxu0 %v224
      %237 = vmatprep.subr.bf16.mxu0 0
      %238 = vmatpush1.bf16.xpose.msra.mxu0 %v227
      %239 = vmatprep.subr.bf16.mxu0 0
      %240 = vmatpush1.bf16.xpose.msra.mxu0 %v230
      %241 = vmatprep.subr.bf16.mxu0 0
      %242 = vmatpush1.bf16.xpose.msra.mxu0 %v233
      %243 = vmatprep.subr.bf16.mxu0 0
      %244 = vmatpush1.bf16.xpose.msra.mxu0 0
      %245 = vmatprep.subr.bf16.mxu0 0
      %246 = vmatpush1.bf16.xpose.msra.mxu0 0
      %247 = vmatprep.subr.bf16.mxu0 0
      %248 = vmatpush1.bf16.xpose.msra.mxu0 0
      %249 = vmatprep.subr.bf16.mxu0 0
      %250 = vmatpush1.bf16.xpose.msra.mxu0 0
      %251 = vmatprep.subr.bf16.mxu0 0
      %252 = vmatpush1.bf16.xpose.msra.mxu0 0
      %253 = vmatprep.subr.bf16.mxu0 0
      %254 = vmatpush1.bf16.xpose.msra.mxu0 0
      %255 = vmatprep.subr.bf16.mxu0 0
      %256 = vmatpush1.bf16.xpose.msra.mxu0 0
      %257 = vmatprep.subr.bf16.mxu0 0
      %258 = vmatpush1.bf16.xpose.msra.mxu0 0
      %259 = vmatprep.subr.bf16.mxu0 0
      %260 = vmatpush1.bf16.xpose.msra.mxu0 0
      %261 = vmatprep.subr.bf16.mxu0 0
      %262 = vmatpush1.bf16.xpose.msra.mxu0 0
      %263 = vmatprep.subr.bf16.mxu0 0
      %264 = vmatpush1.bf16.xpose.msra.mxu0 0
      %265 = vmatprep.subr.bf16.mxu0 0
      %266 = vmatpush1.bf16.xpose.msra.mxu0 0
      %267 = vmatprep.mubr.bf16.mxu0 0
      %268 = vmatmul.mubr.bf16.gmra.mrb[0].mxu0 %v221
      %v269 = vpop.f32.mrb[0].mxu0
      %v270 = vadd.f32 0.0, %v269
      %v271 = vpop.f32.mrb[0].mxu0
      %v272 = vpop.f32.mrb[0].mxu0
      %v273 = vpop.f32.mrb[0].mxu0
      %274 = vdwg.mxu0
      %v283 = vunpack.c.l.b16 %v170
      %v284 = vunpack.c.l.b16 %v171
      %v285 = vunpack.c.l.b16 %v172
      %v286 = vunpack.c.l.b16 %v173
      %v287 = vunpack.c.l.b16 %v174
      %v288 = vunpack.c.l.b16 %v175
      %v289 = vunpack.c.l.b16 %v176
      %v290 = vunpack.c.l.b16 %v177
      %v291 = vpack.c.b16 %v284, %v283
      %v292 = vpack.c.b16 %v286, %v285
      %v293 = vpack.c.b16 %v288, %v287
      %v294 = vpack.c.b16 %v290, %v289
      %v296 = vsel %vm219, %v169, 0
      %v299 = vsel %vm219, %v291, 0
      %v302 = vsel %vm219, %v292, 0
      %v305 = vsel %vm219, %v293, 0
      %v308 = vsel %vm219, %v294, 0
      %310 = vmatprep.subr.bf16.mxu0 0
      %311 = vmatpush1.bf16.xpose.msra.mxu0 %v299
      %312 = vmatprep.subr.bf16.mxu0 0
      %313 = vmatpush1.bf16.xpose.msra.mxu0 %v302
      %314 = vmatprep.subr.bf16.mxu0 0
      %315 = vmatpush1.bf16.xpose.msra.mxu0 %v305
      %316 = vmatprep.subr.bf16.mxu0 0
      %317 = vmatpush1.bf16.xpose.msra.mxu0 %v308
      %318 = vmatprep.subr.bf16.mxu0 0
      %319 = vmatpush1.bf16.xpose.msra.mxu0 0
      %320 = vmatprep.subr.bf16.mxu0 0
      %321 = vmatpush1.bf16.xpose.msra.mxu0 0
      %322 = vmatprep.subr.bf16.mxu0 0
      %323 = vmatpush1.bf16.xpose.msra.mxu0 0
      %324 = vmatprep.subr.bf16.mxu0 0
      %325 = vmatpush1.bf16.xpose.msra.mxu0 0
      %326 = vmatprep.subr.bf16.mxu0 0
      %327 = vmatpush1.bf16.xpose.msra.mxu0 0
      %328 = vmatprep.subr.bf16.mxu0 0
      %329 = vmatpush1.bf16.xpose.msra.mxu0 0
      %330 = vmatprep.subr.bf16.mxu0 0
      %331 = vmatpush1.bf16.xpose.msra.mxu0 0
      %332 = vmatprep.subr.bf16.mxu0 0
      %333 = vmatpush1.bf16.xpose.msra.mxu0 0
      %334 = vmatprep.subr.bf16.mxu0 0
      %335 = vmatpush1.bf16.xpose.msra.mxu0 0
      %336 = vmatprep.subr.bf16.mxu0 0
      %337 = vmatpush1.bf16.xpose.msra.mxu0 0
      %338 = vmatprep.subr.bf16.mxu0 0
      %339 = vmatpush1.bf16.xpose.msra.mxu0 0
      %340 = vmatprep.subr.bf16.mxu0 0
      %341 = vmatpush1.bf16.xpose.msra.mxu0 0
      %342 = vmatprep.mubr.bf16.mxu0 0
      %343 = vmatmul.mubr.bf16.gmra.mrb[0].mxu0 %v296
      %v344 = vpop.f32.mrb[0].mxu0
      %v345 = vadd.f32 %v270, %v344
      %v346 = vpop.f32.mrb[0].mxu0
      %v347 = vpop.f32.mrb[0].mxu0
      %v348 = vpop.f32.mrb[0].mxu0
      %349 = vdwg.mxu0
      %v350 = vld [vmem:[%s163] sm:$0x2]
      %s351 = scalar_lea.vmem %s1, 64
      %v352 = vld [vmem:[%s351] sm:$0xf]
      %v353 = vld [vmem:[%s351 + $0x4] sm:$0xf]
      %v354 = vld [vmem:[%s351 + $0x8] sm:$0xf]
      %v355 = vld [vmem:[%s351 + $0xc] sm:$0xf]
      %v356 = vld [vmem:[%s351 + $0x10] sm:$0xf]
      %v357 = vld [vmem:[%s351 + $0x14] sm:$0xf]
      %v358 = vld [vmem:[%s351 + $0x18] sm:$0xf]
      %v359 = vld [vmem:[%s351 + $0x1c] sm:$0xf]
      %v362 = vunpack.c.l.s4 1983009808
      %v363 = vunpack.c.0.s8 %v362
      %v364 = vlaneseq
      %v365 = vshrl.u32 %v364, 7
      %v366 = vsub.s32 %v363, %v365
      %v367 = vrot.slane %v350, %v366
      %v368 = vrot.slane %v367, 1
      %v377 = vunpack.c.l.b16 %v352
      %v378 = vunpack.c.l.b16 %v353
      %v379 = vunpack.c.l.b16 %v354
      %v380 = vunpack.c.l.b16 %v355
      %v381 = vunpack.c.l.b16 %v356
      %v382 = vunpack.c.l.b16 %v357
      %v383 = vunpack.c.l.b16 %v358
      %v384 = vunpack.c.l.b16 %v359
      %v385 = vpack.c.b16 %v378, %v377
      %v386 = vpack.c.b16 %v380, %v379
      %v387 = vpack.c.b16 %v382, %v381
      %v388 = vpack.c.b16 %v384, %v383
      %v390 = vsel %vm219, %v368, 0
      %v393 = vsel %vm219, %v385, 0
      %v396 = vsel %vm219, %v386, 0
      %v399 = vsel %vm219, %v387, 0
      %v402 = vsel %vm219, %v388, 0
      %404 = vmatprep.subr.bf16.mxu0 0
      %405 = vmatpush1.bf16.xpose.msra.mxu0 %v393
      %406 = vmatprep.subr.bf16.mxu0 0
      %407 = vmatpush1.bf16.xpose.msra.mxu0 %v396
      %408 = vmatprep.subr.bf16.mxu0 0
      %409 = vmatpush1.bf16.xpose.msra.mxu0 %v399
      %410 = vmatprep.subr.bf16.mxu0 0
      %411 = vmatpush1.bf16.xpose.msra.mxu0 %v402
      %412 = vmatprep.subr.bf16.mxu0 0
      %413 = vmatpush1.bf16.xpose.msra.mxu0 0
      %414 = vmatprep.subr.bf16.mxu0 0
      %415 = vmatpush1.bf16.xpose.msra.mxu0 0
      %416 = vmatprep.subr.bf16.mxu0 0
      %417 = vmatpush1.bf16.xpose.msra.mxu0 0
      %418 = vmatprep.subr.bf16.mxu0 0
      %419 = vmatpush1.bf16.xpose.msra.mxu0 0
      %420 = vmatprep.subr.bf16.mxu0 0
      %421 = vmatpush1.bf16.xpose.msra.mxu0 0
      %422 = vmatprep.subr.bf16.mxu0 0
      %423 = vmatpush1.bf16.xpose.msra.mxu0 0
      %424 = vmatprep.subr.bf16.mxu0 0
      %425 = vmatpush1.bf16.xpose.msra.mxu0 0
      %426 = vmatprep.subr.bf16.mxu0 0
      %427 = vmatpush1.bf16.xpose.msra.mxu0 0
      %428 = vmatprep.subr.bf16.mxu0 0
      %429 = vmatpush1.bf16.xpose.msra.mxu0 0
      %430 = vmatprep.subr.bf16.mxu0 0
      %431 = vmatpush1.bf16.xpose.msra.mxu0 0
      %432 = vmatprep.subr.bf16.mxu0 0
      %433 = vmatpush1.bf16.xpose.msra.mxu0 0
      %434 = vmatprep.subr.bf16.mxu0 0
      %435 = vmatpush1.bf16.xpose.msra.mxu0 0
      %436 = vmatprep.mubr.bf16.mxu0 0
      %437 = vmatmul.mubr.bf16.gmra.mrb[0].mxu0 %v390
      %v438 = vpop.f32.mrb[0].mxu0
      %v439 = vadd.f32 0.0, %v438
      %v440 = vpop.f32.mrb[0].mxu0
      %v441 = vpop.f32.mrb[0].mxu0
      %v442 = vpop.f32.mrb[0].mxu0
      %443 = vdwg.mxu0
      %v444 = vadd.f32 %v345, %v439
      %s445 = scalar_lea.vmem %s163, 2
      %v446 = vld [vmem:[%s445] sm:$0x1]
      %s447 = scalar_lea.vmem %s1, 96
      %v448 = vld [vmem:[%s447] sm:$0xf]
      %v449 = vld [vmem:[%s447 + $0x4] sm:$0xf]
      %v450 = vld [vmem:[%s447 + $0x8] sm:$0xf]
      %v451 = vld [vmem:[%s447 + $0xc] sm:$0xf]
      %v452 = vld [vmem:[%s447 + $0x10] sm:$0xf]
      %v453 = vld [vmem:[%s447 + $0x14] sm:$0xf]
      %v454 = vld [vmem:[%s447 + $0x18] sm:$0xf]
      %v455 = vld [vmem:[%s447 + $0x1c] sm:$0xf]
      %v464 = vunpack.c.l.b16 %v448
      %v465 = vunpack.c.l.b16 %v449
      %v466 = vunpack.c.l.b16 %v450
      %v467 = vunpack.c.l.b16 %v451
      %v468 = vunpack.c.l.b16 %v452
      %v469 = vunpack.c.l.b16 %v453
      %v470 = vunpack.c.l.b16 %v454
      %v471 = vunpack.c.l.b16 %v455
      %v472 = vpack.c.b16 %v465, %v464
      %v473 = vpack.c.b16 %v467, %v466
      %v474 = vpack.c.b16 %v469, %v468
      %v475 = vpack.c.b16 %v471, %v470
      %v477 = vsel %vm219, %v446, 0
      %v480 = vsel %vm219, %v472, 0
      %v483 = vsel %vm219, %v473, 0
      %v486 = vsel %vm219, %v474, 0
      %v489 = vsel %vm219, %v475, 0
      %491 = vmatprep.subr.bf16.mxu0 0
      %492 = vmatpush1.bf16.xpose.msra.mxu0 %v480
      %493 = vmatprep.subr.bf16.mxu0 0
      %494 = vmatpush1.bf16.xpose.msra.mxu0 %v483
      %495 = vmatprep.subr.bf16.mxu0 0
      %496 = vmatpush1.bf16.xpose.msra.mxu0 %v486
      %497 = vmatprep.subr.bf16.mxu0 0
      %498 = vmatpush1.bf16.xpose.msra.mxu0 %v489
      %499 = vmatprep.subr.bf16.mxu0 0
      %500 = vmatpush1.bf16.xpose.msra.mxu0 0
      %501 = vmatprep.subr.bf16.mxu0 0
      %502 = vmatpush1.bf16.xpose.msra.mxu0 0
      %503 = vmatprep.subr.bf16.mxu0 0
      %504 = vmatpush1.bf16.xpose.msra.mxu0 0
      %505 = vmatprep.subr.bf16.mxu0 0
      %506 = vmatpush1.bf16.xpose.msra.mxu0 0
      %507 = vmatprep.subr.bf16.mxu0 0
      %508 = vmatpush1.bf16.xpose.msra.mxu0 0
      %509 = vmatprep.subr.bf16.mxu0 0
      %510 = vmatpush1.bf16.xpose.msra.mxu0 0
      %511 = vmatprep.subr.bf16.mxu0 0
      %512 = vmatpush1.bf16.xpose.msra.mxu0 0
      %513 = vmatprep.subr.bf16.mxu0 0
      %514 = vmatpush1.bf16.xpose.msra.mxu0 0
      %515 = vmatprep.subr.bf16.mxu0 0
      %516 = vmatpush1.bf16.xpose.msra.mxu0 0
      %517 = vmatprep.subr.bf16.mxu0 0
      %518 = vmatpush1.bf16.xpose.msra.mxu0 0
      %519 = vmatprep.subr.bf16.mxu0 0
      %520 = vmatpush1.bf16.xpose.msra.mxu0 0
      %521 = vmatprep.subr.bf16.mxu0 0
      %522 = vmatpush1.bf16.xpose.msra.mxu0 0
      %523 = vmatprep.mubr.bf16.mxu0 0
      %524 = vmatmul.mubr.bf16.gmra.mrb[0].mxu0 %v477
      %v525 = vpop.f32.mrb[0].mxu0
      %v526 = vadd.f32 0.0, %v525
      %v527 = vpop.f32.mrb[0].mxu0
      %v528 = vpop.f32.mrb[0].mxu0
      %v529 = vpop.f32.mrb[0].mxu0
      %530 = vdwg.mxu0
      %v531 = vadd.f32 %v444, %v526
      %v532 = vld [vmem:[%s445] sm:$0x1]
      %s533 = scalar_lea.vmem %s1, 128
      %v534 = vld [vmem:[%s533] sm:$0xf]
      %v535 = vld [vmem:[%s533 + $0x4] sm:$0xf]
      %v536 = vld [vmem:[%s533 + $0x8] sm:$0xf]
      %v537 = vld [vmem:[%s533 + $0xc] sm:$0xf]
      %v538 = vld [vmem:[%s533 + $0x10] sm:$0xf]
      %v539 = vld [vmem:[%s533 + $0x14] sm:$0xf]
      %v540 = vld [vmem:[%s533 + $0x18] sm:$0xf]
      %v541 = vld [vmem:[%s533 + $0x1c] sm:$0xf]
      %v544 = vunpack.c.l.s4 1983009808
      %v545 = vunpack.c.0.s8 %v544
      %v546 = vlaneseq
      %v547 = vshrl.u32 %v546, 7
      %v548 = vsub.s32 %v545, %v547
      %v549 = vrot.slane %v532, %v548
      %v551 = vshrl.u32 %v549, 16
      %v561 = vunpack.c.l.b16 %v534
      %v562 = vunpack.c.l.b16 %v535
      %v563 = vunpack.c.l.b16 %v536
      %v564 = vunpack.c.l.b16 %v537
      %v565 = vunpack.c.l.b16 %v538
      %v566 = vunpack.c.l.b16 %v539
      %v567 = vunpack.c.l.b16 %v540
      %v568 = vunpack.c.l.b16 %v541
      %v569 = vpack.c.b16 %v562, %v561
      %v570 = vpack.c.b16 %v564, %v563
      %v571 = vpack.c.b16 %v566, %v565
      %v572 = vpack.c.b16 %v568, %v567
      %v574 = vsel %vm219, %v551, 0
      %v577 = vsel %vm219, %v569, 0
      %v580 = vsel %vm219, %v570, 0
      %v583 = vsel %vm219, %v571, 0
      %v586 = vsel %vm219, %v572, 0
      %588 = vmatprep.subr.bf16.mxu0 0
      %589 = vmatpush1.bf16.xpose.msra.mxu0 %v577
      %590 = vmatprep.subr.bf16.mxu0 0
      %591 = vmatpush1.bf16.xpose.msra.mxu0 %v580
      %592 = vmatprep.subr.bf16.mxu0 0
      %593 = vmatpush1.bf16.xpose.msra.mxu0 %v583
      %594 = vmatprep.subr.bf16.mxu0 0
      %595 = vmatpush1.bf16.xpose.msra.mxu0 %v586
      %596 = vmatprep.subr.bf16.mxu0 0
      %597 = vmatpush1.bf16.xpose.msra.mxu0 0
      %598 = vmatprep.subr.bf16.mxu0 0
      %599 = vmatpush1.bf16.xpose.msra.mxu0 0
      %600 = vmatprep.subr.bf16.mxu0 0
      %601 = vmatpush1.bf16.xpose.msra.mxu0 0
      %602 = vmatprep.subr.bf16.mxu0 0
      %603 = vmatpush1.bf16.xpose.msra.mxu0 0
      %604 = vmatprep.subr.bf16.mxu0 0
      %605 = vmatpush1.bf16.xpose.msra.mxu0 0
      %606 = vmatprep.subr.bf16.mxu0 0
      %607 = vmatpush1.bf16.xpose.msra.mxu0 0
      %608 = vmatprep.subr.bf16.mxu0 0
      %609 = vmatpush1.bf16.xpose.msra.mxu0 0
      %610 = vmatprep.subr.bf16.mxu0 0
      %611 = vmatpush1.bf16.xpose.msra.mxu0 0
      %612 = vmatprep.subr.bf16.mxu0 0
      %613 = vmatpush1.bf16.xpose.msra.mxu0 0
      %614 = vmatprep.subr.bf16.mxu0 0
      %615 = vmatpush1.bf16.xpose.msra.mxu0 0
      %616 = vmatprep.subr.bf16.mxu0 0
      %617 = vmatpush1.bf16.xpose.msra.mxu0 0
      %618 = vmatprep.subr.bf16.mxu0 0
      %619 = vmatpush1.bf16.xpose.msra.mxu0 0
      %620 = vmatprep.mubr.bf16.mxu0 0
      %621 = vmatmul.mubr.bf16.gmra.mrb[0].mxu0 %v574
      %v622 = vpop.f32.mrb[0].mxu0
      %v623 = vadd.f32 0.0, %v622
      %v624 = vpop.f32.mrb[0].mxu0
      %v625 = vpop.f32.mrb[0].mxu0
      %v626 = vpop.f32.mrb[0].mxu0
      %627 = vdwg.mxu0
      %v628 = vadd.f32 %v531, %v623
      %v629 = vld [vmem:[%s445] sm:$0x2]
      %s630 = scalar_lea.vmem %s1, 160
      %v631 = vld [vmem:[%s630] sm:$0xf]
      %v632 = vld [vmem:[%s630 + $0x4] sm:$0xf]
      %v633 = vld [vmem:[%s630 + $0x8] sm:$0xf]
      %v634 = vld [vmem:[%s630 + $0xc] sm:$0xf]
      %v635 = vld [vmem:[%s630 + $0x10] sm:$0xf]
      %v636 = vld [vmem:[%s630 + $0x14] sm:$0xf]
      %v637 = vld [vmem:[%s630 + $0x18] sm:$0xf]
      %v638 = vld [vmem:[%s630 + $0x1c] sm:$0xf]
      %v641 = vunpack.c.l.s4 1983009808
      %v642 = vunpack.c.0.s8 %v641
      %v643 = vlaneseq
      %v644 = vshrl.u32 %v643, 7
      %v645 = vsub.s32 %v642, %v644
      %v646 = vrot.slane %v629, %v645
      %v647 = vrot.slane %v646, 1
      %v656 = vunpack.c.l.b16 %v631
      %v657 = vunpack.c.l.b16 %v632
      %v658 = vunpack.c.l.b16 %v633
      %v659 = vunpack.c.l.b16 %v634
      %v660 = vunpack.c.l.b16 %v635
      %v661 = vunpack.c.l.b16 %v636
      %v662 = vunpack.c.l.b16 %v637
      %v663 = vunpack.c.l.b16 %v638
      %v664 = vpack.c.b16 %v657, %v656
      %v665 = vpack.c.b16 %v659, %v658
      %v666 = vpack.c.b16 %v661, %v660
      %v667 = vpack.c.b16 %v663, %v662
      %v669 = vsel %vm219, %v647, 0
      %v672 = vsel %vm219, %v664, 0
      %v675 = vsel %vm219, %v665, 0
      %v678 = vsel %vm219, %v666, 0
      %v681 = vsel %vm219, %v667, 0
      %683 = vmatprep.subr.bf16.mxu0 0
      %684 = vmatpush1.bf16.xpose.msra.mxu0 %v672
      %685 = vmatprep.subr.bf16.mxu0 0
      %686 = vmatpush1.bf16.xpose.msra.mxu0 %v675
      %687 = vmatprep.subr.bf16.mxu0 0
      %688 = vmatpush1.bf16.xpose.msra.mxu0 %v678
      %689 = vmatprep.subr.bf16.mxu0 0
      %690 = vmatpush1.bf16.xpose.msra.mxu0 %v681
      %691 = vmatprep.subr.bf16.mxu0 0
      %692 = vmatpush1.bf16.xpose.msra.mxu0 0
      %693 = vmatprep.subr.bf16.mxu0 0
      %694 = vmatpush1.bf16.xpose.msra.mxu0 0
      %695 = vmatprep.subr.bf16.mxu0 0
      %696 = vmatpush1.bf16.xpose.msra.mxu0 0
      %697 = vmatprep.subr.bf16.mxu0 0
      %698 = vmatpush1.bf16.xpose.msra.mxu0 0
      %699 = vmatprep.subr.bf16.mxu0 0
      %700 = vmatpush1.bf16.xpose.msra.mxu0 0
      %701 = vmatprep.subr.bf16.mxu0 0
      %702 = vmatpush1.bf16.xpose.msra.mxu0 0
      %703 = vmatprep.subr.bf16.mxu0 0
      %704 = vmatpush1.bf16.xpose.msra.mxu0 0
      %705 = vmatprep.subr.bf16.mxu0 0
      %706 = vmatpush1.bf16.xpose.msra.mxu0 0
      %707 = vmatprep.subr.bf16.mxu0 0
      %708 = vmatpush1.bf16.xpose.msra.mxu0 0
      %709 = vmatprep.subr.bf16.mxu0 0
      %710 = vmatpush1.bf16.xpose.msra.mxu0 0
      %711 = vmatprep.subr.bf16.mxu0 0
      %712 = vmatpush1.bf16.xpose.msra.mxu0 0
      %713 = vmatprep.subr.bf16.mxu0 0
      %714 = vmatpush1.bf16.xpose.msra.mxu0 0
      %715 = vmatprep.mubr.bf16.mxu0 0
      %716 = vmatmul.mubr.bf16.gmra.mrb[0].mxu0 %v669
      %v717 = vpop.f32.mrb[0].mxu0
      %v718 = vadd.f32 0.0, %v717
      %v719 = vpop.f32.mrb[0].mxu0
      %v720 = vpop.f32.mrb[0].mxu0
      %v721 = vpop.f32.mrb[0].mxu0
      %722 = vdwg.mxu0
      %v723 = vadd.f32 %v628, %v718
      %s724 = scalar_lea.vmem %s163, 4
      %v725 = vld [vmem:[%s724] sm:$0x1]
      %s726 = scalar_lea.vmem %s1, 192
      %v727 = vld [vmem:[%s726] sm:$0xf]
      %v728 = vld [vmem:[%s726 + $0x4] sm:$0xf]
      %v729 = vld [vmem:[%s726 + $0x8] sm:$0xf]
      %v730 = vld [vmem:[%s726 + $0xc] sm:$0xf]
      %v731 = vld [vmem:[%s726 + $0x10] sm:$0xf]
      %v732 = vld [vmem:[%s726 + $0x14] sm:$0xf]
      %v733 = vld [vmem:[%s726 + $0x18] sm:$0xf]
      %v734 = vld [vmem:[%s726 + $0x1c] sm:$0xf]
      %v743 = vunpack.c.l.b16 %v727
      %v744 = vunpack.c.l.b16 %v728
      %v745 = vunpack.c.l.b16 %v729
      %v746 = vunpack.c.l.b16 %v730
      %v747 = vunpack.c.l.b16 %v731
      %v748 = vunpack.c.l.b16 %v732
      %v749 = vunpack.c.l.b16 %v733
      %v750 = vunpack.c.l.b16 %v734
      %v751 = vpack.c.b16 %v744, %v743
      %v752 = vpack.c.b16 %v746, %v745
      %v753 = vpack.c.b16 %v748, %v747
      %v754 = vpack.c.b16 %v750, %v749
      %v756 = vsel %vm219, %v725, 0
      %v759 = vsel %vm219, %v751, 0
      %v762 = vsel %vm219, %v752, 0
      %v765 = vsel %vm219, %v753, 0
      %v768 = vsel %vm219, %v754, 0
      %770 = vmatprep.subr.bf16.mxu0 0
      %771 = vmatpush1.bf16.xpose.msra.mxu0 %v759
      %772 = vmatprep.subr.bf16.mxu0 0
      %773 = vmatpush1.bf16.xpose.msra.mxu0 %v762
      %774 = vmatprep.subr.bf16.mxu0 0
      %775 = vmatpush1.bf16.xpose.msra.mxu0 %v765
      %776 = vmatprep.subr.bf16.mxu0 0
      %777 = vmatpush1.bf16.xpose.msra.mxu0 %v768
      %778 = vmatprep.subr.bf16.mxu0 0
      %779 = vmatpush1.bf16.xpose.msra.mxu0 0
      %780 = vmatprep.subr.bf16.mxu0 0
      %781 = vmatpush1.bf16.xpose.msra.mxu0 0
      %782 = vmatprep.subr.bf16.mxu0 0
      %783 = vmatpush1.bf16.xpose.msra.mxu0 0
      %784 = vmatprep.subr.bf16.mxu0 0
      %785 = vmatpush1.bf16.xpose.msra.mxu0 0
      %786 = vmatprep.subr.bf16.mxu0 0
      %787 = vmatpush1.bf16.xpose.msra.mxu0 0
      %788 = vmatprep.subr.bf16.mxu0 0
      %789 = vmatpush1.bf16.xpose.msra.mxu0 0
      %790 = vmatprep.subr.bf16.mxu0 0
      %791 = vmatpush1.bf16.xpose.msra.mxu0 0
      %792 = vmatprep.subr.bf16.mxu0 0
      %793 = vmatpush1.bf16.xpose.msra.mxu0 0
      %794 = vmatprep.subr.bf16.mxu0 0
      %795 = vmatpush1.bf16.xpose.msra.mxu0 0
      %796 = vmatprep.subr.bf16.mxu0 0
      %797 = vmatpush1.bf16.xpose.msra.mxu0 0
      %798 = vmatprep.subr.bf16.mxu0 0
      %799 = vmatpush1.bf16.xpose.msra.mxu0 0
      %800 = vmatprep.subr.bf16.mxu0 0
      %801 = vmatpush1.bf16.xpose.msra.mxu0 0
      %802 = vmatprep.mubr.bf16.mxu0 0
      %803 = vmatmul.mubr.bf16.gmra.mrb[0].mxu0 %v756
      %v804 = vpop.f32.mrb[0].mxu0
      %v805 = vadd.f32 0.0, %v804
      %v806 = vpop.f32.mrb[0].mxu0
      %v807 = vpop.f32.mrb[0].mxu0
      %v808 = vpop.f32.mrb[0].mxu0
      %809 = vdwg.mxu0
      %v810 = vadd.f32 %v723, %v805
      %v811 = vld [vmem:[%s724] sm:$0x1]
      %s812 = scalar_lea.vmem %s1, 224
      %v813 = vld [vmem:[%s812] sm:$0xf]
      %v814 = vld [vmem:[%s812 + $0x4] sm:$0xf]
      %v815 = vld [vmem:[%s812 + $0x8] sm:$0xf]
      %v816 = vld [vmem:[%s812 + $0xc] sm:$0xf]
      %v817 = vld [vmem:[%s812 + $0x10] sm:$0xf]
      %v818 = vld [vmem:[%s812 + $0x14] sm:$0xf]
      %v819 = vld [vmem:[%s812 + $0x18] sm:$0xf]
      %v820 = vld [vmem:[%s812 + $0x1c] sm:$0xf]
      %v823 = vunpack.c.l.s4 1983009808
      %v824 = vunpack.c.0.s8 %v823
      %v825 = vlaneseq
      %v826 = vshrl.u32 %v825, 7
      %v827 = vsub.s32 %v824, %v826
      %v828 = vrot.slane %v811, %v827
      %v830 = vshrl.u32 %v828, 16
      %v840 = vunpack.c.l.b16 %v813
      %v841 = vunpack.c.l.b16 %v814
      %v842 = vunpack.c.l.b16 %v815
      %v843 = vunpack.c.l.b16 %v816
      %v844 = vunpack.c.l.b16 %v817
      %v845 = vunpack.c.l.b16 %v818
      %v846 = vunpack.c.l.b16 %v819
      %v847 = vunpack.c.l.b16 %v820
      %v848 = vpack.c.b16 %v841, %v840
      %v849 = vpack.c.b16 %v843, %v842
      %v850 = vpack.c.b16 %v845, %v844
      %v851 = vpack.c.b16 %v847, %v846
      %v853 = vsel %vm219, %v830, 0
      %v856 = vsel %vm219, %v848, 0
      %v859 = vsel %vm219, %v849, 0
      %v862 = vsel %vm219, %v850, 0
      %v865 = vsel %vm219, %v851, 0
      %867 = vmatprep.subr.bf16.mxu0 0
      %868 = vmatpush1.bf16.xpose.msra.mxu0 %v856
      %869 = vmatprep.subr.bf16.mxu0 0
      %870 = vmatpush1.bf16.xpose.msra.mxu0 %v859
      %871 = vmatprep.subr.bf16.mxu0 0
      %872 = vmatpush1.bf16.xpose.msra.mxu0 %v862
      %873 = vmatprep.subr.bf16.mxu0 0
      %874 = vmatpush1.bf16.xpose.msra.mxu0 %v865
      %875 = vmatprep.subr.bf16.mxu0 0
      %876 = vmatpush1.bf16.xpose.msra.mxu0 0
      %877 = vmatprep.subr.bf16.mxu0 0
      %878 = vmatpush1.bf16.xpose.msra.mxu0 0
      %879 = vmatprep.subr.bf16.mxu0 0
      %880 = vmatpush1.bf16.xpose.msra.mxu0 0
      %881 = vmatprep.subr.bf16.mxu0 0
      %882 = vmatpush1.bf16.xpose.msra.mxu0 0
      %883 = vmatprep.subr.bf16.mxu0 0
      %884 = vmatpush1.bf16.xpose.msra.mxu0 0
      %885 = vmatprep.subr.bf16.mxu0 0
      %886 = vmatpush1.bf16.xpose.msra.mxu0 0
      %887 = vmatprep.subr.bf16.mxu0 0
      %888 = vmatpush1.bf16.xpose.msra.mxu0 0
      %889 = vmatprep.subr.bf16.mxu0 0
      %890 = vmatpush1.bf16.xpose.msra.mxu0 0
      %891 = vmatprep.subr.bf16.mxu0 0
      %892 = vmatpush1.bf16.xpose.msra.mxu0 0
      %893 = vmatprep.subr.bf16.mxu0 0
      %894 = vmatpush1.bf16.xpose.msra.mxu0 0
      %895 = vmatprep.subr.bf16.mxu0 0
      %896 = vmatpush1.bf16.xpose.msra.mxu0 0
      %897 = vmatprep.subr.bf16.mxu0 0
      %898 = vmatpush1.bf16.xpose.msra.mxu0 0
      %899 = vmatprep.mubr.bf16.mxu0 0
      %900 = vmatmul.mubr.bf16.gmra.mrb[0].mxu0 %v853
      %v901 = vpop.f32.mrb[0].mxu0
      %v902 = vadd.f32 0.0, %v901
      %v903 = vpop.f32.mrb[0].mxu0
      %v904 = vpop.f32.mrb[0].mxu0
      %v905 = vpop.f32.mrb[0].mxu0
      %906 = vdwg.mxu0
      %v907 = vadd.f32 %v810, %v902
      %v908 = vld [vmem:[%s724] sm:$0x2]
      %s909 = scalar_lea.vmem %s1, 256
      %v910 = vld [vmem:[%s909] sm:$0xf]
      %v911 = vld [vmem:[%s909 + $0x4] sm:$0xf]
      %v912 = vld [vmem:[%s909 + $0x8] sm:$0xf]
      %v913 = vld [vmem:[%s909 + $0xc] sm:$0xf]
      %v914 = vld [vmem:[%s909 + $0x10] sm:$0xf]
      %v915 = vld [vmem:[%s909 + $0x14] sm:$0xf]
      %v916 = vld [vmem:[%s909 + $0x18] sm:$0xf]
      %v917 = vld [vmem:[%s909 + $0x1c] sm:$0xf]
      %v920 = vunpack.c.l.s4 1983009808
      %v921 = vunpack.c.0.s8 %v920
      %v922 = vlaneseq
      %v923 = vshrl.u32 %v922, 7
      %v924 = vsub.s32 %v921, %v923
      %v925 = vrot.slane %v908, %v924
      %v926 = vrot.slane %v925, 1
      %v935 = vunpack.c.l.b16 %v910
      %v936 = vunpack.c.l.b16 %v911
      %v937 = vunpack.c.l.b16 %v912
      %v938 = vunpack.c.l.b16 %v913
      %v939 = vunpack.c.l.b16 %v914
      %v940 = vunpack.c.l.b16 %v915
      %v941 = vunpack.c.l.b16 %v916
      %v942 = vunpack.c.l.b16 %v917
      %v943 = vpack.c.b16 %v936, %v935
      %v944 = vpack.c.b16 %v938, %v937
      %v945 = vpack.c.b16 %v940, %v939
      %v946 = vpack.c.b16 %v942, %v941
      %v948 = vsel %vm219, %v926, 0
      %v951 = vsel %vm219, %v943, 0
      %v954 = vsel %vm219, %v944, 0
      %v957 = vsel %vm219, %v945, 0
      %v960 = vsel %vm219, %v946, 0
      %962 = vmatprep.subr.bf16.mxu0 0
      %963 = vmatpush1.bf16.xpose.msra.mxu0 %v951
      %964 = vmatprep.subr.bf16.mxu0 0
      %965 = vmatpush1.bf16.xpose.msra.mxu0 %v954
      %966 = vmatprep.subr.bf16.mxu0 0
      %967 = vmatpush1.bf16.xpose.msra.mxu0 %v957
      %968 = vmatprep.subr.bf16.mxu0 0
      %969 = vmatpush1.bf16.xpose.msra.mxu0 %v960
      %970 = vmatprep.subr.bf16.mxu0 0
      %971 = vmatpush1.bf16.xpose.msra.mxu0 0
      %972 = vmatprep.subr.bf16.mxu0 0
      %973 = vmatpush1.bf16.xpose.msra.mxu0 0
      %974 = vmatprep.subr.bf16.mxu0 0
      %975 = vmatpush1.bf16.xpose.msra.mxu0 0
      %976 = vmatprep.subr.bf16.mxu0 0
      %977 = vmatpush1.bf16.xpose.msra.mxu0 0
      %978 = vmatprep.subr.bf16.mxu0 0
      %979 = vmatpush1.bf16.xpose.msra.mxu0 0
      %980 = vmatprep.subr.bf16.mxu0 0
      %981 = vmatpush1.bf16.xpose.msra.mxu0 0
      %982 = vmatprep.subr.bf16.mxu0 0
      %983 = vmatpush1.bf16.xpose.msra.mxu0 0
      %984 = vmatprep.subr.bf16.mxu0 0
      %985 = vmatpush1.bf16.xpose.msra.mxu0 0
      %986 = vmatprep.subr.bf16.mxu0 0
      %987 = vmatpush1.bf16.xpose.msra.mxu0 0
      %988 = vmatprep.subr.bf16.mxu0 0
      %989 = vmatpush1.bf16.xpose.msra.mxu0 0
      %990 = vmatprep.subr.bf16.mxu0 0
      %991 = vmatpush1.bf16.xpose.msra.mxu0 0
      %992 = vmatprep.subr.bf16.mxu0 0
      %993 = vmatpush1.bf16.xpose.msra.mxu0 0
      %994 = vmatprep.mubr.bf16.mxu0 0
      %995 = vmatmul.mubr.bf16.gmra.mrb[0].mxu0 %v948
      %v996 = vpop.f32.mrb[0].mxu0
      %v997 = vadd.f32 0.0, %v996
      %v998 = vpop.f32.mrb[0].mxu0
      %v999 = vpop.f32.mrb[0].mxu0
      %v1000 = vpop.f32.mrb[0].mxu0
      %1001 = vdwg.mxu0
      %v1002 = vadd.f32 %v907, %v997
      %v1003 = vadd.f32 %v1002, %v168
      %v1004 = vmax.f32 %v1003, 0.0
      %v1005 = vpack.c.bf16 %v1004, %v1004
      %vm1006 = vcmask 516096
      %vm1007 = vsmask.f32 256
      %vm1008 = vmand %vm1006, %vm1007
      %v1009 = vld [vmem:[%s166] sm:$0x1]
      %v1010 = vsel %vm1008, %v1005, %v1009
      %1011 = vst [vmem:[%s166] sm:$0x1] %v1010
      %p1012 = scmp.lt.s32.totalorder %s14, 1
      %s1013 = scalar_select %p1012, %s14, 1
      %s1014 = scalar_lea.vmem %s3, %s1013
      // Predicated region
      $region33: #{nature_cnn_forward.6} parent=31 // pred_check
        %p1015 = pneg %p100
      $region34: #{nature_cnn_forward.6} parent=31 // pred_check_branch
        %1017 = sbr.rel (%p1015) target = $region36
      $region35: #{nature_cnn_forward.6} parent=31 // pred_region
        _
      $region36: #{nature_cnn_forward.6} parent=31 // pred_fallthru
        _
    $region32: #{nature_cnn_forward.6} parent=5 // pred_fallthru
      _
    %p1018 = scmp.le.s32.totalorder 2, %s9
    // Predicated region
    $region37: #{nature_cnn_forward.6} parent=5 // pred_check
      %p1019 = pneg %p1018
    $region38: #{nature_cnn_forward.6} parent=5 // pred_check_branch
      %1021 = sbr.rel (%p1019) target = $region40
    $region39: #{nature_cnn_forward.6} parent=5 // pred_region
      %s1022 = ssub.s32 %s9, 2
      // Predicated region
      $region41: #{nature_cnn_forward.6} parent=39 // pred_check
        %p1023 = pneg %p106
      $region42: #{nature_cnn_forward.6} parent=39 // pred_check_branch
        %1025 = sbr.rel (%p1023) target = $region44
      $region43: #{nature_cnn_forward.6} parent=39 // pred_region
        %p1026 = scmp.lt.s32.totalorder %s15, 1
        %s1027 = scalar_select %p1026, %s15, 1
        %s1028 = scalar_lea.vmem %s3, %s1027
      $region44: #{nature_cnn_forward.6} parent=39 // pred_fallthru
        _
    $region40: #{nature_cnn_forward.6} parent=5 // pred_fallthru
      _
  $region6: #{nature_cnn_forward.6} parent=0 // loop_footer
    %s13 = sadd.s32 1, %s9
  $region7: #{nature_cnn_forward.6} parent=0 // loop_footer_branch
    %8 = sbr.rel target = $region3
  $region8: #{nature_cnn_forward.6} parent=0 // loop_exit
    _

// kernel: nature_cnn_forward.7
$region0: #{nature_cnn_forward.7}
  #allocation0 [shape = 'u32[]', space=smem, size = 0x4, offset = 0x4, fixed_abs, tag = 'smem constant byte address 0x4 - core index']
  #allocation1 [shape = 'u32[144,128]{1,0:T(1,128)}', space=vmem, size = 0x12000, scoped, tag = 'internal scratch']
  %s0 = inlined_call_operand.vmem [shape: bf16[2,64], index: 0, kind: input, shape index: {}]
  %s1 = inlined_call_operand.vmem [shape: bf16[64,512], index: 1, kind: input, shape index: {}]
  %s2 = inlined_call_operand.vmem [shape: f32[1,512], index: 2, kind: input, shape index: {}]
  %s3 = inlined_call_operand.vmem [shape: bf16[512,128], index: 3, kind: input, shape index: {}]
  %s4 = inlined_call_operand.vmem [shape: f32[1,128], index: 4, kind: input, shape index: {}]
  %s5 = inlined_call_operand.hbm [shape: f32[2,128], index: 5, kind: output, shape index: {}]
  %s6 = sld [smem:[#allocation0]]
  $region30: #{nature_cnn_forward.7} parent=0
    _
  %s8 = ssub.s32 1, %s6
  %s9 = scalar_select 0, %s8, %s6
  $region1: #{nature_cnn_forward.7} parent=0
    #allocation2 [shape = 'u8[1024]{0}', space=vmem, size = 0x400, scoped, tag = 'output window, operand 0, single buffered']
    #allocation3 [shape = 's32[1]{0}', space=sflag, size = 0x4, scoped, tag = 'scoped memory for nature_cnn_forward.7']
    %10 = vsyncpa [#allocation3], 0
    // Predicated region
    $region2: #{nature_cnn_forward.7} parent=1 // pred_check
      _
    $region3: #{nature_cnn_forward.7} parent=1 // pred_check_branch
      %12 = sbr.rel (0) target = $region5
    $region4: #{nature_cnn_forward.7} parent=1 // pred_region
      _
    $region5: #{nature_cnn_forward.7} parent=1 // pred_fallthru
      _
    // Predicated region
    $region6: #{nature_cnn_forward.7} parent=1 // pred_check
      _
    $region7: #{nature_cnn_forward.7} parent=1 // pred_check_branch
      %14 = sbr.rel (0) target = $region9
    $region8: #{nature_cnn_forward.7} parent=1 // pred_region
      _
    $region9: #{nature_cnn_forward.7} parent=1 // pred_fallthru
      _
    // Predicated region
    $region10: #{nature_cnn_forward.7} parent=1 // pred_check
      _
    $region11: #{nature_cnn_forward.7} parent=1 // pred_check_branch
      %16 = sbr.rel (0) target = $region13
    $region12: #{nature_cnn_forward.7} parent=1 // pred_region
      _
    $region13: #{nature_cnn_forward.7} parent=1 // pred_fallthru
      _
    // Predicated region
    $region14: #{nature_cnn_forward.7} parent=1 // pred_check
      _
    $region15: #{nature_cnn_forward.7} parent=1 // pred_check_branch
      %18 = sbr.rel (0) target = $region17
    $region16: #{nature_cnn_forward.7} parent=1 // pred_region
      _
    $region17: #{nature_cnn_forward.7} parent=1 // pred_fallthru
      _
    // Predicated region
    $region18: #{nature_cnn_forward.7} parent=1 // pred_check
      _
    $region19: #{nature_cnn_forward.7} parent=1 // pred_check_branch
      %20 = sbr.rel (0) target = $region21
    $region20: #{nature_cnn_forward.7} parent=1 // pred_region
      _
    $region21: #{nature_cnn_forward.7} parent=1 // pred_fallthru
      _
    %v22 = vld [vmem:[%s0] sm:$0x1]
    %v23 = vld [vmem:[%s1] sm:$0xff]
    %v24 = vld [vmem:[%s1 + $0x8] sm:$0xff]
    %v25 = vld [vmem:[%s1 + $0x10] sm:$0xff]
    %v26 = vld [vmem:[%s1 + $0x18] sm:$0xff]
    %v27 = vld [vmem:[%s1 + $0x20] sm:$0xff]
    %v28 = vld [vmem:[%s1 + $0x28] sm:$0xff]
    %v29 = vld [vmem:[%s1 + $0x30] sm:$0xff]
    %v30 = vld [vmem:[%s1 + $0x38] sm:$0xff]
    %v31 = vld [vmem:[%s1 + $0x40] sm:$0xff]
    %v32 = vld [vmem:[%s1 + $0x48] sm:$0xff]
    %v33 = vld [vmem:[%s1 + $0x50] sm:$0xff]
    %v34 = vld [vmem:[%s1 + $0x58] sm:$0xff]
    %v35 = vld [vmem:[%s1 + $0x60] sm:$0xff]
    %v36 = vld [vmem:[%s1 + $0x68] sm:$0xff]
    %v37 = vld [vmem:[%s1 + $0x70] sm:$0xff]
    %v38 = vld [vmem:[%s1 + $0x78] sm:$0xff]
    %v39 = vld [vmem:[%s2] sm:$0xf]
    %v41 = vlaneseq
    %v42 = vshrl.u32 %v41, 7
    %v43 = vsub.s32 0, %v42
    %v44 = vrot.slane %v39, %v43
    %v45 = vlaneseq
    %v46 = vshrl.u32 %v45, 7
    %v47 = vsub.s32 1, %v46
    %v48 = vrot.slane %v39, %v47
    %v49 = vlaneseq
    %v50 = vshrl.u32 %v49, 7
    %v51 = vsub.s32 2, %v50
    %v52 = vrot.slane %v39, %v51
    %v53 = vlaneseq
    %v54 = vshrl.u32 %v53, 7
    %v55 = vsub.s32 3, %v54
    %v56 = vrot.slane %v39, %v55
    %v77 = vunpack.c.l.b16 %v23
    %v78 = vunpack.c.h.b16 %v23
    %v79 = vunpack.c.l.b16 %v24
    %v80 = vunpack.c.h.b16 %v24
    %v81 = vunpack.c.l.b16 %v25
    %v82 = vunpack.c.h.b16 %v25
    %v83 = vunpack.c.l.b16 %v26
    %v84 = vunpack.c.h.b16 %v26
    %v85 = vunpack.c.l.b16 %v27
    %v86 = vunpack.c.h.b16 %v27
    %v87 = vunpack.c.l.b16 %v28
    %v88 = vunpack.c.h.b16 %v28
    %v89 = vunpack.c.l.b16 %v29
    %v90 = vunpack.c.h.b16 %v29
    %v91 = vunpack.c.l.b16 %v30
    %v92 = vunpack.c.h.b16 %v30
    %v93 = vunpack.c.l.b16 %v31
    %v94 = vunpack.c.h.b16 %v31
    %v95 = vunpack.c.l.b16 %v32
    %v96 = vunpack.c.h.b16 %v32
    %v97 = vunpack.c.l.b16 %v33
    %v98 = vunpack.c.h.b16 %v33
    %v99 = vunpack.c.l.b16 %v34
    %v100 = vunpack.c.h.b16 %v34
    %v101 = vunpack.c.l.b16 %v35
    %v102 = vunpack.c.h.b16 %v35
    %v103 = vunpack.c.l.b16 %v36
    %v104 = vunpack.c.h.b16 %v36
    %v105 = vunpack.c.l.b16 %v37
    %v106 = vunpack.c.h.b16 %v37
    %v107 = vunpack.c.l.b16 %v38
    %v108 = vunpack.c.h.b16 %v38
    %v109 = vpack.c.b16 %v81, %v77
    %v110 = vpack.c.b16 %v82, %v78
    %v111 = vpack.c.b16 %v83, %v79
    %v112 = vpack.c.b16 %v84, %v80
    %v113 = vpack.c.b16 %v89, %v85
    %v114 = vpack.c.b16 %v90, %v86
    %v115 = vpack.c.b16 %v91, %v87
    %v116 = vpack.c.b16 %v92, %v88
    %v117 = vpack.c.b16 %v97, %v93
    %v118 = vpack.c.b16 %v98, %v94
    %v119 = vpack.c.b16 %v99, %v95
    %v120 = vpack.c.b16 %v100, %v96
    %v121 = vpack.c.b16 %v105, %v101
    %v122 = vpack.c.b16 %v106, %v102
    %v123 = vpack.c.b16 %v107, %v103
    %v124 = vpack.c.b16 %v108, %v104
    %vm141 = vcmask 523264
    %v143 = vsel %vm141, %v22, 0
    %145 = vmatprep.subr.bf16.mxu0 %v110
    %146 = vmatpush1.bf16.msra.mxu0 %v109
    %147 = vmatprep.subr.bf16.mxu0 %v114
    %148 = vmatpush1.bf16.msra.mxu0 %v113
    %149 = vmatprep.subr.bf16.mxu0 %v118
    %150 = vmatpush1.bf16.msra.mxu0 %v117
    %151 = vmatprep.subr.bf16.mxu0 %v122
    %152 = vmatpush1.bf16.msra.mxu0 %v121
    %153 = vmatprep.subr.bf16.mxu0 0
    %154 = vmatpush1.bf16.msra.mxu0 0
    %155 = vmatprep.subr.bf16.mxu0 0
    %156 = vmatpush1.bf16.msra.mxu0 0
    %157 = vmatprep.subr.bf16.mxu0 0
    %158 = vmatpush1.bf16.msra.mxu0 0
    %159 = vmatprep.subr.bf16.mxu0 0
    %160 = vmatpush1.bf16.msra.mxu0 0
    %161 = vmatprep.subr.bf16.mxu0 0
    %162 = vmatpush1.bf16.msra.mxu0 0
    %163 = vmatprep.subr.bf16.mxu0 0
    %164 = vmatpush1.bf16.msra.mxu0 0
    %165 = vmatprep.subr.bf16.mxu0 0
    %166 = vmatpush1.bf16.msra.mxu0 0
    %167 = vmatprep.subr.bf16.mxu0 0
    %168 = vmatpush1.bf16.msra.mxu0 0
    %169 = vmatprep.subr.bf16.mxu0 0
    %170 = vmatpush1.bf16.msra.mxu0 0
    %171 = vmatprep.subr.bf16.mxu0 0
    %172 = vmatpush1.bf16.msra.mxu0 0
    %173 = vmatprep.subr.bf16.mxu0 0
    %174 = vmatpush1.bf16.msra.mxu0 0
    %175 = vmatprep.subr.bf16.mxu0 0
    %176 = vmatpush1.bf16.msra.mxu0 0
    %177 = vmatprep.mubr.bf16.mxu0 0
    %178 = vmatmul.mubr.bf16.gmra.mrb[0].mxu0 %v143
    %v179 = vpop.f32.mrb[0].mxu0
    %v180 = vadd.f32 %v44, %v179
    %v181 = vpop.f32.mrb[0].mxu0
    %v182 = vadd.f32 %v48, %v181
    %v183 = vpop.f32.mrb[0].mxu0
    %v184 = vpop.f32.mrb[0].mxu0
    %185 = vdwg.mxu0
    %186 = vmatprep.subr.bf16.mxu0 %v112
    %187 = vmatpush1.bf16.msra.mxu0 %v111
    %188 = vmatprep.subr.bf16.mxu0 %v116
    %189 = vmatpush1.bf16.msra.mxu0 %v115
    %190 = vmatprep.subr.bf16.mxu0 %v120
    %191 = vmatpush1.bf16.msra.mxu0 %v119
    %192 = vmatprep.subr.bf16.mxu0 %v124
    %193 = vmatpush1.bf16.msra.mxu0 %v123
    %194 = vmatprep.subr.bf16.mxu0 0
    %195 = vmatpush1.bf16.msra.mxu0 0
    %196 = vmatprep.subr.bf16.mxu0 0
    %197 = vmatpush1.bf16.msra.mxu0 0
    %198 = vmatprep.subr.bf16.mxu0 0
    %199 = vmatpush1.bf16.msra.mxu0 0
    %200 = vmatprep.subr.bf16.mxu0 0
    %201 = vmatpush1.bf16.msra.mxu0 0
    %202 = vmatprep.subr.bf16.mxu0 0
    %203 = vmatpush1.bf16.msra.mxu0 0
    %204 = vmatprep.subr.bf16.mxu0 0
    %205 = vmatpush1.bf16.msra.mxu0 0
    %206 = vmatprep.subr.bf16.mxu0 0
    %207 = vmatpush1.bf16.msra.mxu0 0
    %208 = vmatprep.subr.bf16.mxu0 0
    %209 = vmatpush1.bf16.msra.mxu0 0
    %210 = vmatprep.subr.bf16.mxu0 0
    %211 = vmatpush1.bf16.msra.mxu0 0
    %212 = vmatprep.subr.bf16.mxu0 0
    %213 = vmatpush1.bf16.msra.mxu0 0
    %214 = vmatprep.subr.bf16.mxu0 0
    %215 = vmatpush1.bf16.msra.mxu0 0
    %216 = vmatprep.subr.bf16.mxu0 0
    %217 = vmatpush1.bf16.msra.mxu0 0
    %218 = vmatprep.mubr.bf16.mxu0 0
    %219 = vmatmul.mubr.bf16.gmra.mrb[0].mxu0 %v143
    %v220 = vpop.f32.mrb[0].mxu0
    %v221 = vadd.f32 %v52, %v220
    %v222 = vpop.f32.mrb[0].mxu0
    %v223 = vadd.f32 %v56, %v222
    %v224 = vpop.f32.mrb[0].mxu0
    %v225 = vpop.f32.mrb[0].mxu0
    %226 = vdwg.mxu0
    %v227 = vmax.f32 %v180, 0.0
    %v228 = vmax.f32 %v182, 0.0
    %v229 = vmax.f32 %v221, 0.0
    %v230 = vmax.f32 %v223, 0.0
    %v231 = vpack.c.bf16 %v227, %v227
    %v232 = vpack.c.bf16 %v228, %v228
    %v233 = vpack.c.bf16 %v229, %v229
    %v234 = vpack.c.bf16 %v230, %v230
    %v235 = vld [vmem:[%s3] sm:$0xf]
    %v236 = vld [vmem:[%s3 + $0x4] sm:$0xf]
    %v237 = vld [vmem:[%s3 + $0x8] sm:$0xf]
    %v238 = vld [vmem:[%s3 + $0xc] sm:$0xf]
    %v239 = vld [vmem:[%s3 + $0x10] sm:$0xf]
    %v240 = vld [vmem:[%s3 + $0x14] sm:$0xf]
    %v241 = vld [vmem:[%s3 + $0x18] sm:$0xf]
    %v242 = vld [vmem:[%s3 + $0x1c] sm:$0xf]
    %v243 = vld [vmem:[%s3 + $0x20] sm:$0xf]
    %v244 = vld [vmem:[%s3 + $0x24] sm:$0xf]
    %v245 = vld [vmem:[%s3 + $0x28] sm:$0xf]
    %v246 = vld [vmem:[%s3 + $0x2c] sm:$0xf]
    %v247 = vld [vmem:[%s3 + $0x30] sm:$0xf]
    %v248 = vld [vmem:[%s3 + $0x34] sm:$0xf]
    %v249 = vld [vmem:[%s3 + $0x38] sm:$0xf]
    %v250 = vld [vmem:[%s3 + $0x3c] sm:$0xf]
    %v251 = vld [vmem:[%s3 + $0x40] sm:$0xf]
    %v252 = vld [vmem:[%s3 + $0x44] sm:$0xf]
    %v253 = vld [vmem:[%s3 + $0x48] sm:$0xf]
    %v254 = vld [vmem:[%s3 + $0x4c] sm:$0xf]
    %v255 = vld [vmem:[%s3 + $0x50] sm:$0xf]
    %v256 = vld [vmem:[%s3 + $0x54] sm:$0xf]
    %v257 = vld [vmem:[%s3 + $0x58] sm:$0xf]
    %v258 = vld [vmem:[%s3 + $0x5c] sm:$0xf]
    %v259 = vld [vmem:[%s3 + $0x60] sm:$0xf]
    %v260 = vld [vmem:[%s3 + $0x64] sm:$0xf]
    %v261 = vld [vmem:[%s3 + $0x68] sm:$0xf]
    %v262 = vld [vmem:[%s3 + $0x6c] sm:$0xf]
    %v263 = vld [vmem:[%s3 + $0x70] sm:$0xf]
    %v264 = vld [vmem:[%s3 + $0x74] sm:$0xf]
    %v265 = vld [vmem:[%s3 + $0x78] sm:$0xf]
    %v266 = vld [vmem:[%s3 + $0x7c] sm:$0xf]
    %v267 = vld [vmem:[%s3 + $0x80] sm:$0xf]
    %v268 = vld [vmem:[%s3 + $0x84] sm:$0xf]
    %v269 = vld [vmem:[%s3 + $0x88] sm:$0xf]
    %v270 = vld [vmem:[%s3 + $0x8c] sm:$0xf]
    %v271 = vld [vmem:[%s3 + $0x90] sm:$0xf]
    %v272 = vld [vmem:[%s3 + $0x94] sm:$0xf]
    %v273 = vld [vmem:[%s3 + $0x98] sm:$0xf]
    %v274 = vld [vmem:[%s3 + $0x9c] sm:$0xf]
    %v275 = vld [vmem:[%s3 + $0xa0] sm:$0xf]
    %v276 = vld [vmem:[%s3 + $0xa4] sm:$0xf]
    %v277 = vld [vmem:[%s3 + $0xa8] sm:$0xf]
    %v278 = vld [vmem:[%s3 + $0xac] sm:$0xf]
    %v279 = vld [vmem:[%s3 + $0xb0] sm:$0xf]
    %v280 = vld [vmem:[%s3 + $0xb4] sm:$0xf]
    %v281 = vld [vmem:[%s3 + $0xb8] sm:$0xf]
    %v282 = vld [vmem:[%s3 + $0xbc] sm:$0xf]
    %v283 = vld [vmem:[%s3 + $0xc0] sm:$0xf]
    %v284 = vld [vmem:[%s3 + $0xc4] sm:$0xf]
    %v285 = vld [vmem:[%s3 + $0xc8] sm:$0xf]
    %v286 = vld [vmem:[%s3 + $0xcc] sm:$0xf]
    %v287 = vld [vmem:[%s3 + $0xd0] sm:$0xf]
    %v288 = vld [vmem:[%s3 + $0xd4] sm:$0xf]
    %v289 = vld [vmem:[%s3 + $0xd8] sm:$0xf]
    %v290 = vld [vmem:[%s3 + $0xdc] sm:$0xf]
    %v291 = vld [vmem:[%s3 + $0xe0] sm:$0xf]
    %v292 = vld [vmem:[%s3 + $0xe4] sm:$0xf]
    %v293 = vld [vmem:[%s3 + $0xe8] sm:$0xf]
    %v294 = vld [vmem:[%s3 + $0xec] sm:$0xf]
    %v295 = vld [vmem:[%s3 + $0xf0] sm:$0xf]
    %v296 = vld [vmem:[%s3 + $0xf4] sm:$0xf]
    %v297 = vld [vmem:[%s3 + $0xf8] sm:$0xf]
    %v298 = vld [vmem:[%s3 + $0xfc] sm:$0xf]
    %v299 = vld [vmem:[%s4] sm:$0x1]
    %v301 = vlaneseq
    %v302 = vshrl.u32 %v301, 7
    %v303 = vsub.s32 0, %v302
    %v304 = vrot.slane %v299, %v303
    %v370 = vunpack.c.l.b16 %v235
    %v371 = vunpack.c.l.b16 %v236
    %v372 = vunpack.c.l.b16 %v237
    %v373 = vunpack.c.l.b16 %v238
    %v374 = vunpack.c.l.b16 %v239
    %v375 = vunpack.c.l.b16 %v240
    %v376 = vunpack.c.l.b16 %v241
    %v377 = vunpack.c.l.b16 %v242
    %v378 = vunpack.c.l.b16 %v243
    %v379 = vunpack.c.l.b16 %v244
    %v380 = vunpack.c.l.b16 %v245
    %v381 = vunpack.c.l.b16 %v246
    %v382 = vunpack.c.l.b16 %v247
    %v383 = vunpack.c.l.b16 %v248
    %v384 = vunpack.c.l.b16 %v249
    %v385 = vunpack.c.l.b16 %v250
    %v386 = vunpack.c.l.b16 %v251
    %v387 = vunpack.c.l.b16 %v252
    %v388 = vunpack.c.l.b16 %v253
    %v389 = vunpack.c.l.b16 %v254
    %v390 = vunpack.c.l.b16 %v255
    %v391 = vunpack.c.l.b16 %v256
    %v392 = vunpack.c.l.b16 %v257
    %v393 = vunpack.c.l.b16 %v258
    %v394 = vunpack.c.l.b16 %v259
    %v395 = vunpack.c.l.b16 %v260
    %v396 = vunpack.c.l.b16 %v261
    %v397 = vunpack.c.l.b16 %v262
    %v398 = vunpack.c.l.b16 %v263
    %v399 = vunpack.c.l.b16 %v264
    %v400 = vunpack.c.l.b16 %v265
    %v401 = vunpack.c.l.b16 %v266
    %v402 = vunpack.c.l.b16 %v267
    %v403 = vunpack.c.l.b16 %v268
    %v404 = vunpack.c.l.b16 %v269
    %v405 = vunpack.c.l.b16 %v270
    %v406 = vunpack.c.l.b16 %v271
    %v407 = vunpack.c.l.b16 %v272
    %v408 = vunpack.c.l.b16 %v273
    %v409 = vunpack.c.l.b16 %v274
    %v410 = vunpack.c.l.b16 %v275
    %v411 = vunpack.c.l.b16 %v276
    %v412 = vunpack.c.l.b16 %v277
    %v413 = vunpack.c.l.b16 %v278
    %v414 = vunpack.c.l.b16 %v279
    %v415 = vunpack.c.l.b16 %v280
    %v416 = vunpack.c.l.b16 %v281
    %v417 = vunpack.c.l.b16 %v282
    %v418 = vunpack.c.l.b16 %v283
    %v419 = vunpack.c.l.b16 %v284
    %v420 = vunpack.c.l.b16 %v285
    %v421 = vunpack.c.l.b16 %v286
    %v422 = vunpack.c.l.b16 %v287
    %v423 = vunpack.c.l.b16 %v288
    %v424 = vunpack.c.l.b16 %v289
    %v425 = vunpack.c.l.b16 %v290
    %v426 = vunpack.c.l.b16 %v291
    %v427 = vunpack.c.l.b16 %v292
    %v428 = vunpack.c.l.b16 %v293
    %v429 = vunpack.c.l.b16 %v294
    %v430 = vunpack.c.l.b16 %v295
    %v431 = vunpack.c.l.b16 %v296
    %v432 = vunpack.c.l.b16 %v297
    %v433 = vunpack.c.l.b16 %v298
    %v434 = vpack.c.b16 %v371, %v370
    %v435 = vpack.c.b16 %v373, %v372
    %v436 = vpack.c.b16 %v375, %v374
    %v437 = vpack.c.b16 %v377, %v376
    %v438 = vpack.c.b16 %v379, %v378
    %v439 = vpack.c.b16 %v381, %v380
    %v440 = vpack.c.b16 %v383, %v382
    %v441 = vpack.c.b16 %v385, %v384
    %v442 = vpack.c.b16 %v387, %v386
    %v443 = vpack.c.b16 %v389, %v388
    %v444 = vpack.c.b16 %v391, %v390
    %v445 = vpack.c.b16 %v393, %v392
    %v446 = vpack.c.b16 %v395, %v394
    %v447 = vpack.c.b16 %v397, %v396
    %v448 = vpack.c.b16 %v399, %v398
    %v449 = vpack.c.b16 %v401, %v400
    %v450 = vpack.c.b16 %v403, %v402
    %v451 = vpack.c.b16 %v405, %v404
    %v452 = vpack.c.b16 %v407, %v406
    %v453 = vpack.c.b16 %v409, %v408
    %v454 = vpack.c.b16 %v411, %v410
    %v455 = vpack.c.b16 %v413, %v412
    %v456 = vpack.c.b16 %v415, %v414
    %v457 = vpack.c.b16 %v417, %v416
    %v458 = vpack.c.b16 %v419, %v418
    %v459 = vpack.c.b16 %v421, %v420
    %v460 = vpack.c.b16 %v423, %v422
    %v461 = vpack.c.b16 %v425, %v424
    %v462 = vpack.c.b16 %v427, %v426
    %v463 = vpack.c.b16 %v429, %v428
    %v464 = vpack.c.b16 %v431, %v430
    %v465 = vpack.c.b16 %v433, %v432
    %498 = vmatprep.subr.bf16.mxu0 0
    %499 = vmatpush1.bf16.msra.mxu0 %v434
    %500 = vmatprep.subr.bf16.mxu0 0
    %501 = vmatpush1.bf16.msra.mxu0 %v435
    %502 = vmatprep.subr.bf16.mxu0 0
    %503 = vmatpush1.bf16.msra.mxu0 %v436
    %504 = vmatprep.subr.bf16.mxu0 0
    %505 = vmatpush1.bf16.msra.mxu0 %v437
    %506 = vmatprep.subr.bf16.mxu0 0
    %507 = vmatpush1.bf16.msra.mxu0 %v438
    %508 = vmatprep.subr.bf16.mxu0 0
    %509 = vmatpush1.bf16.msra.mxu0 %v439
    %510 = vmatprep.subr.bf16.mxu0 0
    %511 = vmatpush1.bf16.msra.mxu0 %v440
    %512 = vmatprep.subr.bf16.mxu0 0
    %513 = vmatpush1.bf16.msra.mxu0 %v441
    %514 = vmatprep.subr.bf16.mxu0 0
    %515 = vmatpush1.bf16.msra.mxu0 %v442
    %516 = vmatprep.subr.bf16.mxu0 0
    %517 = vmatpush1.bf16.msra.mxu0 %v443
    %518 = vmatprep.subr.bf16.mxu0 0
    %519 = vmatpush1.bf16.msra.mxu0 %v444
    %520 = vmatprep.subr.bf16.mxu0 0
    %521 = vmatpush1.bf16.msra.mxu0 %v445
    %522 = vmatprep.subr.bf16.mxu0 0
    %523 = vmatpush1.bf16.msra.mxu0 %v446
    %524 = vmatprep.subr.bf16.mxu0 0
    %525 = vmatpush1.bf16.msra.mxu0 %v447
    %526 = vmatprep.subr.bf16.mxu0 0
    %527 = vmatpush1.bf16.msra.mxu0 %v448
    %528 = vmatprep.subr.bf16.mxu0 0
    %529 = vmatpush1.bf16.msra.mxu0 %v449
    %530 = vmatprep.mubr.bf16.mxu0 %v232
    %531 = vmatmul.mubr.bf16.gmra.mrb[0].mxu0 %v231
    %v532 = vpop.f32.mrb[0].mxu0
    %v533 = vadd.f32 %v304, %v532
    %v534 = vpop.f32.mrb[0].mxu0
    %v535 = vpop.f32.mrb[0].mxu0
    %v536 = vpop.f32.mrb[0].mxu0
    %537 = vdwg.mxu0
    %538 = vmatprep.subr.bf16.mxu0 0
    %539 = vmatpush1.bf16.msra.mxu0 %v450
    %540 = vmatprep.subr.bf16.mxu0 0
    %541 = vmatpush1.bf16.msra.mxu0 %v451
    %542 = vmatprep.subr.bf16.mxu0 0
    %543 = vmatpush1.bf16.msra.mxu0 %v452
    %544 = vmatprep.subr.bf16.mxu0 0
    %545 = vmatpush1.bf16.msra.mxu0 %v453
    %546 = vmatprep.subr.bf16.mxu0 0
    %547 = vmatpush1.bf16.msra.mxu0 %v454
    %548 = vmatprep.subr.bf16.mxu0 0
    %549 = vmatpush1.bf16.msra.mxu0 %v455
    %550 = vmatprep.subr.bf16.mxu0 0
    %551 = vmatpush1.bf16.msra.mxu0 %v456
    %552 = vmatprep.subr.bf16.mxu0 0
    %553 = vmatpush1.bf16.msra.mxu0 %v457
    %554 = vmatprep.subr.bf16.mxu0 0
    %555 = vmatpush1.bf16.msra.mxu0 %v458
    %556 = vmatprep.subr.bf16.mxu0 0
    %557 = vmatpush1.bf16.msra.mxu0 %v459
    %558 = vmatprep.subr.bf16.mxu0 0
    %559 = vmatpush1.bf16.msra.mxu0 %v460
    %560 = vmatprep.subr.bf16.mxu0 0
    %561 = vmatpush1.bf16.msra.mxu0 %v461
    %562 = vmatprep.subr.bf16.mxu0 0
    %563 = vmatpush1.bf16.msra.mxu0 %v462
    %564 = vmatprep.subr.bf16.mxu0 0
    %565 = vmatpush1.bf16.msra.mxu0 %v463
    %566 = vmatprep.subr.bf16.mxu0 0
    %567 = vmatpush1.bf16.msra.mxu0 %v464
    %568 = vmatprep.subr.bf16.mxu0 0
    %569 = vmatpush1.bf16.msra.mxu0 %v465
    %570 = vmatprep.mubr.bf16.mxu0 %v234
    %571 = vmatmul.mubr.bf16.gmra.mrb[0].mxu0 %v233
    %v572 = vpop.f32.mrb[0].mxu0
    %v573 = vadd.f32 %v533, %v572
    %v574 = vpop.f32.mrb[0].mxu0
    %v575 = vpop.f32.mrb[0].mxu0
    %v576 = vpop.f32.mrb[0].mxu0
    %577 = vdwg.mxu0
    %578 = vst [vmem:[#allocation2] sm:$0x3] %v573
    // Predicated region
    $region22: #{nature_cnn_forward.7} parent=1 // pred_check
      _
    $region23: #{nature_cnn_forward.7} parent=1 // pred_check_branch
      %580 = sbr.rel (0) target = $region25
    $region24: #{nature_cnn_forward.7} parent=1 // pred_region
      %s582 = ssub.s32 32, 32
      %583 = vsyncadd [#allocation3], %s582
      %s585 = sshll.u32 [#allocation2], 4
      %s586 = int_to_ptr.vmem [resolvable:$true] %s585
      %588 = dma.vmem_to_hbm [thread:$0]  %s586, 32, %s5, [#allocation3]
    $region25: #{nature_cnn_forward.7} parent=1 // pred_fallthru
      _
    // Predicated region
    $region26: #{nature_cnn_forward.7} parent=1 // pred_check
      _
    $region27: #{nature_cnn_forward.7} parent=1 // pred_check_branch
      %590 = sbr.rel (0) target = $region29
    $region28: #{nature_cnn_forward.7} parent=1 // pred_region
      %591 = dma.done [#allocation3], 32
    $region29: #{nature_cnn_forward.7} parent=1 // pred_fallthru
      _
    %592 = vsyncpa [#allocation3], 1

</llo_original>
